<compile_context>
chip_gen: v6e
topology: v6e:2x2x1
jax: 0.10.0
libtpu: 0.0.40
codegen_flags: <defaults>
</compile_context>

<pallas_src>
import jax
import jax.numpy as jnp
from jax import lax
from jax.experimental import pallas as pl
from jax.experimental.pallas import tpu as pltpu

VOCAB = 5000
EMB = 64
HID = 128
NCLS = 10
NPAD = 128      # lane-padded classifier width (sliced back to NCLS in the wrapper)
SUBLANE = 8     # batch padded to a multiple of 8 sublanes


def textrnn_kernel(emb_ref, wihf_ref, wihr_ref, bihf_ref, bihr_ref,
                   whhf_ref, whhr_ref, wfc_ref, bfc_ref,
                   out_ref, xpf_scr, xpr_scr):
    """Whole forward (minus embedding gather) in one kernel.

    emb_ref  : (T*B, EMB)   bf16  time-major embedded tokens, flattened in wrapper
    wihf/r   : (EMB, 4H)    bf16  per-direction W_ih^T, gate order i,f,g,o
    bihf/r   : (1, 4H)      f32   folded b_ih + b_hh per direction
    whhf/r   : (H, 4H)      bf16  per-direction W_hh^T (dense, no block-diag zeros)
    wfc_ref  : (2H, NPAD)   bf16  Linear(256,10) weight, lane-padded
    bfc_ref  : (1, NPAD)    f32   bias, padded columns = -1e30 (masked in softmax)
    out_ref  : (B, NPAD)    f32   softmax probabilities (padded)
    xpf_scr / xpr_scr : (T,B,4H) f32  per-timestep input projections (VMEM scratch)
    """
    T, B, G = xpf_scr.shape
    H = G // 4

    def sig(x):
        # sigmoid(x) == 0.5*tanh(0.5*x) + 0.5  -> single EUP push per gate
        return 0.5 * jnp.tanh(0.5 * x) + 0.5

    # ---- all-timestep input projections: one dense MXU matmul per direction,
    #      written straight into scratch (no (T*B,8H) temporary) ----
    x2 = emb_ref[...]                                                     # (T*B, EMB) bf16
    xpf_scr[...] = (jnp.dot(x2, wihf_ref[...], preferred_element_type=jnp.float32)
                    + bihf_ref[...]).reshape(T, B, G)
    xpr_scr[...] = (jnp.dot(x2, wihr_ref[...], preferred_element_type=jnp.float32)
                    + bihr_ref[...]).reshape(T, B, G)

    def cell(g, c):
        i = sig(g[:, 0 * H:1 * H])
        f = sig(g[:, 1 * H:2 * H])
        gg = jnp.tanh(g[:, 2 * H:3 * H])
        o = sig(g[:, 3 * H:4 * H])
        c_new = f * c + i * gg
        return o * jnp.tanh(c_new), c_new

    # ---- recurrence: two dense per-direction matmuls per step ----
    def step(t, carry):
        h_f, c_f, h_r, c_r = carry                                        # each (B,H) f32
        rec_f = jnp.dot(h_f.astype(jnp.bfloat16), whhf_ref[...],
                        preferred_element_type=jnp.float32)               # (B, 4H)
        rec_r = jnp.dot(h_r.astype(jnp.bfloat16), whhr_ref[...],
                        preferred_element_type=jnp.float32)               # (B, 4H)
        g_f = xpf_scr[t] + rec_f
        g_r = xpr_scr[T - 1 - t] + rec_r                                  # reverse dir walks time backwards
        h_f, c_f = cell(g_f, c_f)
        h_r, c_r = cell(g_r, c_r)
        return h_f, c_f, h_r, c_r

    zeros_h = jnp.zeros((B, H), jnp.float32)
    h_f, _, h_r, _ = lax.fori_loop(0, T, step,
                                   (zeros_h, zeros_h, zeros_h, zeros_h),
                                   unroll=True)

    # TODO(synk): F.dropout(h_n, 0.8) in the reference defaults to training=True
    # (stochastic mask + 5x scale); not deterministically reproducible -> identity.

    # ---- classifier: lane-dense Linear + softmax (bf16 operands, f32 accum/softmax) ----
    h_cat = jnp.concatenate([h_f, h_r], axis=1)                           # (B, 2H)
    logits = jnp.dot(h_cat.astype(jnp.bfloat16), wfc_ref[...],
                     preferred_element_type=jnp.float32) + bfc_ref[...]
    out_ref[...] = jax.nn.softmax(logits, axis=-1)    # nn.Softmax() -> dim=1 for 2-D input


def init_params(key):
    ks = jax.random.split(key, 11)
    klstm = 1.0 / jnp.sqrt(jnp.float32(HID))

    def uni(kk, shape, bound):
        return jax.random.uniform(kk, shape, jnp.float32, -bound, bound)

    emb_table = jax.random.normal(ks[0], (VOCAB, EMB), jnp.float32)          # nn.Embedding N(0,1)
    # LSTM params stored transposed vs. PyTorch: W^T, gate column order [i, f, g, o].
    wih_f = uni(ks[1], (EMB, 4 * HID), klstm)
    whh_f = uni(ks[2], (HID, 4 * HID), klstm)
    b_f = uni(ks[3], (1, 4 * HID), klstm) + uni(ks[4], (1, 4 * HID), klstm)  # b_ih + b_hh folded
    wih_r = uni(ks[5], (EMB, 4 * HID), klstm)
    whh_r = uni(ks[6], (HID, 4 * HID), klstm)
    b_r = uni(ks[7], (1, 4 * HID), klstm) + uni(ks[8], (1, 4 * HID), klstm)
    kfc = 1.0 / jnp.sqrt(jnp.float32(2 * HID))
    wfc = uni(ks[9], (2 * HID, NCLS), kfc)                                   # Linear(256,10)^T
    bfc = uni(ks[10], (1, NCLS), kfc)
    return dict(emb_table=emb_table,
                wih_f=wih_f, whh_f=whh_f, b_f=b_f,
                wih_r=wih_r, whh_r=whh_r, b_r=b_r,
                wfc=wfc, bfc=bfc)


def _prep_weights(params):
    """Per-direction dense weights (no block-diag zeros); bf16 for all MXU operands."""
    wfc = jnp.zeros((2 * HID, NPAD), jnp.float32).at[:, :NCLS].set(params["wfc"])
    bfc = jnp.full((1, NPAD), -1e30, jnp.float32).at[:, :NCLS].set(params["bfc"])
    return (params["wih_f"].astype(jnp.bfloat16),
            params["wih_r"].astype(jnp.bfloat16),
            params["b_f"], params["b_r"],
            params["whh_f"].astype(jnp.bfloat16),
            params["whh_r"].astype(jnp.bfloat16),
            wfc.astype(jnp.bfloat16), bfc)


@jax.jit
def textrnn_forward(token_ids, params):
    B, T = token_ids.shape
    B_pad = ((B + SUBLANE - 1) // SUBLANE) * SUBLANE
    wihf, wihr, bihf, bihr, whhf, whhr, wfc, bfc = _prep_weights(params)

    # Glue in plain JAX: embedding gather + permute(1,0,2) + batch pad + flatten + bf16 cast.
    emb = jnp.take(params["emb_table"], token_ids, axis=0)        # (B, T, EMB)
    emb = jnp.transpose(emb, (1, 0, 2))                           # (T, B, EMB) time-major
    emb = jnp.pad(emb, ((0, 0), (0, B_pad - B), (0, 0)))          # pad batch to 8 sublanes
    emb = emb.reshape(T * B_pad, EMB).astype(jnp.bfloat16)        # layout plumbing outside kernel

    # Advisory cost so XLA overlaps the pallas_call with the surrounding glue ops.
    flops = (2 * (T * B_pad * EMB * 4 * HID) * 2            # input projections
             + T * 2 * (B_pad * HID * 4 * HID) * 2          # recurrence
             + B_pad * 2 * HID * NPAD * 2)                  # classifier
    transcendentals = T * 2 * B_pad * HID * 5 + B_pad * NPAD
    bytes_accessed = (emb.size * 2
                      + 2 * EMB * 4 * HID * 2 + 2 * 4 * HID * 4
                      + 2 * HID * 4 * HID * 2
                      + 2 * HID * NPAD * 2 + NPAD * 4
                      + B_pad * NPAD * 4)
    cost = pl.CostEstimate(flops=flops, transcendentals=transcendentals,
                           bytes_accessed=bytes_accessed)

    vspec = pl.BlockSpec(memory_space=pltpu.MemorySpace.VMEM)
    out = pl.pallas_call(
        textrnn_kernel,
        out_shape=jax.ShapeDtypeStruct((B_pad, NPAD), jnp.float32),
        in_specs=[vspec] * 9,
        out_specs=vspec,
        scratch_shapes=[pltpu.VMEM((T, B_pad, 4 * HID), jnp.float32),
                        pltpu.VMEM((T, B_pad, 4 * HID), jnp.float32)],
        cost_estimate=cost,
    )(emb, wihf, wihr, bihf, bihr, whhf, whhr, wfc, bfc)
    return out[:B, :NCLS]


def textrnn_reference(token_ids, params):
    """Pure-JAX f32 reference matching the PyTorch module (dropout as identity)."""
    emb = jnp.take(params["emb_table"], token_ids, axis=0)
    emb = jnp.transpose(emb, (1, 0, 2))                           # (T, B, EMB)
    _, B, _ = emb.shape
    H = HID

    def run(wih, whh, b, reverse):
        xp = jnp.einsum("tbe,eg->tbg", emb, wih) + b

        def cell(carry, xp_t):
            h, c = carry
            g = xp_t + h @ whh
            i = jax.nn.sigmoid(g[:, :H])
            f = jax.nn.sigmoid(g[:, H:2 * H])
            gg = jnp.tanh(g[:, 2 * H:3 * H])
            o = jax.nn.sigmoid(g[:, 3 * H:])
            c = f * c + i * gg
            h = o * jnp.tanh(c)
            return (h, c), None

        xs = xp[::-1] if reverse else xp
        (h, _), _ = lax.scan(cell, (jnp.zeros((B, H)), jnp.zeros((B, H))), xs)
        return h

    h_f = run(params["wih_f"], params["whh_f"], params["b_f"], False)
    h_r = run(params["wih_r"], params["whh_r"], params["b_r"], True)
    feat = jnp.concatenate([h_f, h_r], axis=1)
    logits = feat @ params["wfc"] + params["bfc"]
    return jax.nn.softmax(logits, axis=-1)


if __name__ == "__main__":
    key = jax.random.PRNGKey(0)
    pkey, xkey = jax.random.split(key)
    params = init_params(pkey)

    B, T = 2, 8
    token_ids = jax.random.randint(xkey, (B, T), 0, VOCAB, dtype=jnp.int32)

    out = textrnn_forward(token_ids, params)
    out = jax.block_until_ready(out)

    assert out.shape == (B, NCLS)
    assert bool(jnp.all(jnp.isfinite(out)))
    # softmax rows sum to 1
    assert bool(jnp.allclose(jnp.sum(out, axis=-1), 1.0, atol=1e-5))
    # matches the pure-JAX f32 reference (bf16 MXU operands -> loose tolerance)
    ref = textrnn_reference(token_ids, params)
    assert bool(jnp.allclose(out, ref, atol=2e-2))
    print("KERNEL_OK")
</pallas_src>

<mosaic_0001>
module attributes {stable_mosaic.version = 11 : i64} {
  func.func @textrnn_kernel(%arg0: memref<64x64xbf16, #tpu.memory_space<vmem>>, %arg1: memref<64x512xbf16, #tpu.memory_space<vmem>>, %arg2: memref<64x512xbf16, #tpu.memory_space<vmem>>, %arg3: memref<1x512xf32, #tpu.memory_space<vmem>>, %arg4: memref<1x512xf32, #tpu.memory_space<vmem>>, %arg5: memref<128x512xbf16, #tpu.memory_space<vmem>>, %arg6: memref<128x512xbf16, #tpu.memory_space<vmem>>, %arg7: memref<256x128xbf16, #tpu.memory_space<vmem>>, %arg8: memref<1x128xf32, #tpu.memory_space<vmem>>, %arg9: memref<8x128xf32, #tpu.memory_space<vmem>>, %arg10: memref<8x8x512xf32, #tpu.memory_space<vmem>>, %arg11: memref<8x8x512xf32, #tpu.memory_space<vmem>>) attributes {dimension_semantics = [], scalar_prefetch = 0 : i64, scratch_operands = 2 : i64, tpu.core_type = #tpu.core_type<tc>} {
    %c0 = arith.constant 0 : index
    %c0_0 = arith.constant 0 : index
    %0 = vector.load %arg0[%c0, %c0_0] : memref<64x64xbf16, #tpu.memory_space<vmem>>, vector<64x64xbf16>
    %c0_1 = arith.constant 0 : index
    %c0_2 = arith.constant 0 : index
    %1 = vector.load %arg1[%c0_1, %c0_2] : memref<64x512xbf16, #tpu.memory_space<vmem>>, vector<64x512xbf16>
    %cst = arith.constant dense<0.000000e+00> : vector<64x512xf32>
    %2 = tpu.matmul %0, %1, %cst {dimension_numbers = #tpu.dot_dimension_numbers<[1], [0], [0], [1], [0, 0, 1, 1], [], []>} : vector<64x64xbf16>, vector<64x512xbf16>, vector<64x512xf32> -> vector<64x512xf32>
    %c0_3 = arith.constant 0 : index
    %c0_4 = arith.constant 0 : index
    %3 = vector.load %arg3[%c0_3, %c0_4] : memref<1x512xf32, #tpu.memory_space<vmem>>, vector<1x512xf32>
    %4 = vector.broadcast %3 : vector<1x512xf32> to vector<64x512xf32>
    %5 = arith.addf %2, %4 : vector<64x512xf32>
    %6 = vector.shape_cast %5 : vector<64x512xf32> to vector<8x8x512xf32>
    %c0_5 = arith.constant 0 : index
    %c0_6 = arith.constant 0 : index
    %c0_7 = arith.constant 0 : index
    %7 = vector.load %arg10[%c0_5, %c0_6, %c0_7] : memref<8x8x512xf32, #tpu.memory_space<vmem>>, vector<8x8x512xf32>
    tpu.vector_store %arg10[%c0_5, %c0_6, %c0_7], %6 {strides = array<i32>} : memref<8x8x512xf32, #tpu.memory_space<vmem>>, vector<8x8x512xf32>,
    %c0_8 = arith.constant 0 : index
    %c0_9 = arith.constant 0 : index
    %8 = vector.load %arg2[%c0_8, %c0_9] : memref<64x512xbf16, #tpu.memory_space<vmem>>, vector<64x512xbf16>
    %cst_10 = arith.constant dense<0.000000e+00> : vector<64x512xf32>
    %9 = tpu.matmul %0, %8, %cst_10 {dimension_numbers = #tpu.dot_dimension_numbers<[1], [0], [0], [1], [0, 0, 1, 1], [], []>} : vector<64x64xbf16>, vector<64x512xbf16>, vector<64x512xf32> -> vector<64x512xf32>
    %c0_11 = arith.constant 0 : index
    %c0_12 = arith.constant 0 : index
    %10 = vector.load %arg4[%c0_11, %c0_12] : memref<1x512xf32, #tpu.memory_space<vmem>>, vector<1x512xf32>
    %11 = vector.broadcast %10 : vector<1x512xf32> to vector<64x512xf32>
    %12 = arith.addf %9, %11 : vector<64x512xf32>
    %13 = vector.shape_cast %12 : vector<64x512xf32> to vector<8x8x512xf32>
    %c0_13 = arith.constant 0 : index
    %c0_14 = arith.constant 0 : index
    %c0_15 = arith.constant 0 : index
    %14 = vector.load %arg11[%c0_13, %c0_14, %c0_15] : memref<8x8x512xf32, #tpu.memory_space<vmem>>, vector<8x8x512xf32>
    tpu.vector_store %arg11[%c0_13, %c0_14, %c0_15], %13 {strides = array<i32>} : memref<8x8x512xf32, #tpu.memory_space<vmem>>, vector<8x8x512xf32>,
    %cst_16 = arith.constant 0.000000e+00 : f32
    %15 = vector.broadcast %cst_16 : f32 to vector<8x128xf32>
    %c0_i32 = arith.constant 0 : i32
    %16 = arith.truncf %15 : vector<8x128xf32> to vector<8x128xbf16>
    %c0_17 = arith.constant 0 : index
    %c0_18 = arith.constant 0 : index
    %17 = vector.load %arg5[%c0_17, %c0_18] : memref<128x512xbf16, #tpu.memory_space<vmem>>, vector<128x512xbf16>
    %cst_19 = arith.constant dense<0.000000e+00> : vector<8x512xf32>
    %18 = tpu.matmul %16, %17, %cst_19 {dimension_numbers = #tpu.dot_dimension_numbers<[1], [0], [0], [1], [0, 0, 1, 1], [], []>} : vector<8x128xbf16>, vector<128x512xbf16>, vector<8x512xf32> -> vector<8x512xf32>
    %19 = arith.truncf %15 : vector<8x128xf32> to vector<8x128xbf16>
    %c0_20 = arith.constant 0 : index
    %c0_21 = arith.constant 0 : index
    %20 = vector.load %arg6[%c0_20, %c0_21] : memref<128x512xbf16, #tpu.memory_space<vmem>>, vector<128x512xbf16>
    %cst_22 = arith.constant dense<0.000000e+00> : vector<8x512xf32>
    %21 = tpu.matmul %19, %20, %cst_22 {dimension_numbers = #tpu.dot_dimension_numbers<[1], [0], [0], [1], [0, 0, 1, 1], [], []>} : vector<8x128xbf16>, vector<128x512xbf16>, vector<8x512xf32> -> vector<8x512xf32>
    %22 = arith.index_cast %c0_i32 : i32 to index
    %c0_23 = arith.constant 0 : index
    %c0_24 = arith.constant 0 : index
    %23 = vector.load %arg10[%22, %c0_23, %c0_24] : memref<8x8x512xf32, #tpu.memory_space<vmem>>, vector<1x8x512xf32>
    %24 = vector.shape_cast %23 : vector<1x8x512xf32> to vector<8x512xf32>
    %25 = arith.addf %24, %18 : vector<8x512xf32>
    %c7_i32 = arith.constant 7 : i32
    %26 = arith.subi %c7_i32, %c0_i32 : i32
    %27 = arith.index_cast %26 : i32 to index
    %c0_25 = arith.constant 0 : index
    %c0_26 = arith.constant 0 : index
    %28 = vector.load %arg11[%27, %c0_25, %c0_26] : memref<8x8x512xf32, #tpu.memory_space<vmem>>, vector<1x8x512xf32>
    %29 = vector.shape_cast %28 : vector<1x8x512xf32> to vector<8x512xf32>
    %30 = arith.addf %29, %21 : vector<8x512xf32>
    %31 = vector.extract_strided_slice %25 {offsets = [0, 0], sizes = [8, 128], strides = [1, 1]} : vector<8x512xf32> to vector<8x128xf32>
    %cst_27 = arith.constant 5.000000e-01 : f32
    %32 = vector.broadcast %cst_27 : f32 to vector<8x128xf32>
    %33 = arith.mulf %32, %31 : vector<8x128xf32>
    %34 = math.tanh %33 : vector<8x128xf32>
    %cst_28 = arith.constant 5.000000e-01 : f32
    %35 = vector.broadcast %cst_28 : f32 to vector<8x128xf32>
    %36 = arith.mulf %35, %34 : vector<8x128xf32>
    %cst_29 = arith.constant 5.000000e-01 : f32
    %37 = vector.broadcast %cst_29 : f32 to vector<8x128xf32>
    %38 = arith.addf %36, %37 : vector<8x128xf32>
    %39 = vector.extract_strided_slice %25 {offsets = [0, 128], sizes = [8, 128], strides = [1, 1]} : vector<8x512xf32> to vector<8x128xf32>
    %cst_30 = arith.constant 5.000000e-01 : f32
    %40 = vector.broadcast %cst_30 : f32 to vector<8x128xf32>
    %41 = arith.mulf %40, %39 : vector<8x128xf32>
    %42 = math.tanh %41 : vector<8x128xf32>
    %cst_31 = arith.constant 5.000000e-01 : f32
    %43 = vector.broadcast %cst_31 : f32 to vector<8x128xf32>
    %44 = arith.mulf %43, %42 : vector<8x128xf32>
    %cst_32 = arith.constant 5.000000e-01 : f32
    %45 = vector.broadcast %cst_32 : f32 to vector<8x128xf32>
    %46 = arith.addf %44, %45 : vector<8x128xf32>
    %47 = vector.extract_strided_slice %25 {offsets = [0, 256], sizes = [8, 128], strides = [1, 1]} : vector<8x512xf32> to vector<8x128xf32>
    %48 = math.tanh %47 : vector<8x128xf32>
    %49 = vector.extract_strided_slice %25 {offsets = [0, 384], sizes = [8, 128], strides = [1, 1]} : vector<8x512xf32> to vector<8x128xf32>
    %cst_33 = arith.constant 5.000000e-01 : f32
    %50 = vector.broadcast %cst_33 : f32 to vector<8x128xf32>
    %51 = arith.mulf %50, %49 : vector<8x128xf32>
    %52 = math.tanh %51 : vector<8x128xf32>
    %cst_34 = arith.constant 5.000000e-01 : f32
    %53 = vector.broadcast %cst_34 : f32 to vector<8x128xf32>
    %54 = arith.mulf %53, %52 : vector<8x128xf32>
    %cst_35 = arith.constant 5.000000e-01 : f32
    %55 = vector.broadcast %cst_35 : f32 to vector<8x128xf32>
    %56 = arith.addf %54, %55 : vector<8x128xf32>
    %57 = arith.mulf %46, %15 : vector<8x128xf32>
    %58 = arith.mulf %38, %48 : vector<8x128xf32>
    %59 = arith.addf %57, %58 : vector<8x128xf32>
    %60 = math.tanh %59 : vector<8x128xf32>
    %61 = arith.mulf %56, %60 : vector<8x128xf32>
    %62 = vector.extract_strided_slice %30 {offsets = [0, 0], sizes = [8, 128], strides = [1, 1]} : vector<8x512xf32> to vector<8x128xf32>
    %cst_36 = arith.constant 5.000000e-01 : f32
    %63 = vector.broadcast %cst_36 : f32 to vector<8x128xf32>
    %64 = arith.mulf %63, %62 : vector<8x128xf32>
    %65 = math.tanh %64 : vector<8x128xf32>
    %cst_37 = arith.constant 5.000000e-01 : f32
    %66 = vector.broadcast %cst_37 : f32 to vector<8x128xf32>
    %67 = arith.mulf %66, %65 : vector<8x128xf32>
    %cst_38 = arith.constant 5.000000e-01 : f32
    %68 = vector.broadcast %cst_38 : f32 to vector<8x128xf32>
    %69 = arith.addf %67, %68 : vector<8x128xf32>
    %70 = vector.extract_strided_slice %30 {offsets = [0, 128], sizes = [8, 128], strides = [1, 1]} : vector<8x512xf32> to vector<8x128xf32>
    %cst_39 = arith.constant 5.000000e-01 : f32
    %71 = vector.broadcast %cst_39 : f32 to vector<8x128xf32>
    %72 = arith.mulf %71, %70 : vector<8x128xf32>
    %73 = math.tanh %72 : vector<8x128xf32>
    %cst_40 = arith.constant 5.000000e-01 : f32
    %74 = vector.broadcast %cst_40 : f32 to vector<8x128xf32>
    %75 = arith.mulf %74, %73 : vector<8x128xf32>
    %cst_41 = arith.constant 5.000000e-01 : f32
    %76 = vector.broadcast %cst_41 : f32 to vector<8x128xf32>
    %77 = arith.addf %75, %76 : vector<8x128xf32>
    %78 = vector.extract_strided_slice %30 {offsets = [0, 256], sizes = [8, 128], strides = [1, 1]} : vector<8x512xf32> to vector<8x128xf32>
    %79 = math.tanh %78 : vector<8x128xf32>
    %80 = vector.extract_strided_slice %30 {offsets = [0, 384], sizes = [8, 128], strides = [1, 1]} : vector<8x512xf32> to vector<8x128xf32>
    %cst_42 = arith.constant 5.000000e-01 : f32
    %81 = vector.broadcast %cst_42 : f32 to vector<8x128xf32>
    %82 = arith.mulf %81, %80 : vector<8x128xf32>
    %83 = math.tanh %82 : vector<8x128xf32>
    %cst_43 = arith.constant 5.000000e-01 : f32
    %84 = vector.broadcast %cst_43 : f32 to vector<8x128xf32>
    %85 = arith.mulf %84, %83 : vector<8x128xf32>
    %cst_44 = arith.constant 5.000000e-01 : f32
    %86 = vector.broadcast %cst_44 : f32 to vector<8x128xf32>
    %87 = arith.addf %85, %86 : vector<8x128xf32>
    %88 = arith.mulf %77, %15 : vector<8x128xf32>
    %89 = arith.mulf %69, %79 : vector<8x128xf32>
    %90 = arith.addf %88, %89 : vector<8x128xf32>
    %91 = math.tanh %90 : vector<8x128xf32>
    %92 = arith.mulf %87, %91 : vector<8x128xf32>
    %c1_i32 = arith.constant 1 : i32
    %93 = arith.truncf %61 : vector<8x128xf32> to vector<8x128xbf16>
    %c0_45 = arith.constant 0 : index
    %c0_46 = arith.constant 0 : index
    %94 = vector.load %arg5[%c0_45, %c0_46] : memref<128x512xbf16, #tpu.memory_space<vmem>>, vector<128x512xbf16>
    %cst_47 = arith.constant dense<0.000000e+00> : vector<8x512xf32>
    %95 = tpu.matmul %93, %94, %cst_47 {dimension_numbers = #tpu.dot_dimension_numbers<[1], [0], [0], [1], [0, 0, 1, 1], [], []>} : vector<8x128xbf16>, vector<128x512xbf16>, vector<8x512xf32> -> vector<8x512xf32>
    %96 = arith.truncf %92 : vector<8x128xf32> to vector<8x128xbf16>
    %c0_48 = arith.constant 0 : index
    %c0_49 = arith.constant 0 : index
    %97 = vector.load %arg6[%c0_48, %c0_49] : memref<128x512xbf16, #tpu.memory_space<vmem>>, vector<128x512xbf16>
    %cst_50 = arith.constant dense<0.000000e+00> : vector<8x512xf32>
    %98 = tpu.matmul %96, %97, %cst_50 {dimension_numbers = #tpu.dot_dimension_numbers<[1], [0], [0], [1], [0, 0, 1, 1], [], []>} : vector<8x128xbf16>, vector<128x512xbf16>, vector<8x512xf32> -> vector<8x512xf32>
    %99 = arith.index_cast %c1_i32 : i32 to index
    %c0_51 = arith.constant 0 : index
    %c0_52 = arith.constant 0 : index
    %100 = vector.load %arg10[%99, %c0_51, %c0_52] : memref<8x8x512xf32, #tpu.memory_space<vmem>>, vector<1x8x512xf32>
    %101 = vector.shape_cast %100 : vector<1x8x512xf32> to vector<8x512xf32>
    %102 = arith.addf %101, %95 : vector<8x512xf32>
    %c7_i32_53 = arith.constant 7 : i32
    %103 = arith.subi %c7_i32_53, %c1_i32 : i32
    %104 = arith.index_cast %103 : i32 to index
    %c0_54 = arith.constant 0 : index
    %c0_55 = arith.constant 0 : index
    %105 = vector.load %arg11[%104, %c0_54, %c0_55] : memref<8x8x512xf32, #tpu.memory_space<vmem>>, vector<1x8x512xf32>
    %106 = vector.shape_cast %105 : vector<1x8x512xf32> to vector<8x512xf32>
    %107 = arith.addf %106, %98 : vector<8x512xf32>
    %108 = vector.extract_strided_slice %102 {offsets = [0, 0], sizes = [8, 128], strides = [1, 1]} : vector<8x512xf32> to vector<8x128xf32>
    %cst_56 = arith.constant 5.000000e-01 : f32
    %109 = vector.broadcast %cst_56 : f32 to vector<8x128xf32>
    %110 = arith.mulf %109, %108 : vector<8x128xf32>
    %111 = math.tanh %110 : vector<8x128xf32>
    %cst_57 = arith.constant 5.000000e-01 : f32
    %112 = vector.broadcast %cst_57 : f32 to vector<8x128xf32>
    %113 = arith.mulf %112, %111 : vector<8x128xf32>
    %cst_58 = arith.constant 5.000000e-01 : f32
    %114 = vector.broadcast %cst_58 : f32 to vector<8x128xf32>
    %115 = arith.addf %113, %114 : vector<8x128xf32>
    %116 = vector.extract_strided_slice %102 {offsets = [0, 128], sizes = [8, 128], strides = [1, 1]} : vector<8x512xf32> to vector<8x128xf32>
    %cst_59 = arith.constant 5.000000e-01 : f32
    %117 = vector.broadcast %cst_59 : f32 to vector<8x128xf32>
    %118 = arith.mulf %117, %116 : vector<8x128xf32>
    %119 = math.tanh %118 : vector<8x128xf32>
    %cst_60 = arith.constant 5.000000e-01 : f32
    %120 = vector.broadcast %cst_60 : f32 to vector<8x128xf32>
    %121 = arith.mulf %120, %119 : vector<8x128xf32>
    %cst_61 = arith.constant 5.000000e-01 : f32
    %122 = vector.broadcast %cst_61 : f32 to vector<8x128xf32>
    %123 = arith.addf %121, %122 : vector<8x128xf32>
    %124 = vector.extract_strided_slice %102 {offsets = [0, 256], sizes = [8, 128], strides = [1, 1]} : vector<8x512xf32> to vector<8x128xf32>
    %125 = math.tanh %124 : vector<8x128xf32>
    %126 = vector.extract_strided_slice %102 {offsets = [0, 384], sizes = [8, 128], strides = [1, 1]} : vector<8x512xf32> to vector<8x128xf32>
    %cst_62 = arith.constant 5.000000e-01 : f32
    %127 = vector.broadcast %cst_62 : f32 to vector<8x128xf32>
    %128 = arith.mulf %127, %126 : vector<8x128xf32>
    %129 = math.tanh %128 : vector<8x128xf32>
    %cst_63 = arith.constant 5.000000e-01 : f32
    %130 = vector.broadcast %cst_63 : f32 to vector<8x128xf32>
    %131 = arith.mulf %130, %129 : vector<8x128xf32>
    %cst_64 = arith.constant 5.000000e-01 : f32
    %132 = vector.broadcast %cst_64 : f32 to vector<8x128xf32>
    %133 = arith.addf %131, %132 : vector<8x128xf32>
    %134 = arith.mulf %123, %59 : vector<8x128xf32>
    %135 = arith.mulf %115, %125 : vector<8x128xf32>
    %136 = arith.addf %134, %135 : vector<8x128xf32>
    %137 = math.tanh %136 : vector<8x128xf32>
    %138 = arith.mulf %133, %137 : vector<8x128xf32>
    %139 = vector.extract_strided_slice %107 {offsets = [0, 0], sizes = [8, 128], strides = [1, 1]} : vector<8x512xf32> to vector<8x128xf32>
    %cst_65 = arith.constant 5.000000e-01 : f32
    %140 = vector.broadcast %cst_65 : f32 to vector<8x128xf32>
    %141 = arith.mulf %140, %139 : vector<8x128xf32>
    %142 = math.tanh %141 : vector<8x128xf32>
    %cst_66 = arith.constant 5.000000e-01 : f32
    %143 = vector.broadcast %cst_66 : f32 to vector<8x128xf32>
    %144 = arith.mulf %143, %142 : vector<8x128xf32>
    %cst_67 = arith.constant 5.000000e-01 : f32
    %145 = vector.broadcast %cst_67 : f32 to vector<8x128xf32>
    %146 = arith.addf %144, %145 : vector<8x128xf32>
    %147 = vector.extract_strided_slice %107 {offsets = [0, 128], sizes = [8, 128], strides = [1, 1]} : vector<8x512xf32> to vector<8x128xf32>
    %cst_68 = arith.constant 5.000000e-01 : f32
    %148 = vector.broadcast %cst_68 : f32 to vector<8x128xf32>
    %149 = arith.mulf %148, %147 : vector<8x128xf32>
    %150 = math.tanh %149 : vector<8x128xf32>
    %cst_69 = arith.constant 5.000000e-01 : f32
    %151 = vector.broadcast %cst_69 : f32 to vector<8x128xf32>
    %152 = arith.mulf %151, %150 : vector<8x128xf32>
    %cst_70 = arith.constant 5.000000e-01 : f32
    %153 = vector.broadcast %cst_70 : f32 to vector<8x128xf32>
    %154 = arith.addf %152, %153 : vector<8x128xf32>
    %155 = vector.extract_strided_slice %107 {offsets = [0, 256], sizes = [8, 128], strides = [1, 1]} : vector<8x512xf32> to vector<8x128xf32>
    %156 = math.tanh %155 : vector<8x128xf32>
    %157 = vector.extract_strided_slice %107 {offsets = [0, 384], sizes = [8, 128], strides = [1, 1]} : vector<8x512xf32> to vector<8x128xf32>
    %cst_71 = arith.constant 5.000000e-01 : f32
    %158 = vector.broadcast %cst_71 : f32 to vector<8x128xf32>
    %159 = arith.mulf %158, %157 : vector<8x128xf32>
    %160 = math.tanh %159 : vector<8x128xf32>
    %cst_72 = arith.constant 5.000000e-01 : f32
    %161 = vector.broadcast %cst_72 : f32 to vector<8x128xf32>
    %162 = arith.mulf %161, %160 : vector<8x128xf32>
    %cst_73 = arith.constant 5.000000e-01 : f32
    %163 = vector.broadcast %cst_73 : f32 to vector<8x128xf32>
    %164 = arith.addf %162, %163 : vector<8x128xf32>
    %165 = arith.mulf %154, %90 : vector<8x128xf32>
    %166 = arith.mulf %146, %156 : vector<8x128xf32>
    %167 = arith.addf %165, %166 : vector<8x128xf32>
    %168 = math.tanh %167 : vector<8x128xf32>
    %169 = arith.mulf %164, %168 : vector<8x128xf32>
    %c2_i32 = arith.constant 2 : i32
    %170 = arith.truncf %138 : vector<8x128xf32> to vector<8x128xbf16>
    %c0_74 = arith.constant 0 : index
    %c0_75 = arith.constant 0 : index
    %171 = vector.load %arg5[%c0_74, %c0_75] : memref<128x512xbf16, #tpu.memory_space<vmem>>, vector<128x512xbf16>
    %cst_76 = arith.constant dense<0.000000e+00> : vector<8x512xf32>
    %172 = tpu.matmul %170, %171, %cst_76 {dimension_numbers = #tpu.dot_dimension_numbers<[1], [0], [0], [1], [0, 0, 1, 1], [], []>} : vector<8x128xbf16>, vector<128x512xbf16>, vector<8x512xf32> -> vector<8x512xf32>
    %173 = arith.truncf %169 : vector<8x128xf32> to vector<8x128xbf16>
    %c0_77 = arith.constant 0 : index
    %c0_78 = arith.constant 0 : index
    %174 = vector.load %arg6[%c0_77, %c0_78] : memref<128x512xbf16, #tpu.memory_space<vmem>>, vector<128x512xbf16>
    %cst_79 = arith.constant dense<0.000000e+00> : vector<8x512xf32>
    %175 = tpu.matmul %173, %174, %cst_79 {dimension_numbers = #tpu.dot_dimension_numbers<[1], [0], [0], [1], [0, 0, 1, 1], [], []>} : vector<8x128xbf16>, vector<128x512xbf16>, vector<8x512xf32> -> vector<8x512xf32>
    %176 = arith.index_cast %c2_i32 : i32 to index
    %c0_80 = arith.constant 0 : index
    %c0_81 = arith.constant 0 : index
    %177 = vector.load %arg10[%176, %c0_80, %c0_81] : memref<8x8x512xf32, #tpu.memory_space<vmem>>, vector<1x8x512xf32>
    %178 = vector.shape_cast %177 : vector<1x8x512xf32> to vector<8x512xf32>
    %179 = arith.addf %178, %172 : vector<8x512xf32>
    %c7_i32_82 = arith.constant 7 : i32
    %180 = arith.subi %c7_i32_82, %c2_i32 : i32
    %181 = arith.index_cast %180 : i32 to index
    %c0_83 = arith.constant 0 : index
    %c0_84 = arith.constant 0 : index
    %182 = vector.load %arg11[%181, %c0_83, %c0_84] : memref<8x8x512xf32, #tpu.memory_space<vmem>>, vector<1x8x512xf32>
    %183 = vector.shape_cast %182 : vector<1x8x512xf32> to vector<8x512xf32>
    %184 = arith.addf %183, %175 : vector<8x512xf32>
    %185 = vector.extract_strided_slice %179 {offsets = [0, 0], sizes = [8, 128], strides = [1, 1]} : vector<8x512xf32> to vector<8x128xf32>
    %cst_85 = arith.constant 5.000000e-01 : f32
    %186 = vector.broadcast %cst_85 : f32 to vector<8x128xf32>
    %187 = arith.mulf %186, %185 : vector<8x128xf32>
    %188 = math.tanh %187 : vector<8x128xf32>
    %cst_86 = arith.constant 5.000000e-01 : f32
    %189 = vector.broadcast %cst_86 : f32 to vector<8x128xf32>
    %190 = arith.mulf %189, %188 : vector<8x128xf32>
    %cst_87 = arith.constant 5.000000e-01 : f32
    %191 = vector.broadcast %cst_87 : f32 to vector<8x128xf32>
    %192 = arith.addf %190, %191 : vector<8x128xf32>
    %193 = vector.extract_strided_slice %179 {offsets = [0, 128], sizes = [8, 128], strides = [1, 1]} : vector<8x512xf32> to vector<8x128xf32>
    %cst_88 = arith.constant 5.000000e-01 : f32
    %194 = vector.broadcast %cst_88 : f32 to vector<8x128xf32>
    %195 = arith.mulf %194, %193 : vector<8x128xf32>
    %196 = math.tanh %195 : vector<8x128xf32>
    %cst_89 = arith.constant 5.000000e-01 : f32
    %197 = vector.broadcast %cst_89 : f32 to vector<8x128xf32>
    %198 = arith.mulf %197, %196 : vector<8x128xf32>
    %cst_90 = arith.constant 5.000000e-01 : f32
    %199 = vector.broadcast %cst_90 : f32 to vector<8x128xf32>
    %200 = arith.addf %198, %199 : vector<8x128xf32>
    %201 = vector.extract_strided_slice %179 {offsets = [0, 256], sizes = [8, 128], strides = [1, 1]} : vector<8x512xf32> to vector<8x128xf32>
    %202 = math.tanh %201 : vector<8x128xf32>
    %203 = vector.extract_strided_slice %179 {offsets = [0, 384], sizes = [8, 128], strides = [1, 1]} : vector<8x512xf32> to vector<8x128xf32>
    %cst_91 = arith.constant 5.000000e-01 : f32
    %204 = vector.broadcast %cst_91 : f32 to vector<8x128xf32>
    %205 = arith.mulf %204, %203 : vector<8x128xf32>
    %206 = math.tanh %205 : vector<8x128xf32>
    %cst_92 = arith.constant 5.000000e-01 : f32
    %207 = vector.broadcast %cst_92 : f32 to vector<8x128xf32>
    %208 = arith.mulf %207, %206 : vector<8x128xf32>
    %cst_93 = arith.constant 5.000000e-01 : f32
    %209 = vector.broadcast %cst_93 : f32 to vector<8x128xf32>
    %210 = arith.addf %208, %209 : vector<8x128xf32>
    %211 = arith.mulf %200, %136 : vector<8x128xf32>
    %212 = arith.mulf %192, %202 : vector<8x128xf32>
    %213 = arith.addf %211, %212 : vector<8x128xf32>
    %214 = math.tanh %213 : vector<8x128xf32>
    %215 = arith.mulf %210, %214 : vector<8x128xf32>
    %216 = vector.extract_strided_slice %184 {offsets = [0, 0], sizes = [8, 128], strides = [1, 1]} : vector<8x512xf32> to vector<8x128xf32>
    %cst_94 = arith.constant 5.000000e-01 : f32
    %217 = vector.broadcast %cst_94 : f32 to vector<8x128xf32>
    %218 = arith.mulf %217, %216 : vector<8x128xf32>
    %219 = math.tanh %218 : vector<8x128xf32>
    %cst_95 = arith.constant 5.000000e-01 : f32
    %220 = vector.broadcast %cst_95 : f32 to vector<8x128xf32>
    %221 = arith.mulf %220, %219 : vector<8x128xf32>
    %cst_96 = arith.constant 5.000000e-01 : f32
    %222 = vector.broadcast %cst_96 : f32 to vector<8x128xf32>
    %223 = arith.addf %221, %222 : vector<8x128xf32>
    %224 = vector.extract_strided_slice %184 {offsets = [0, 128], sizes = [8, 128], strides = [1, 1]} : vector<8x512xf32> to vector<8x128xf32>
    %cst_97 = arith.constant 5.000000e-01 : f32
    %225 = vector.broadcast %cst_97 : f32 to vector<8x128xf32>
    %226 = arith.mulf %225, %224 : vector<8x128xf32>
    %227 = math.tanh %226 : vector<8x128xf32>
    %cst_98 = arith.constant 5.000000e-01 : f32
    %228 = vector.broadcast %cst_98 : f32 to vector<8x128xf32>
    %229 = arith.mulf %228, %227 : vector<8x128xf32>
    %cst_99 = arith.constant 5.000000e-01 : f32
    %230 = vector.broadcast %cst_99 : f32 to vector<8x128xf32>
    %231 = arith.addf %229, %230 : vector<8x128xf32>
    %232 = vector.extract_strided_slice %184 {offsets = [0, 256], sizes = [8, 128], strides = [1, 1]} : vector<8x512xf32> to vector<8x128xf32>
    %233 = math.tanh %232 : vector<8x128xf32>
    %234 = vector.extract_strided_slice %184 {offsets = [0, 384], sizes = [8, 128], strides = [1, 1]} : vector<8x512xf32> to vector<8x128xf32>
    %cst_100 = arith.constant 5.000000e-01 : f32
    %235 = vector.broadcast %cst_100 : f32 to vector<8x128xf32>
    %236 = arith.mulf %235, %234 : vector<8x128xf32>
    %237 = math.tanh %236 : vector<8x128xf32>
    %cst_101 = arith.constant 5.000000e-01 : f32
    %238 = vector.broadcast %cst_101 : f32 to vector<8x128xf32>
    %239 = arith.mulf %238, %237 : vector<8x128xf32>
    %cst_102 = arith.constant 5.000000e-01 : f32
    %240 = vector.broadcast %cst_102 : f32 to vector<8x128xf32>
    %241 = arith.addf %239, %240 : vector<8x128xf32>
    %242 = arith.mulf %231, %167 : vector<8x128xf32>
    %243 = arith.mulf %223, %233 : vector<8x128xf32>
    %244 = arith.addf %242, %243 : vector<8x128xf32>
    %245 = math.tanh %244 : vector<8x128xf32>
    %246 = arith.mulf %241, %245 : vector<8x128xf32>
    %c3_i32 = arith.constant 3 : i32
    %247 = arith.truncf %215 : vector<8x128xf32> to vector<8x128xbf16>
    %c0_103 = arith.constant 0 : index
    %c0_104 = arith.constant 0 : index
    %248 = vector.load %arg5[%c0_103, %c0_104] : memref<128x512xbf16, #tpu.memory_space<vmem>>, vector<128x512xbf16>
    %cst_105 = arith.constant dense<0.000000e+00> : vector<8x512xf32>
    %249 = tpu.matmul %247, %248, %cst_105 {dimension_numbers = #tpu.dot_dimension_numbers<[1], [0], [0], [1], [0, 0, 1, 1], [], []>} : vector<8x128xbf16>, vector<128x512xbf16>, vector<8x512xf32> -> vector<8x512xf32>
    %250 = arith.truncf %246 : vector<8x128xf32> to vector<8x128xbf16>
    %c0_106 = arith.constant 0 : index
    %c0_107 = arith.constant 0 : index
    %251 = vector.load %arg6[%c0_106, %c0_107] : memref<128x512xbf16, #tpu.memory_space<vmem>>, vector<128x512xbf16>
    %cst_108 = arith.constant dense<0.000000e+00> : vector<8x512xf32>
    %252 = tpu.matmul %250, %251, %cst_108 {dimension_numbers = #tpu.dot_dimension_numbers<[1], [0], [0], [1], [0, 0, 1, 1], [], []>} : vector<8x128xbf16>, vector<128x512xbf16>, vector<8x512xf32> -> vector<8x512xf32>
    %253 = arith.index_cast %c3_i32 : i32 to index
    %c0_109 = arith.constant 0 : index
    %c0_110 = arith.constant 0 : index
    %254 = vector.load %arg10[%253, %c0_109, %c0_110] : memref<8x8x512xf32, #tpu.memory_space<vmem>>, vector<1x8x512xf32>
    %255 = vector.shape_cast %254 : vector<1x8x512xf32> to vector<8x512xf32>
    %256 = arith.addf %255, %249 : vector<8x512xf32>
    %c7_i32_111 = arith.constant 7 : i32
    %257 = arith.subi %c7_i32_111, %c3_i32 : i32
    %258 = arith.index_cast %257 : i32 to index
    %c0_112 = arith.constant 0 : index
    %c0_113 = arith.constant 0 : index
    %259 = vector.load %arg11[%258, %c0_112, %c0_113] : memref<8x8x512xf32, #tpu.memory_space<vmem>>, vector<1x8x512xf32>
    %260 = vector.shape_cast %259 : vector<1x8x512xf32> to vector<8x512xf32>
    %261 = arith.addf %260, %252 : vector<8x512xf32>
    %262 = vector.extract_strided_slice %256 {offsets = [0, 0], sizes = [8, 128], strides = [1, 1]} : vector<8x512xf32> to vector<8x128xf32>
    %cst_114 = arith.constant 5.000000e-01 : f32
    %263 = vector.broadcast %cst_114 : f32 to vector<8x128xf32>
    %264 = arith.mulf %263, %262 : vector<8x128xf32>
    %265 = math.tanh %264 : vector<8x128xf32>
    %cst_115 = arith.constant 5.000000e-01 : f32
    %266 = vector.broadcast %cst_115 : f32 to vector<8x128xf32>
    %267 = arith.mulf %266, %265 : vector<8x128xf32>
    %cst_116 = arith.constant 5.000000e-01 : f32
    %268 = vector.broadcast %cst_116 : f32 to vector<8x128xf32>
    %269 = arith.addf %267, %268 : vector<8x128xf32>
    %270 = vector.extract_strided_slice %256 {offsets = [0, 128], sizes = [8, 128], strides = [1, 1]} : vector<8x512xf32> to vector<8x128xf32>
    %cst_117 = arith.constant 5.000000e-01 : f32
    %271 = vector.broadcast %cst_117 : f32 to vector<8x128xf32>
    %272 = arith.mulf %271, %270 : vector<8x128xf32>
    %273 = math.tanh %272 : vector<8x128xf32>
    %cst_118 = arith.constant 5.000000e-01 : f32
    %274 = vector.broadcast %cst_118 : f32 to vector<8x128xf32>
    %275 = arith.mulf %274, %273 : vector<8x128xf32>
    %cst_119 = arith.constant 5.000000e-01 : f32
    %276 = vector.broadcast %cst_119 : f32 to vector<8x128xf32>
    %277 = arith.addf %275, %276 : vector<8x128xf32>
    %278 = vector.extract_strided_slice %256 {offsets = [0, 256], sizes = [8, 128], strides = [1, 1]} : vector<8x512xf32> to vector<8x128xf32>
    %279 = math.tanh %278 : vector<8x128xf32>
    %280 = vector.extract_strided_slice %256 {offsets = [0, 384], sizes = [8, 128], strides = [1, 1]} : vector<8x512xf32> to vector<8x128xf32>
    %cst_120 = arith.constant 5.000000e-01 : f32
    %281 = vector.broadcast %cst_120 : f32 to vector<8x128xf32>
    %282 = arith.mulf %281, %280 : vector<8x128xf32>
    %283 = math.tanh %282 : vector<8x128xf32>
    %cst_121 = arith.constant 5.000000e-01 : f32
    %284 = vector.broadcast %cst_121 : f32 to vector<8x128xf32>
    %285 = arith.mulf %284, %283 : vector<8x128xf32>
    %cst_122 = arith.constant 5.000000e-01 : f32
    %286 = vector.broadcast %cst_122 : f32 to vector<8x128xf32>
    %287 = arith.addf %285, %286 : vector<8x128xf32>
    %288 = arith.mulf %277, %213 : vector<8x128xf32>
    %289 = arith.mulf %269, %279 : vector<8x128xf32>
    %290 = arith.addf %288, %289 : vector<8x128xf32>
    %291 = math.tanh %290 : vector<8x128xf32>
    %292 = arith.mulf %287, %291 : vector<8x128xf32>
    %293 = vector.extract_strided_slice %261 {offsets = [0, 0], sizes = [8, 128], strides = [1, 1]} : vector<8x512xf32> to vector<8x128xf32>
    %cst_123 = arith.constant 5.000000e-01 : f32
    %294 = vector.broadcast %cst_123 : f32 to vector<8x128xf32>
    %295 = arith.mulf %294, %293 : vector<8x128xf32>
    %296 = math.tanh %295 : vector<8x128xf32>
    %cst_124 = arith.constant 5.000000e-01 : f32
    %297 = vector.broadcast %cst_124 : f32 to vector<8x128xf32>
    %298 = arith.mulf %297, %296 : vector<8x128xf32>
    %cst_125 = arith.constant 5.000000e-01 : f32
    %299 = vector.broadcast %cst_125 : f32 to vector<8x128xf32>
    %300 = arith.addf %298, %299 : vector<8x128xf32>
    %301 = vector.extract_strided_slice %261 {offsets = [0, 128], sizes = [8, 128], strides = [1, 1]} : vector<8x512xf32> to vector<8x128xf32>
    %cst_126 = arith.constant 5.000000e-01 : f32
    %302 = vector.broadcast %cst_126 : f32 to vector<8x128xf32>
    %303 = arith.mulf %302, %301 : vector<8x128xf32>
    %304 = math.tanh %303 : vector<8x128xf32>
    %cst_127 = arith.constant 5.000000e-01 : f32
    %305 = vector.broadcast %cst_127 : f32 to vector<8x128xf32>
    %306 = arith.mulf %305, %304 : vector<8x128xf32>
    %cst_128 = arith.constant 5.000000e-01 : f32
    %307 = vector.broadcast %cst_128 : f32 to vector<8x128xf32>
    %308 = arith.addf %306, %307 : vector<8x128xf32>
    %309 = vector.extract_strided_slice %261 {offsets = [0, 256], sizes = [8, 128], strides = [1, 1]} : vector<8x512xf32> to vector<8x128xf32>
    %310 = math.tanh %309 : vector<8x128xf32>
    %311 = vector.extract_strided_slice %261 {offsets = [0, 384], sizes = [8, 128], strides = [1, 1]} : vector<8x512xf32> to vector<8x128xf32>
    %cst_129 = arith.constant 5.000000e-01 : f32
    %312 = vector.broadcast %cst_129 : f32 to vector<8x128xf32>
    %313 = arith.mulf %312, %311 : vector<8x128xf32>
    %314 = math.tanh %313 : vector<8x128xf32>
    %cst_130 = arith.constant 5.000000e-01 : f32
    %315 = vector.broadcast %cst_130 : f32 to vector<8x128xf32>
    %316 = arith.mulf %315, %314 : vector<8x128xf32>
    %cst_131 = arith.constant 5.000000e-01 : f32
    %317 = vector.broadcast %cst_131 : f32 to vector<8x128xf32>
    %318 = arith.addf %316, %317 : vector<8x128xf32>
    %319 = arith.mulf %308, %244 : vector<8x128xf32>
    %320 = arith.mulf %300, %310 : vector<8x128xf32>
    %321 = arith.addf %319, %320 : vector<8x128xf32>
    %322 = math.tanh %321 : vector<8x128xf32>
    %323 = arith.mulf %318, %322 : vector<8x128xf32>
    %c4_i32 = arith.constant 4 : i32
    %324 = arith.truncf %292 : vector<8x128xf32> to vector<8x128xbf16>
    %c0_132 = arith.constant 0 : index
    %c0_133 = arith.constant 0 : index
    %325 = vector.load %arg5[%c0_132, %c0_133] : memref<128x512xbf16, #tpu.memory_space<vmem>>, vector<128x512xbf16>
    %cst_134 = arith.constant dense<0.000000e+00> : vector<8x512xf32>
    %326 = tpu.matmul %324, %325, %cst_134 {dimension_numbers = #tpu.dot_dimension_numbers<[1], [0], [0], [1], [0, 0, 1, 1], [], []>} : vector<8x128xbf16>, vector<128x512xbf16>, vector<8x512xf32> -> vector<8x512xf32>
    %327 = arith.truncf %323 : vector<8x128xf32> to vector<8x128xbf16>
    %c0_135 = arith.constant 0 : index
    %c0_136 = arith.constant 0 : index
    %328 = vector.load %arg6[%c0_135, %c0_136] : memref<128x512xbf16, #tpu.memory_space<vmem>>, vector<128x512xbf16>
    %cst_137 = arith.constant dense<0.000000e+00> : vector<8x512xf32>
    %329 = tpu.matmul %327, %328, %cst_137 {dimension_numbers = #tpu.dot_dimension_numbers<[1], [0], [0], [1], [0, 0, 1, 1], [], []>} : vector<8x128xbf16>, vector<128x512xbf16>, vector<8x512xf32> -> vector<8x512xf32>
    %330 = arith.index_cast %c4_i32 : i32 to index
    %c0_138 = arith.constant 0 : index
    %c0_139 = arith.constant 0 : index
    %331 = vector.load %arg10[%330, %c0_138, %c0_139] : memref<8x8x512xf32, #tpu.memory_space<vmem>>, vector<1x8x512xf32>
    %332 = vector.shape_cast %331 : vector<1x8x512xf32> to vector<8x512xf32>
    %333 = arith.addf %332, %326 : vector<8x512xf32>
    %c7_i32_140 = arith.constant 7 : i32
    %334 = arith.subi %c7_i32_140, %c4_i32 : i32
    %335 = arith.index_cast %334 : i32 to index
    %c0_141 = arith.constant 0 : index
    %c0_142 = arith.constant 0 : index
    %336 = vector.load %arg11[%335, %c0_141, %c0_142] : memref<8x8x512xf32, #tpu.memory_space<vmem>>, vector<1x8x512xf32>
    %337 = vector.shape_cast %336 : vector<1x8x512xf32> to vector<8x512xf32>
    %338 = arith.addf %337, %329 : vector<8x512xf32>
    %339 = vector.extract_strided_slice %333 {offsets = [0, 0], sizes = [8, 128], strides = [1, 1]} : vector<8x512xf32> to vector<8x128xf32>
    %cst_143 = arith.constant 5.000000e-01 : f32
    %340 = vector.broadcast %cst_143 : f32 to vector<8x128xf32>
    %341 = arith.mulf %340, %339 : vector<8x128xf32>
    %342 = math.tanh %341 : vector<8x128xf32>
    %cst_144 = arith.constant 5.000000e-01 : f32
    %343 = vector.broadcast %cst_144 : f32 to vector<8x128xf32>
    %344 = arith.mulf %343, %342 : vector<8x128xf32>
    %cst_145 = arith.constant 5.000000e-01 : f32
    %345 = vector.broadcast %cst_145 : f32 to vector<8x128xf32>
    %346 = arith.addf %344, %345 : vector<8x128xf32>
    %347 = vector.extract_strided_slice %333 {offsets = [0, 128], sizes = [8, 128], strides = [1, 1]} : vector<8x512xf32> to vector<8x128xf32>
    %cst_146 = arith.constant 5.000000e-01 : f32
    %348 = vector.broadcast %cst_146 : f32 to vector<8x128xf32>
    %349 = arith.mulf %348, %347 : vector<8x128xf32>
    %350 = math.tanh %349 : vector<8x128xf32>
    %cst_147 = arith.constant 5.000000e-01 : f32
    %351 = vector.broadcast %cst_147 : f32 to vector<8x128xf32>
    %352 = arith.mulf %351, %350 : vector<8x128xf32>
    %cst_148 = arith.constant 5.000000e-01 : f32
    %353 = vector.broadcast %cst_148 : f32 to vector<8x128xf32>
    %354 = arith.addf %352, %353 : vector<8x128xf32>
    %355 = vector.extract_strided_slice %333 {offsets = [0, 256], sizes = [8, 128], strides = [1, 1]} : vector<8x512xf32> to vector<8x128xf32>
    %356 = math.tanh %355 : vector<8x128xf32>
    %357 = vector.extract_strided_slice %333 {offsets = [0, 384], sizes = [8, 128], strides = [1, 1]} : vector<8x512xf32> to vector<8x128xf32>
    %cst_149 = arith.constant 5.000000e-01 : f32
    %358 = vector.broadcast %cst_149 : f32 to vector<8x128xf32>
    %359 = arith.mulf %358, %357 : vector<8x128xf32>
    %360 = math.tanh %359 : vector<8x128xf32>
    %cst_150 = arith.constant 5.000000e-01 : f32
    %361 = vector.broadcast %cst_150 : f32 to vector<8x128xf32>
    %362 = arith.mulf %361, %360 : vector<8x128xf32>
    %cst_151 = arith.constant 5.000000e-01 : f32
    %363 = vector.broadcast %cst_151 : f32 to vector<8x128xf32>
    %364 = arith.addf %362, %363 : vector<8x128xf32>
    %365 = arith.mulf %354, %290 : vector<8x128xf32>
    %366 = arith.mulf %346, %356 : vector<8x128xf32>
    %367 = arith.addf %365, %366 : vector<8x128xf32>
    %368 = math.tanh %367 : vector<8x128xf32>
    %369 = arith.mulf %364, %368 : vector<8x128xf32>
    %370 = vector.extract_strided_slice %338 {offsets = [0, 0], sizes = [8, 128], strides = [1, 1]} : vector<8x512xf32> to vector<8x128xf32>
    %cst_152 = arith.constant 5.000000e-01 : f32
    %371 = vector.broadcast %cst_152 : f32 to vector<8x128xf32>
    %372 = arith.mulf %371, %370 : vector<8x128xf32>
    %373 = math.tanh %372 : vector<8x128xf32>
    %cst_153 = arith.constant 5.000000e-01 : f32
    %374 = vector.broadcast %cst_153 : f32 to vector<8x128xf32>
    %375 = arith.mulf %374, %373 : vector<8x128xf32>
    %cst_154 = arith.constant 5.000000e-01 : f32
    %376 = vector.broadcast %cst_154 : f32 to vector<8x128xf32>
    %377 = arith.addf %375, %376 : vector<8x128xf32>
    %378 = vector.extract_strided_slice %338 {offsets = [0, 128], sizes = [8, 128], strides = [1, 1]} : vector<8x512xf32> to vector<8x128xf32>
    %cst_155 = arith.constant 5.000000e-01 : f32
    %379 = vector.broadcast %cst_155 : f32 to vector<8x128xf32>
    %380 = arith.mulf %379, %378 : vector<8x128xf32>
    %381 = math.tanh %380 : vector<8x128xf32>
    %cst_156 = arith.constant 5.000000e-01 : f32
    %382 = vector.broadcast %cst_156 : f32 to vector<8x128xf32>
    %383 = arith.mulf %382, %381 : vector<8x128xf32>
    %cst_157 = arith.constant 5.000000e-01 : f32
    %384 = vector.broadcast %cst_157 : f32 to vector<8x128xf32>
    %385 = arith.addf %383, %384 : vector<8x128xf32>
    %386 = vector.extract_strided_slice %338 {offsets = [0, 256], sizes = [8, 128], strides = [1, 1]} : vector<8x512xf32> to vector<8x128xf32>
    %387 = math.tanh %386 : vector<8x128xf32>
    %388 = vector.extract_strided_slice %338 {offsets = [0, 384], sizes = [8, 128], strides = [1, 1]} : vector<8x512xf32> to vector<8x128xf32>
    %cst_158 = arith.constant 5.000000e-01 : f32
    %389 = vector.broadcast %cst_158 : f32 to vector<8x128xf32>
    %390 = arith.mulf %389, %388 : vector<8x128xf32>
    %391 = math.tanh %390 : vector<8x128xf32>
    %cst_159 = arith.constant 5.000000e-01 : f32
    %392 = vector.broadcast %cst_159 : f32 to vector<8x128xf32>
    %393 = arith.mulf %392, %391 : vector<8x128xf32>
    %cst_160 = arith.constant 5.000000e-01 : f32
    %394 = vector.broadcast %cst_160 : f32 to vector<8x128xf32>
    %395 = arith.addf %393, %394 : vector<8x128xf32>
    %396 = arith.mulf %385, %321 : vector<8x128xf32>
    %397 = arith.mulf %377, %387 : vector<8x128xf32>
    %398 = arith.addf %396, %397 : vector<8x128xf32>
    %399 = math.tanh %398 : vector<8x128xf32>
    %400 = arith.mulf %395, %399 : vector<8x128xf32>
    %c5_i32 = arith.constant 5 : i32
    %401 = arith.truncf %369 : vector<8x128xf32> to vector<8x128xbf16>
    %c0_161 = arith.constant 0 : index
    %c0_162 = arith.constant 0 : index
    %402 = vector.load %arg5[%c0_161, %c0_162] : memref<128x512xbf16, #tpu.memory_space<vmem>>, vector<128x512xbf16>
    %cst_163 = arith.constant dense<0.000000e+00> : vector<8x512xf32>
    %403 = tpu.matmul %401, %402, %cst_163 {dimension_numbers = #tpu.dot_dimension_numbers<[1], [0], [0], [1], [0, 0, 1, 1], [], []>} : vector<8x128xbf16>, vector<128x512xbf16>, vector<8x512xf32> -> vector<8x512xf32>
    %404 = arith.truncf %400 : vector<8x128xf32> to vector<8x128xbf16>
    %c0_164 = arith.constant 0 : index
    %c0_165 = arith.constant 0 : index
    %405 = vector.load %arg6[%c0_164, %c0_165] : memref<128x512xbf16, #tpu.memory_space<vmem>>, vector<128x512xbf16>
    %cst_166 = arith.constant dense<0.000000e+00> : vector<8x512xf32>
    %406 = tpu.matmul %404, %405, %cst_166 {dimension_numbers = #tpu.dot_dimension_numbers<[1], [0], [0], [1], [0, 0, 1, 1], [], []>} : vector<8x128xbf16>, vector<128x512xbf16>, vector<8x512xf32> -> vector<8x512xf32>
    %407 = arith.index_cast %c5_i32 : i32 to index
    %c0_167 = arith.constant 0 : index
    %c0_168 = arith.constant 0 : index
    %408 = vector.load %arg10[%407, %c0_167, %c0_168] : memref<8x8x512xf32, #tpu.memory_space<vmem>>, vector<1x8x512xf32>
    %409 = vector.shape_cast %408 : vector<1x8x512xf32> to vector<8x512xf32>
    %410 = arith.addf %409, %403 : vector<8x512xf32>
    %c7_i32_169 = arith.constant 7 : i32
    %411 = arith.subi %c7_i32_169, %c5_i32 : i32
    %412 = arith.index_cast %411 : i32 to index
    %c0_170 = arith.constant 0 : index
    %c0_171 = arith.constant 0 : index
    %413 = vector.load %arg11[%412, %c0_170, %c0_171] : memref<8x8x512xf32, #tpu.memory_space<vmem>>, vector<1x8x512xf32>
    %414 = vector.shape_cast %413 : vector<1x8x512xf32> to vector<8x512xf32>
    %415 = arith.addf %414, %406 : vector<8x512xf32>
    %416 = vector.extract_strided_slice %410 {offsets = [0, 0], sizes = [8, 128], strides = [1, 1]} : vector<8x512xf32> to vector<8x128xf32>
    %cst_172 = arith.constant 5.000000e-01 : f32
    %417 = vector.broadcast %cst_172 : f32 to vector<8x128xf32>
    %418 = arith.mulf %417, %416 : vector<8x128xf32>
    %419 = math.tanh %418 : vector<8x128xf32>
    %cst_173 = arith.constant 5.000000e-01 : f32
    %420 = vector.broadcast %cst_173 : f32 to vector<8x128xf32>
    %421 = arith.mulf %420, %419 : vector<8x128xf32>
    %cst_174 = arith.constant 5.000000e-01 : f32
    %422 = vector.broadcast %cst_174 : f32 to vector<8x128xf32>
    %423 = arith.addf %421, %422 : vector<8x128xf32>
    %424 = vector.extract_strided_slice %410 {offsets = [0, 128], sizes = [8, 128], strides = [1, 1]} : vector<8x512xf32> to vector<8x128xf32>
    %cst_175 = arith.constant 5.000000e-01 : f32
    %425 = vector.broadcast %cst_175 : f32 to vector<8x128xf32>
    %426 = arith.mulf %425, %424 : vector<8x128xf32>
    %427 = math.tanh %426 : vector<8x128xf32>
    %cst_176 = arith.constant 5.000000e-01 : f32
    %428 = vector.broadcast %cst_176 : f32 to vector<8x128xf32>
    %429 = arith.mulf %428, %427 : vector<8x128xf32>
    %cst_177 = arith.constant 5.000000e-01 : f32
    %430 = vector.broadcast %cst_177 : f32 to vector<8x128xf32>
    %431 = arith.addf %429, %430 : vector<8x128xf32>
    %432 = vector.extract_strided_slice %410 {offsets = [0, 256], sizes = [8, 128], strides = [1, 1]} : vector<8x512xf32> to vector<8x128xf32>
    %433 = math.tanh %432 : vector<8x128xf32>
    %434 = vector.extract_strided_slice %410 {offsets = [0, 384], sizes = [8, 128], strides = [1, 1]} : vector<8x512xf32> to vector<8x128xf32>
    %cst_178 = arith.constant 5.000000e-01 : f32
    %435 = vector.broadcast %cst_178 : f32 to vector<8x128xf32>
    %436 = arith.mulf %435, %434 : vector<8x128xf32>
    %437 = math.tanh %436 : vector<8x128xf32>
    %cst_179 = arith.constant 5.000000e-01 : f32
    %438 = vector.broadcast %cst_179 : f32 to vector<8x128xf32>
    %439 = arith.mulf %438, %437 : vector<8x128xf32>
    %cst_180 = arith.constant 5.000000e-01 : f32
    %440 = vector.broadcast %cst_180 : f32 to vector<8x128xf32>
    %441 = arith.addf %439, %440 : vector<8x128xf32>
    %442 = arith.mulf %431, %367 : vector<8x128xf32>
    %443 = arith.mulf %423, %433 : vector<8x128xf32>
    %444 = arith.addf %442, %443 : vector<8x128xf32>
    %445 = math.tanh %444 : vector<8x128xf32>
    %446 = arith.mulf %441, %445 : vector<8x128xf32>
    %447 = vector.extract_strided_slice %415 {offsets = [0, 0], sizes = [8, 128], strides = [1, 1]} : vector<8x512xf32> to vector<8x128xf32>
    %cst_181 = arith.constant 5.000000e-01 : f32
    %448 = vector.broadcast %cst_181 : f32 to vector<8x128xf32>
    %449 = arith.mulf %448, %447 : vector<8x128xf32>
    %450 = math.tanh %449 : vector<8x128xf32>
    %cst_182 = arith.constant 5.000000e-01 : f32
    %451 = vector.broadcast %cst_182 : f32 to vector<8x128xf32>
    %452 = arith.mulf %451, %450 : vector<8x128xf32>
    %cst_183 = arith.constant 5.000000e-01 : f32
    %453 = vector.broadcast %cst_183 : f32 to vector<8x128xf32>
    %454 = arith.addf %452, %453 : vector<8x128xf32>
    %455 = vector.extract_strided_slice %415 {offsets = [0, 128], sizes = [8, 128], strides = [1, 1]} : vector<8x512xf32> to vector<8x128xf32>
    %cst_184 = arith.constant 5.000000e-01 : f32
    %456 = vector.broadcast %cst_184 : f32 to vector<8x128xf32>
    %457 = arith.mulf %456, %455 : vector<8x128xf32>
    %458 = math.tanh %457 : vector<8x128xf32>
    %cst_185 = arith.constant 5.000000e-01 : f32
    %459 = vector.broadcast %cst_185 : f32 to vector<8x128xf32>
    %460 = arith.mulf %459, %458 : vector<8x128xf32>
    %cst_186 = arith.constant 5.000000e-01 : f32
    %461 = vector.broadcast %cst_186 : f32 to vector<8x128xf32>
    %462 = arith.addf %460, %461 : vector<8x128xf32>
    %463 = vector.extract_strided_slice %415 {offsets = [0, 256], sizes = [8, 128], strides = [1, 1]} : vector<8x512xf32> to vector<8x128xf32>
    %464 = math.tanh %463 : vector<8x128xf32>
    %465 = vector.extract_strided_slice %415 {offsets = [0, 384], sizes = [8, 128], strides = [1, 1]} : vector<8x512xf32> to vector<8x128xf32>
    %cst_187 = arith.constant 5.000000e-01 : f32
    %466 = vector.broadcast %cst_187 : f32 to vector<8x128xf32>
    %467 = arith.mulf %466, %465 : vector<8x128xf32>
    %468 = math.tanh %467 : vector<8x128xf32>
    %cst_188 = arith.constant 5.000000e-01 : f32
    %469 = vector.broadcast %cst_188 : f32 to vector<8x128xf32>
    %470 = arith.mulf %469, %468 : vector<8x128xf32>
    %cst_189 = arith.constant 5.000000e-01 : f32
    %471 = vector.broadcast %cst_189 : f32 to vector<8x128xf32>
    %472 = arith.addf %470, %471 : vector<8x128xf32>
    %473 = arith.mulf %462, %398 : vector<8x128xf32>
    %474 = arith.mulf %454, %464 : vector<8x128xf32>
    %475 = arith.addf %473, %474 : vector<8x128xf32>
    %476 = math.tanh %475 : vector<8x128xf32>
    %477 = arith.mulf %472, %476 : vector<8x128xf32>
    %c6_i32 = arith.constant 6 : i32
    %478 = arith.truncf %446 : vector<8x128xf32> to vector<8x128xbf16>
    %c0_190 = arith.constant 0 : index
    %c0_191 = arith.constant 0 : index
    %479 = vector.load %arg5[%c0_190, %c0_191] : memref<128x512xbf16, #tpu.memory_space<vmem>>, vector<128x512xbf16>
    %cst_192 = arith.constant dense<0.000000e+00> : vector<8x512xf32>
    %480 = tpu.matmul %478, %479, %cst_192 {dimension_numbers = #tpu.dot_dimension_numbers<[1], [0], [0], [1], [0, 0, 1, 1], [], []>} : vector<8x128xbf16>, vector<128x512xbf16>, vector<8x512xf32> -> vector<8x512xf32>
    %481 = arith.truncf %477 : vector<8x128xf32> to vector<8x128xbf16>
    %c0_193 = arith.constant 0 : index
    %c0_194 = arith.constant 0 : index
    %482 = vector.load %arg6[%c0_193, %c0_194] : memref<128x512xbf16, #tpu.memory_space<vmem>>, vector<128x512xbf16>
    %cst_195 = arith.constant dense<0.000000e+00> : vector<8x512xf32>
    %483 = tpu.matmul %481, %482, %cst_195 {dimension_numbers = #tpu.dot_dimension_numbers<[1], [0], [0], [1], [0, 0, 1, 1], [], []>} : vector<8x128xbf16>, vector<128x512xbf16>, vector<8x512xf32> -> vector<8x512xf32>
    %484 = arith.index_cast %c6_i32 : i32 to index
    %c0_196 = arith.constant 0 : index
    %c0_197 = arith.constant 0 : index
    %485 = vector.load %arg10[%484, %c0_196, %c0_197] : memref<8x8x512xf32, #tpu.memory_space<vmem>>, vector<1x8x512xf32>
    %486 = vector.shape_cast %485 : vector<1x8x512xf32> to vector<8x512xf32>
    %487 = arith.addf %486, %480 : vector<8x512xf32>
    %c7_i32_198 = arith.constant 7 : i32
    %488 = arith.subi %c7_i32_198, %c6_i32 : i32
    %489 = arith.index_cast %488 : i32 to index
    %c0_199 = arith.constant 0 : index
    %c0_200 = arith.constant 0 : index
    %490 = vector.load %arg11[%489, %c0_199, %c0_200] : memref<8x8x512xf32, #tpu.memory_space<vmem>>, vector<1x8x512xf32>
    %491 = vector.shape_cast %490 : vector<1x8x512xf32> to vector<8x512xf32>
    %492 = arith.addf %491, %483 : vector<8x512xf32>
    %493 = vector.extract_strided_slice %487 {offsets = [0, 0], sizes = [8, 128], strides = [1, 1]} : vector<8x512xf32> to vector<8x128xf32>
    %cst_201 = arith.constant 5.000000e-01 : f32
    %494 = vector.broadcast %cst_201 : f32 to vector<8x128xf32>
    %495 = arith.mulf %494, %493 : vector<8x128xf32>
    %496 = math.tanh %495 : vector<8x128xf32>
    %cst_202 = arith.constant 5.000000e-01 : f32
    %497 = vector.broadcast %cst_202 : f32 to vector<8x128xf32>
    %498 = arith.mulf %497, %496 : vector<8x128xf32>
    %cst_203 = arith.constant 5.000000e-01 : f32
    %499 = vector.broadcast %cst_203 : f32 to vector<8x128xf32>
    %500 = arith.addf %498, %499 : vector<8x128xf32>
    %501 = vector.extract_strided_slice %487 {offsets = [0, 128], sizes = [8, 128], strides = [1, 1]} : vector<8x512xf32> to vector<8x128xf32>
    %cst_204 = arith.constant 5.000000e-01 : f32
    %502 = vector.broadcast %cst_204 : f32 to vector<8x128xf32>
    %503 = arith.mulf %502, %501 : vector<8x128xf32>
    %504 = math.tanh %503 : vector<8x128xf32>
    %cst_205 = arith.constant 5.000000e-01 : f32
    %505 = vector.broadcast %cst_205 : f32 to vector<8x128xf32>
    %506 = arith.mulf %505, %504 : vector<8x128xf32>
    %cst_206 = arith.constant 5.000000e-01 : f32
    %507 = vector.broadcast %cst_206 : f32 to vector<8x128xf32>
    %508 = arith.addf %506, %507 : vector<8x128xf32>
    %509 = vector.extract_strided_slice %487 {offsets = [0, 256], sizes = [8, 128], strides = [1, 1]} : vector<8x512xf32> to vector<8x128xf32>
    %510 = math.tanh %509 : vector<8x128xf32>
    %511 = vector.extract_strided_slice %487 {offsets = [0, 384], sizes = [8, 128], strides = [1, 1]} : vector<8x512xf32> to vector<8x128xf32>
    %cst_207 = arith.constant 5.000000e-01 : f32
    %512 = vector.broadcast %cst_207 : f32 to vector<8x128xf32>
    %513 = arith.mulf %512, %511 : vector<8x128xf32>
    %514 = math.tanh %513 : vector<8x128xf32>
    %cst_208 = arith.constant 5.000000e-01 : f32
    %515 = vector.broadcast %cst_208 : f32 to vector<8x128xf32>
    %516 = arith.mulf %515, %514 : vector<8x128xf32>
    %cst_209 = arith.constant 5.000000e-01 : f32
    %517 = vector.broadcast %cst_209 : f32 to vector<8x128xf32>
    %518 = arith.addf %516, %517 : vector<8x128xf32>
    %519 = arith.mulf %508, %444 : vector<8x128xf32>
    %520 = arith.mulf %500, %510 : vector<8x128xf32>
    %521 = arith.addf %519, %520 : vector<8x128xf32>
    %522 = math.tanh %521 : vector<8x128xf32>
    %523 = arith.mulf %518, %522 : vector<8x128xf32>
    %524 = vector.extract_strided_slice %492 {offsets = [0, 0], sizes = [8, 128], strides = [1, 1]} : vector<8x512xf32> to vector<8x128xf32>
    %cst_210 = arith.constant 5.000000e-01 : f32
    %525 = vector.broadcast %cst_210 : f32 to vector<8x128xf32>
    %526 = arith.mulf %525, %524 : vector<8x128xf32>
    %527 = math.tanh %526 : vector<8x128xf32>
    %cst_211 = arith.constant 5.000000e-01 : f32
    %528 = vector.broadcast %cst_211 : f32 to vector<8x128xf32>
    %529 = arith.mulf %528, %527 : vector<8x128xf32>
    %cst_212 = arith.constant 5.000000e-01 : f32
    %530 = vector.broadcast %cst_212 : f32 to vector<8x128xf32>
    %531 = arith.addf %529, %530 : vector<8x128xf32>
    %532 = vector.extract_strided_slice %492 {offsets = [0, 128], sizes = [8, 128], strides = [1, 1]} : vector<8x512xf32> to vector<8x128xf32>
    %cst_213 = arith.constant 5.000000e-01 : f32
    %533 = vector.broadcast %cst_213 : f32 to vector<8x128xf32>
    %534 = arith.mulf %533, %532 : vector<8x128xf32>
    %535 = math.tanh %534 : vector<8x128xf32>
    %cst_214 = arith.constant 5.000000e-01 : f32
    %536 = vector.broadcast %cst_214 : f32 to vector<8x128xf32>
    %537 = arith.mulf %536, %535 : vector<8x128xf32>
    %cst_215 = arith.constant 5.000000e-01 : f32
    %538 = vector.broadcast %cst_215 : f32 to vector<8x128xf32>
    %539 = arith.addf %537, %538 : vector<8x128xf32>
    %540 = vector.extract_strided_slice %492 {offsets = [0, 256], sizes = [8, 128], strides = [1, 1]} : vector<8x512xf32> to vector<8x128xf32>
    %541 = math.tanh %540 : vector<8x128xf32>
    %542 = vector.extract_strided_slice %492 {offsets = [0, 384], sizes = [8, 128], strides = [1, 1]} : vector<8x512xf32> to vector<8x128xf32>
    %cst_216 = arith.constant 5.000000e-01 : f32
    %543 = vector.broadcast %cst_216 : f32 to vector<8x128xf32>
    %544 = arith.mulf %543, %542 : vector<8x128xf32>
    %545 = math.tanh %544 : vector<8x128xf32>
    %cst_217 = arith.constant 5.000000e-01 : f32
    %546 = vector.broadcast %cst_217 : f32 to vector<8x128xf32>
    %547 = arith.mulf %546, %545 : vector<8x128xf32>
    %cst_218 = arith.constant 5.000000e-01 : f32
    %548 = vector.broadcast %cst_218 : f32 to vector<8x128xf32>
    %549 = arith.addf %547, %548 : vector<8x128xf32>
    %550 = arith.mulf %539, %475 : vector<8x128xf32>
    %551 = arith.mulf %531, %541 : vector<8x128xf32>
    %552 = arith.addf %550, %551 : vector<8x128xf32>
    %553 = math.tanh %552 : vector<8x128xf32>
    %554 = arith.mulf %549, %553 : vector<8x128xf32>
    %c7_i32_219 = arith.constant 7 : i32
    %555 = arith.truncf %523 : vector<8x128xf32> to vector<8x128xbf16>
    %c0_220 = arith.constant 0 : index
    %c0_221 = arith.constant 0 : index
    %556 = vector.load %arg5[%c0_220, %c0_221] : memref<128x512xbf16, #tpu.memory_space<vmem>>, vector<128x512xbf16>
    %cst_222 = arith.constant dense<0.000000e+00> : vector<8x512xf32>
    %557 = tpu.matmul %555, %556, %cst_222 {dimension_numbers = #tpu.dot_dimension_numbers<[1], [0], [0], [1], [0, 0, 1, 1], [], []>} : vector<8x128xbf16>, vector<128x512xbf16>, vector<8x512xf32> -> vector<8x512xf32>
    %558 = arith.truncf %554 : vector<8x128xf32> to vector<8x128xbf16>
    %c0_223 = arith.constant 0 : index
    %c0_224 = arith.constant 0 : index
    %559 = vector.load %arg6[%c0_223, %c0_224] : memref<128x512xbf16, #tpu.memory_space<vmem>>, vector<128x512xbf16>
    %cst_225 = arith.constant dense<0.000000e+00> : vector<8x512xf32>
    %560 = tpu.matmul %558, %559, %cst_225 {dimension_numbers = #tpu.dot_dimension_numbers<[1], [0], [0], [1], [0, 0, 1, 1], [], []>} : vector<8x128xbf16>, vector<128x512xbf16>, vector<8x512xf32> -> vector<8x512xf32>
    %561 = arith.index_cast %c7_i32_219 : i32 to index
    %c0_226 = arith.constant 0 : index
    %c0_227 = arith.constant 0 : index
    %562 = vector.load %arg10[%561, %c0_226, %c0_227] : memref<8x8x512xf32, #tpu.memory_space<vmem>>, vector<1x8x512xf32>
    %563 = vector.shape_cast %562 : vector<1x8x512xf32> to vector<8x512xf32>
    %564 = arith.addf %563, %557 : vector<8x512xf32>
    %c7_i32_228 = arith.constant 7 : i32
    %565 = arith.subi %c7_i32_228, %c7_i32_219 : i32
    %566 = arith.index_cast %565 : i32 to index
    %c0_229 = arith.constant 0 : index
    %c0_230 = arith.constant 0 : index
    %567 = vector.load %arg11[%566, %c0_229, %c0_230] : memref<8x8x512xf32, #tpu.memory_space<vmem>>, vector<1x8x512xf32>
    %568 = vector.shape_cast %567 : vector<1x8x512xf32> to vector<8x512xf32>
    %569 = arith.addf %568, %560 : vector<8x512xf32>
    %570 = vector.extract_strided_slice %564 {offsets = [0, 0], sizes = [8, 128], strides = [1, 1]} : vector<8x512xf32> to vector<8x128xf32>
    %cst_231 = arith.constant 5.000000e-01 : f32
    %571 = vector.broadcast %cst_231 : f32 to vector<8x128xf32>
    %572 = arith.mulf %571, %570 : vector<8x128xf32>
    %573 = math.tanh %572 : vector<8x128xf32>
    %cst_232 = arith.constant 5.000000e-01 : f32
    %574 = vector.broadcast %cst_232 : f32 to vector<8x128xf32>
    %575 = arith.mulf %574, %573 : vector<8x128xf32>
    %cst_233 = arith.constant 5.000000e-01 : f32
    %576 = vector.broadcast %cst_233 : f32 to vector<8x128xf32>
    %577 = arith.addf %575, %576 : vector<8x128xf32>
    %578 = vector.extract_strided_slice %564 {offsets = [0, 128], sizes = [8, 128], strides = [1, 1]} : vector<8x512xf32> to vector<8x128xf32>
    %cst_234 = arith.constant 5.000000e-01 : f32
    %579 = vector.broadcast %cst_234 : f32 to vector<8x128xf32>
    %580 = arith.mulf %579, %578 : vector<8x128xf32>
    %581 = math.tanh %580 : vector<8x128xf32>
    %cst_235 = arith.constant 5.000000e-01 : f32
    %582 = vector.broadcast %cst_235 : f32 to vector<8x128xf32>
    %583 = arith.mulf %582, %581 : vector<8x128xf32>
    %cst_236 = arith.constant 5.000000e-01 : f32
    %584 = vector.broadcast %cst_236 : f32 to vector<8x128xf32>
    %585 = arith.addf %583, %584 : vector<8x128xf32>
    %586 = vector.extract_strided_slice %564 {offsets = [0, 256], sizes = [8, 128], strides = [1, 1]} : vector<8x512xf32> to vector<8x128xf32>
    %587 = math.tanh %586 : vector<8x128xf32>
    %588 = vector.extract_strided_slice %564 {offsets = [0, 384], sizes = [8, 128], strides = [1, 1]} : vector<8x512xf32> to vector<8x128xf32>
    %cst_237 = arith.constant 5.000000e-01 : f32
    %589 = vector.broadcast %cst_237 : f32 to vector<8x128xf32>
    %590 = arith.mulf %589, %588 : vector<8x128xf32>
    %591 = math.tanh %590 : vector<8x128xf32>
    %cst_238 = arith.constant 5.000000e-01 : f32
    %592 = vector.broadcast %cst_238 : f32 to vector<8x128xf32>
    %593 = arith.mulf %592, %591 : vector<8x128xf32>
    %cst_239 = arith.constant 5.000000e-01 : f32
    %594 = vector.broadcast %cst_239 : f32 to vector<8x128xf32>
    %595 = arith.addf %593, %594 : vector<8x128xf32>
    %596 = arith.mulf %585, %521 : vector<8x128xf32>
    %597 = arith.mulf %577, %587 : vector<8x128xf32>
    %598 = arith.addf %596, %597 : vector<8x128xf32>
    %599 = math.tanh %598 : vector<8x128xf32>
    %600 = arith.mulf %595, %599 : vector<8x128xf32>
    %601 = vector.extract_strided_slice %569 {offsets = [0, 0], sizes = [8, 128], strides = [1, 1]} : vector<8x512xf32> to vector<8x128xf32>
    %cst_240 = arith.constant 5.000000e-01 : f32
    %602 = vector.broadcast %cst_240 : f32 to vector<8x128xf32>
    %603 = arith.mulf %602, %601 : vector<8x128xf32>
    %604 = math.tanh %603 : vector<8x128xf32>
    %cst_241 = arith.constant 5.000000e-01 : f32
    %605 = vector.broadcast %cst_241 : f32 to vector<8x128xf32>
    %606 = arith.mulf %605, %604 : vector<8x128xf32>
    %cst_242 = arith.constant 5.000000e-01 : f32
    %607 = vector.broadcast %cst_242 : f32 to vector<8x128xf32>
    %608 = arith.addf %606, %607 : vector<8x128xf32>
    %609 = vector.extract_strided_slice %569 {offsets = [0, 128], sizes = [8, 128], strides = [1, 1]} : vector<8x512xf32> to vector<8x128xf32>
    %cst_243 = arith.constant 5.000000e-01 : f32
    %610 = vector.broadcast %cst_243 : f32 to vector<8x128xf32>
    %611 = arith.mulf %610, %609 : vector<8x128xf32>
    %612 = math.tanh %611 : vector<8x128xf32>
    %cst_244 = arith.constant 5.000000e-01 : f32
    %613 = vector.broadcast %cst_244 : f32 to vector<8x128xf32>
    %614 = arith.mulf %613, %612 : vector<8x128xf32>
    %cst_245 = arith.constant 5.000000e-01 : f32
    %615 = vector.broadcast %cst_245 : f32 to vector<8x128xf32>
    %616 = arith.addf %614, %615 : vector<8x128xf32>
    %617 = vector.extract_strided_slice %569 {offsets = [0, 256], sizes = [8, 128], strides = [1, 1]} : vector<8x512xf32> to vector<8x128xf32>
    %618 = math.tanh %617 : vector<8x128xf32>
    %619 = vector.extract_strided_slice %569 {offsets = [0, 384], sizes = [8, 128], strides = [1, 1]} : vector<8x512xf32> to vector<8x128xf32>
    %cst_246 = arith.constant 5.000000e-01 : f32
    %620 = vector.broadcast %cst_246 : f32 to vector<8x128xf32>
    %621 = arith.mulf %620, %619 : vector<8x128xf32>
    %622 = math.tanh %621 : vector<8x128xf32>
    %cst_247 = arith.constant 5.000000e-01 : f32
    %623 = vector.broadcast %cst_247 : f32 to vector<8x128xf32>
    %624 = arith.mulf %623, %622 : vector<8x128xf32>
    %cst_248 = arith.constant 5.000000e-01 : f32
    %625 = vector.broadcast %cst_248 : f32 to vector<8x128xf32>
    %626 = arith.addf %624, %625 : vector<8x128xf32>
    %627 = arith.mulf %616, %552 : vector<8x128xf32>
    %628 = arith.mulf %608, %618 : vector<8x128xf32>
    %629 = arith.addf %627, %628 : vector<8x128xf32>
    %630 = math.tanh %629 : vector<8x128xf32>
    %631 = arith.mulf %626, %630 : vector<8x128xf32>
    %c8_i32 = arith.constant 8 : i32
    %632 = tpu.concatenate %600, %631 in 1 : vector<8x128xf32>, vector<8x128xf32> -> vector<8x256xf32>
    %633 = arith.truncf %632 : vector<8x256xf32> to vector<8x256xbf16>
    %c0_249 = arith.constant 0 : index
    %c0_250 = arith.constant 0 : index
    %634 = vector.load %arg7[%c0_249, %c0_250] : memref<256x128xbf16, #tpu.memory_space<vmem>>, vector<256x128xbf16>
    %cst_251 = arith.constant dense<0.000000e+00> : vector<8x128xf32>
    %635 = tpu.matmul %633, %634, %cst_251 {dimension_numbers = #tpu.dot_dimension_numbers<[1], [0], [0], [1], [0, 0, 1, 1], [], []>} : vector<8x256xbf16>, vector<256x128xbf16>, vector<8x128xf32> -> vector<8x128xf32>
    %c0_252 = arith.constant 0 : index
    %c0_253 = arith.constant 0 : index
    %636 = vector.load %arg8[%c0_252, %c0_253] : memref<1x128xf32, #tpu.memory_space<vmem>>, vector<1x128xf32>
    %637 = vector.broadcast %636 : vector<1x128xf32> to vector<8x128xf32>
    %638 = arith.addf %635, %637 : vector<8x128xf32>
    %cst_254 = arith.constant dense<0xFF800000> : vector<8xf32>
    %639 = vector.multi_reduction <maximumf>, %638, %cst_254 [1] : vector<8x128xf32> to vector<8xf32>
    %cst_255 = arith.constant 0xFF800000 : f32
    %640 = vector.broadcast %cst_255 : f32 to vector<8xf32>
    %641 = arith.maximumf %640, %639 : vector<8xf32>
    %642 = vector.shape_cast %641 : vector<8xf32> to vector<8x1xf32>
    %643 = vector.broadcast %642 : vector<8x1xf32> to vector<8x128xf32>
    %644 = arith.subf %638, %643 : vector<8x128xf32>
    %645 = math.exp %644 : vector<8x128xf32>
    %cst_256 = arith.constant dense<0.000000e+00> : vector<8xf32>
    %646 = vector.multi_reduction <add>, %645, %cst_256 [1] : vector<8x128xf32> to vector<8xf32>
    %647 = vector.shape_cast %646 : vector<8xf32> to vector<8x1xf32>
    %648 = vector.broadcast %647 : vector<8x1xf32> to vector<8x128xf32>
    %649 = arith.divf %645, %648 : vector<8x128xf32>
    %c0_257 = arith.constant 0 : index
    %c0_258 = arith.constant 0 : index
    %650 = vector.load %arg9[%c0_257, %c0_258] : memref<8x128xf32, #tpu.memory_space<vmem>>, vector<8x128xf32>
    tpu.vector_store %arg9[%c0_257, %c0_258], %649 {strides = array<i32>} : memref<8x128xf32, #tpu.memory_space<vmem>>, vector<8x128xf32>,
    return
  }
}

</mosaic_0001>

<llo_original>
// kernel: textrnn_forward.1
$region0: #{textrnn_forward.1}
  #allocation0 [shape = 'u32[]', space=smem, size = 0x4, offset = 0x4, fixed_abs, tag = 'smem constant byte address 0x4 - core index']
  #allocation1 [shape = 'u32[144,128]{1,0:T(1,128)}', space=vmem, size = 0x12000, scoped, tag = 'internal scratch']
  #allocation2 [shape = 'f32[8,8,512]{2,1,0:T(8,128)}', space=vmem, size = 0x20000, scoped, tag = 'scratch operand']
  #allocation3 [shape = 'f32[8,8,512]{2,1,0:T(8,128)}', space=vmem, size = 0x20000, scoped, tag = 'scratch operand']
  %s0 = inlined_call_operand.vmem [shape: bf16[64,64], index: 0, kind: input, shape index: {}]
  %s1 = inlined_call_operand.vmem [shape: bf16[64,512], index: 1, kind: input, shape index: {}]
  %s2 = inlined_call_operand.vmem [shape: bf16[64,512], index: 2, kind: input, shape index: {}]
  %s3 = inlined_call_operand.vmem [shape: f32[1,512], index: 3, kind: input, shape index: {}]
  %s4 = inlined_call_operand.vmem [shape: f32[1,512], index: 4, kind: input, shape index: {}]
  %s5 = inlined_call_operand.vmem [shape: bf16[128,512], index: 5, kind: input, shape index: {}]
  %s6 = inlined_call_operand.vmem [shape: bf16[128,512], index: 6, kind: input, shape index: {}]
  %s7 = inlined_call_operand.vmem [shape: bf16[256,128], index: 7, kind: input, shape index: {}]
  %s8 = inlined_call_operand.vmem [shape: f32[1,128], index: 8, kind: input, shape index: {}]
  %s9 = inlined_call_operand.vmem [shape: f32[8,128], index: 9, kind: output, shape index: {}]
  %s10 = sld [smem:[#allocation0]]
  $region46: #{textrnn_forward.1} parent=0
    _
  %s12 = ssub.s32 1, %s10
  %s13 = scalar_select 0, %s12, %s10
  // Predicated region
  $region2: #{textrnn_forward.1} parent=0 // pred_check
    _
  $region3: #{textrnn_forward.1} parent=0 // pred_check_branch
    %15 = sbr.rel (0) target = $region5
  $region4: #{textrnn_forward.1} parent=0 // pred_region
    _
  $region5: #{textrnn_forward.1} parent=0 // pred_fallthru
    _
  // Predicated region
  $region6: #{textrnn_forward.1} parent=0 // pred_check
    _
  $region7: #{textrnn_forward.1} parent=0 // pred_check_branch
    %17 = sbr.rel (0) target = $region9
  $region8: #{textrnn_forward.1} parent=0 // pred_region
    _
  $region9: #{textrnn_forward.1} parent=0 // pred_fallthru
    _
  // Predicated region
  $region10: #{textrnn_forward.1} parent=0 // pred_check
    _
  $region11: #{textrnn_forward.1} parent=0 // pred_check_branch
    %19 = sbr.rel (0) target = $region13
  $region12: #{textrnn_forward.1} parent=0 // pred_region
    _
  $region13: #{textrnn_forward.1} parent=0 // pred_fallthru
    _
  // Predicated region
  $region14: #{textrnn_forward.1} parent=0 // pred_check
    _
  $region15: #{textrnn_forward.1} parent=0 // pred_check_branch
    %21 = sbr.rel (0) target = $region17
  $region16: #{textrnn_forward.1} parent=0 // pred_region
    _
  $region17: #{textrnn_forward.1} parent=0 // pred_fallthru
    _
  // Predicated region
  $region18: #{textrnn_forward.1} parent=0 // pred_check
    _
  $region19: #{textrnn_forward.1} parent=0 // pred_check_branch
    %23 = sbr.rel (0) target = $region21
  $region20: #{textrnn_forward.1} parent=0 // pred_region
    _
  $region21: #{textrnn_forward.1} parent=0 // pred_fallthru
    _
  // Predicated region
  $region22: #{textrnn_forward.1} parent=0 // pred_check
    _
  $region23: #{textrnn_forward.1} parent=0 // pred_check_branch
    %25 = sbr.rel (0) target = $region25
  $region24: #{textrnn_forward.1} parent=0 // pred_region
    _
  $region25: #{textrnn_forward.1} parent=0 // pred_fallthru
    _
  // Predicated region
  $region26: #{textrnn_forward.1} parent=0 // pred_check
    _
  $region27: #{textrnn_forward.1} parent=0 // pred_check_branch
    %27 = sbr.rel (0) target = $region29
  $region28: #{textrnn_forward.1} parent=0 // pred_region
    _
  $region29: #{textrnn_forward.1} parent=0 // pred_fallthru
    _
  // Predicated region
  $region30: #{textrnn_forward.1} parent=0 // pred_check
    _
  $region31: #{textrnn_forward.1} parent=0 // pred_check_branch
    %29 = sbr.rel (0) target = $region33
  $region32: #{textrnn_forward.1} parent=0 // pred_region
    _
  $region33: #{textrnn_forward.1} parent=0 // pred_fallthru
    _
  // Predicated region
  $region34: #{textrnn_forward.1} parent=0 // pred_check
    _
  $region35: #{textrnn_forward.1} parent=0 // pred_check_branch
    %31 = sbr.rel (0) target = $region37
  $region36: #{textrnn_forward.1} parent=0 // pred_region
    _
  $region37: #{textrnn_forward.1} parent=0 // pred_fallthru
    _
  %v33 = vld [vmem:[%s0] sm:$0xf]
  %v34 = vld [vmem:[%s0 + $0x4] sm:$0xf]
  %v35 = vld [vmem:[%s0 + $0x8] sm:$0xf]
  %v36 = vld [vmem:[%s0 + $0xc] sm:$0xf]
  %v37 = vld [vmem:[%s0 + $0x10] sm:$0xf]
  %v38 = vld [vmem:[%s0 + $0x14] sm:$0xf]
  %v39 = vld [vmem:[%s0 + $0x18] sm:$0xf]
  %v40 = vld [vmem:[%s0 + $0x1c] sm:$0xf]
  %v41 = vld [vmem:[%s1] sm:$0xff]
  %v42 = vld [vmem:[%s1 + $0x8] sm:$0xff]
  %v43 = vld [vmem:[%s1 + $0x10] sm:$0xff]
  %v44 = vld [vmem:[%s1 + $0x18] sm:$0xff]
  %v45 = vld [vmem:[%s1 + $0x20] sm:$0xff]
  %v46 = vld [vmem:[%s1 + $0x28] sm:$0xff]
  %v47 = vld [vmem:[%s1 + $0x30] sm:$0xff]
  %v48 = vld [vmem:[%s1 + $0x38] sm:$0xff]
  %v49 = vld [vmem:[%s1 + $0x40] sm:$0xff]
  %v50 = vld [vmem:[%s1 + $0x48] sm:$0xff]
  %v51 = vld [vmem:[%s1 + $0x50] sm:$0xff]
  %v52 = vld [vmem:[%s1 + $0x58] sm:$0xff]
  %v53 = vld [vmem:[%s1 + $0x60] sm:$0xff]
  %v54 = vld [vmem:[%s1 + $0x68] sm:$0xff]
  %v55 = vld [vmem:[%s1 + $0x70] sm:$0xff]
  %v56 = vld [vmem:[%s1 + $0x78] sm:$0xff]
  %v57 = vld [vmem:[%s3] sm:$0xf]
  %v59 = vlaneseq
  %v60 = vshrl.u32 %v59, 7
  %v61 = vsub.s32 0, %v60
  %v62 = vrot.slane %v57, %v61
  %v63 = vlaneseq
  %v64 = vshrl.u32 %v63, 7
  %v65 = vsub.s32 1, %v64
  %v66 = vrot.slane %v57, %v65
  %v67 = vlaneseq
  %v68 = vshrl.u32 %v67, 7
  %v69 = vsub.s32 2, %v68
  %v70 = vrot.slane %v57, %v69
  %v71 = vlaneseq
  %v72 = vshrl.u32 %v71, 7
  %v73 = vsub.s32 3, %v72
  %v74 = vrot.slane %v57, %v73
  %v87 = vunpack.c.l.b16 %v33
  %v88 = vunpack.c.l.b16 %v34
  %v89 = vunpack.c.l.b16 %v35
  %v90 = vunpack.c.l.b16 %v36
  %v91 = vunpack.c.l.b16 %v37
  %v92 = vunpack.c.l.b16 %v38
  %v93 = vunpack.c.l.b16 %v39
  %v94 = vunpack.c.l.b16 %v40
  %v95 = vpack.c.b16 %v88, %v87
  %v96 = vpack.c.b16 %v90, %v89
  %v97 = vpack.c.b16 %v92, %v91
  %v98 = vpack.c.b16 %v94, %v93
  %v115 = vunpack.c.l.b16 %v41
  %v116 = vunpack.c.h.b16 %v41
  %v117 = vunpack.c.l.b16 %v42
  %v118 = vunpack.c.h.b16 %v42
  %v119 = vunpack.c.l.b16 %v43
  %v120 = vunpack.c.h.b16 %v43
  %v121 = vunpack.c.l.b16 %v44
  %v122 = vunpack.c.h.b16 %v44
  %v123 = vunpack.c.l.b16 %v45
  %v124 = vunpack.c.h.b16 %v45
  %v125 = vunpack.c.l.b16 %v46
  %v126 = vunpack.c.h.b16 %v46
  %v127 = vunpack.c.l.b16 %v47
  %v128 = vunpack.c.h.b16 %v47
  %v129 = vunpack.c.l.b16 %v48
  %v130 = vunpack.c.h.b16 %v48
  %v131 = vunpack.c.l.b16 %v49
  %v132 = vunpack.c.h.b16 %v49
  %v133 = vunpack.c.l.b16 %v50
  %v134 = vunpack.c.h.b16 %v50
  %v135 = vunpack.c.l.b16 %v51
  %v136 = vunpack.c.h.b16 %v51
  %v137 = vunpack.c.l.b16 %v52
  %v138 = vunpack.c.h.b16 %v52
  %v139 = vunpack.c.l.b16 %v53
  %v140 = vunpack.c.h.b16 %v53
  %v141 = vunpack.c.l.b16 %v54
  %v142 = vunpack.c.h.b16 %v54
  %v143 = vunpack.c.l.b16 %v55
  %v144 = vunpack.c.h.b16 %v55
  %v145 = vunpack.c.l.b16 %v56
  %v146 = vunpack.c.h.b16 %v56
  %v147 = vpack.c.b16 %v119, %v115
  %v148 = vpack.c.b16 %v120, %v116
  %v149 = vpack.c.b16 %v121, %v117
  %v150 = vpack.c.b16 %v122, %v118
  %v151 = vpack.c.b16 %v127, %v123
  %v152 = vpack.c.b16 %v128, %v124
  %v153 = vpack.c.b16 %v129, %v125
  %v154 = vpack.c.b16 %v130, %v126
  %v155 = vpack.c.b16 %v135, %v131
  %v156 = vpack.c.b16 %v136, %v132
  %v157 = vpack.c.b16 %v137, %v133
  %v158 = vpack.c.b16 %v138, %v134
  %v159 = vpack.c.b16 %v143, %v139
  %v160 = vpack.c.b16 %v144, %v140
  %v161 = vpack.c.b16 %v145, %v141
  %v162 = vpack.c.b16 %v146, %v142
  %vm179 = vcmask 523264
  %v181 = vsel %vm179, %v95, 0
  %v184 = vsel %vm179, %v96, 0
  %v187 = vsel %vm179, %v97, 0
  %v190 = vsel %vm179, %v98, 0
  %192 = vmatprep.subr.bf16.mxu0 0
  %193 = vmatpush1.bf16.msra.mxu0 0
  %194 = vmatprep.subr.bf16.mxu0 0
  %195 = vmatpush1.bf16.msra.mxu0 0
  %196 = vmatprep.subr.bf16.mxu0 0
  %197 = vmatpush1.bf16.msra.mxu0 0
  %198 = vmatprep.subr.bf16.mxu0 0
  %199 = vmatpush1.bf16.msra.mxu0 0
  %200 = vmatprep.subr.bf16.mxu0 %v160
  %201 = vmatpush1.bf16.msra.mxu0 %v159
  %202 = vmatprep.subr.bf16.mxu0 %v156
  %203 = vmatpush1.bf16.msra.mxu0 %v155
  %204 = vmatprep.subr.bf16.mxu0 %v152
  %205 = vmatpush1.bf16.msra.mxu0 %v151
  %206 = vmatprep.subr.bf16.mxu0 %v148
  %207 = vmatpush1.bf16.msra.mxu0 %v147
  %208 = vmatprep.subr.bf16.mxu0 0
  %209 = vmatpush2.bf16.msra.mxu0 0
  %210 = vmatprep.subr.bf16.mxu0 0
  %211 = vmatpush2.bf16.msra.mxu0 0
  %212 = vmatprep.subr.bf16.mxu0 0
  %213 = vmatpush2.bf16.msra.mxu0 0
  %214 = vmatprep.subr.bf16.mxu0 0
  %215 = vmatpush2.bf16.msra.mxu0 0
  %216 = vmatprep.subr.bf16.mxu0 0
  %217 = vmatpush2.bf16.msra.mxu0 0
  %218 = vmatprep.subr.bf16.mxu0 0
  %219 = vmatpush2.bf16.msra.mxu0 0
  %220 = vmatprep.subr.bf16.mxu0 0
  %221 = vmatpush2.bf16.msra.mxu0 0
  %222 = vmatprep.subr.bf16.mxu0 0
  %223 = vmatpush2.bf16.msra.mxu0 0
  %224 = vmatprep.mubr.bf16.mxu0 0
  %225 = vmatmul.mubr.bf16.gmra.mxu0 %v181
  %v226 = vpop.f32.mrf.mxu0
  %v227 = vadd.f32 %v62, %v226
  %v228 = vpop.f32.mrf.mxu0
  %v229 = vadd.f32 %v66, %v228
  %v230 = vpop.f32.mrf.mxu0
  %v231 = vadd.f32 %v62, %v230
  %v232 = vpop.f32.mrf.mxu0
  %v233 = vadd.f32 %v66, %v232
  %234 = vmatprep.mubr.bf16.mxu0 0
  %235 = vmatmul.mubr.bf16.gmra.mxu0 %v184
  %v236 = vpop.f32.mrf.mxu0
  %v237 = vadd.f32 %v62, %v236
  %v238 = vpop.f32.mrf.mxu0
  %v239 = vadd.f32 %v66, %v238
  %v240 = vpop.f32.mrf.mxu0
  %v241 = vadd.f32 %v62, %v240
  %v242 = vpop.f32.mrf.mxu0
  %v243 = vadd.f32 %v66, %v242
  %244 = vmatprep.mubr.bf16.mxu0 0
  %245 = vmatmul.mubr.bf16.gmra.mxu0 %v187
  %v246 = vpop.f32.mrf.mxu0
  %v247 = vadd.f32 %v62, %v246
  %v248 = vpop.f32.mrf.mxu0
  %v249 = vadd.f32 %v66, %v248
  %v250 = vpop.f32.mrf.mxu0
  %v251 = vadd.f32 %v62, %v250
  %v252 = vpop.f32.mrf.mxu0
  %v253 = vadd.f32 %v66, %v252
  %254 = vmatprep.mubr.bf16.mxu0 0
  %255 = vmatmul.mubr.bf16.gmra.mxu0 %v190
  %v256 = vpop.f32.mrf.mxu0
  %v257 = vadd.f32 %v62, %v256
  %v258 = vpop.f32.mrf.mxu0
  %v259 = vadd.f32 %v66, %v258
  %v260 = vpop.f32.mrf.mxu0
  %v261 = vadd.f32 %v62, %v260
  %v262 = vpop.f32.mrf.mxu0
  %v263 = vadd.f32 %v66, %v262
  %264 = vdwg.mxu0
  %265 = vmatprep.subr.bf16.mxu0 0
  %266 = vmatpush1.bf16.msra.mxu0 0
  %267 = vmatprep.subr.bf16.mxu0 0
  %268 = vmatpush1.bf16.msra.mxu0 0
  %269 = vmatprep.subr.bf16.mxu0 0
  %270 = vmatpush1.bf16.msra.mxu0 0
  %271 = vmatprep.subr.bf16.mxu0 0
  %272 = vmatpush1.bf16.msra.mxu0 0
  %273 = vmatprep.subr.bf16.mxu0 %v162
  %274 = vmatpush1.bf16.msra.mxu0 %v161
  %275 = vmatprep.subr.bf16.mxu0 %v158
  %276 = vmatpush1.bf16.msra.mxu0 %v157
  %277 = vmatprep.subr.bf16.mxu0 %v154
  %278 = vmatpush1.bf16.msra.mxu0 %v153
  %279 = vmatprep.subr.bf16.mxu0 %v150
  %280 = vmatpush1.bf16.msra.mxu0 %v149
  %281 = vmatprep.subr.bf16.mxu0 0
  %282 = vmatpush2.bf16.msra.mxu0 0
  %283 = vmatprep.subr.bf16.mxu0 0
  %284 = vmatpush2.bf16.msra.mxu0 0
  %285 = vmatprep.subr.bf16.mxu0 0
  %286 = vmatpush2.bf16.msra.mxu0 0
  %287 = vmatprep.subr.bf16.mxu0 0
  %288 = vmatpush2.bf16.msra.mxu0 0
  %289 = vmatprep.subr.bf16.mxu0 0
  %290 = vmatpush2.bf16.msra.mxu0 0
  %291 = vmatprep.subr.bf16.mxu0 0
  %292 = vmatpush2.bf16.msra.mxu0 0
  %293 = vmatprep.subr.bf16.mxu0 0
  %294 = vmatpush2.bf16.msra.mxu0 0
  %295 = vmatprep.subr.bf16.mxu0 0
  %296 = vmatpush2.bf16.msra.mxu0 0
  %297 = vmatprep.mubr.bf16.mxu0 0
  %298 = vmatmul.mubr.bf16.gmra.mxu0 %v181
  %v299 = vpop.f32.mrf.mxu0
  %v300 = vadd.f32 %v70, %v299
  %v301 = vpop.f32.mrf.mxu0
  %v302 = vadd.f32 %v74, %v301
  %v303 = vpop.f32.mrf.mxu0
  %v304 = vadd.f32 %v70, %v303
  %v305 = vpop.f32.mrf.mxu0
  %v306 = vadd.f32 %v74, %v305
  %307 = vmatprep.mubr.bf16.mxu0 0
  %308 = vmatmul.mubr.bf16.gmra.mxu0 %v184
  %v309 = vpop.f32.mrf.mxu0
  %v310 = vadd.f32 %v70, %v309
  %v311 = vpop.f32.mrf.mxu0
  %v312 = vadd.f32 %v74, %v311
  %v313 = vpop.f32.mrf.mxu0
  %v314 = vadd.f32 %v70, %v313
  %v315 = vpop.f32.mrf.mxu0
  %v316 = vadd.f32 %v74, %v315
  %317 = vmatprep.mubr.bf16.mxu0 0
  %318 = vmatmul.mubr.bf16.gmra.mxu0 %v187
  %v319 = vpop.f32.mrf.mxu0
  %v320 = vadd.f32 %v70, %v319
  %v321 = vpop.f32.mrf.mxu0
  %v322 = vadd.f32 %v74, %v321
  %v323 = vpop.f32.mrf.mxu0
  %v324 = vadd.f32 %v70, %v323
  %v325 = vpop.f32.mrf.mxu0
  %v326 = vadd.f32 %v74, %v325
  %327 = vmatprep.mubr.bf16.mxu0 0
  %328 = vmatmul.mubr.bf16.gmra.mxu0 %v190
  %v329 = vpop.f32.mrf.mxu0
  %v330 = vadd.f32 %v70, %v329
  %v331 = vpop.f32.mrf.mxu0
  %v332 = vadd.f32 %v74, %v331
  %v333 = vpop.f32.mrf.mxu0
  %v334 = vadd.f32 %v70, %v333
  %v335 = vpop.f32.mrf.mxu0
  %v336 = vadd.f32 %v74, %v335
  %337 = vdwg.mxu0
  %338 = vst [vmem:[#allocation2] sm:$0xff] %v227
  %339 = vst [vmem:[#allocation2 + $0x8] sm:$0xff] %v229
  %340 = vst [vmem:[#allocation2 + $0x10] sm:$0xff] %v300
  %341 = vst [vmem:[#allocation2 + $0x18] sm:$0xff] %v302
  %342 = vst [vmem:[#allocation2 + $0x20] sm:$0xff] %v231
  %343 = vst [vmem:[#allocation2 + $0x28] sm:$0xff] %v233
  %344 = vst [vmem:[#allocation2 + $0x30] sm:$0xff] %v304
  %345 = vst [vmem:[#allocation2 + $0x38] sm:$0xff] %v306
  %346 = vst [vmem:[#allocation2 + $0x40] sm:$0xff] %v237
  %347 = vst [vmem:[#allocation2 + $0x48] sm:$0xff] %v239
  %348 = vst [vmem:[#allocation2 + $0x50] sm:$0xff] %v310
  %349 = vst [vmem:[#allocation2 + $0x58] sm:$0xff] %v312
  %350 = vst [vmem:[#allocation2 + $0x60] sm:$0xff] %v241
  %351 = vst [vmem:[#allocation2 + $0x68] sm:$0xff] %v243
  %352 = vst [vmem:[#allocation2 + $0x70] sm:$0xff] %v314
  %353 = vst [vmem:[#allocation2 + $0x78] sm:$0xff] %v316
  %354 = vst [vmem:[#allocation2 + $0x80] sm:$0xff] %v247
  %355 = vst [vmem:[#allocation2 + $0x88] sm:$0xff] %v249
  %356 = vst [vmem:[#allocation2 + $0x90] sm:$0xff] %v320
  %357 = vst [vmem:[#allocation2 + $0x98] sm:$0xff] %v322
  %358 = vst [vmem:[#allocation2 + $0xa0] sm:$0xff] %v251
  %359 = vst [vmem:[#allocation2 + $0xa8] sm:$0xff] %v253
  %360 = vst [vmem:[#allocation2 + $0xb0] sm:$0xff] %v324
  %361 = vst [vmem:[#allocation2 + $0xb8] sm:$0xff] %v326
  %362 = vst [vmem:[#allocation2 + $0xc0] sm:$0xff] %v257
  %363 = vst [vmem:[#allocation2 + $0xc8] sm:$0xff] %v259
  %364 = vst [vmem:[#allocation2 + $0xd0] sm:$0xff] %v330
  %365 = vst [vmem:[#allocation2 + $0xd8] sm:$0xff] %v332
  %366 = vst [vmem:[#allocation2 + $0xe0] sm:$0xff] %v261
  %367 = vst [vmem:[#allocation2 + $0xe8] sm:$0xff] %v263
  %368 = vst [vmem:[#allocation2 + $0xf0] sm:$0xff] %v334
  %369 = vst [vmem:[#allocation2 + $0xf8] sm:$0xff] %v336
  %v370 = vld [vmem:[%s2] sm:$0xff]
  %v371 = vld [vmem:[%s2 + $0x8] sm:$0xff]
  %v372 = vld [vmem:[%s2 + $0x10] sm:$0xff]
  %v373 = vld [vmem:[%s2 + $0x18] sm:$0xff]
  %v374 = vld [vmem:[%s2 + $0x20] sm:$0xff]
  %v375 = vld [vmem:[%s2 + $0x28] sm:$0xff]
  %v376 = vld [vmem:[%s2 + $0x30] sm:$0xff]
  %v377 = vld [vmem:[%s2 + $0x38] sm:$0xff]
  %v378 = vld [vmem:[%s2 + $0x40] sm:$0xff]
  %v379 = vld [vmem:[%s2 + $0x48] sm:$0xff]
  %v380 = vld [vmem:[%s2 + $0x50] sm:$0xff]
  %v381 = vld [vmem:[%s2 + $0x58] sm:$0xff]
  %v382 = vld [vmem:[%s2 + $0x60] sm:$0xff]
  %v383 = vld [vmem:[%s2 + $0x68] sm:$0xff]
  %v384 = vld [vmem:[%s2 + $0x70] sm:$0xff]
  %v385 = vld [vmem:[%s2 + $0x78] sm:$0xff]
  %v386 = vld [vmem:[%s4] sm:$0xf]
  %v388 = vlaneseq
  %v389 = vshrl.u32 %v388, 7
  %v390 = vsub.s32 0, %v389
  %v391 = vrot.slane %v386, %v390
  %v392 = vlaneseq
  %v393 = vshrl.u32 %v392, 7
  %v394 = vsub.s32 1, %v393
  %v395 = vrot.slane %v386, %v394
  %v396 = vlaneseq
  %v397 = vshrl.u32 %v396, 7
  %v398 = vsub.s32 2, %v397
  %v399 = vrot.slane %v386, %v398
  %v400 = vlaneseq
  %v401 = vshrl.u32 %v400, 7
  %v402 = vsub.s32 3, %v401
  %v403 = vrot.slane %v386, %v402
  %v424 = vunpack.c.l.b16 %v370
  %v425 = vunpack.c.h.b16 %v370
  %v426 = vunpack.c.l.b16 %v371
  %v427 = vunpack.c.h.b16 %v371
  %v428 = vunpack.c.l.b16 %v372
  %v429 = vunpack.c.h.b16 %v372
  %v430 = vunpack.c.l.b16 %v373
  %v431 = vunpack.c.h.b16 %v373
  %v432 = vunpack.c.l.b16 %v374
  %v433 = vunpack.c.h.b16 %v374
  %v434 = vunpack.c.l.b16 %v375
  %v435 = vunpack.c.h.b16 %v375
  %v436 = vunpack.c.l.b16 %v376
  %v437 = vunpack.c.h.b16 %v376
  %v438 = vunpack.c.l.b16 %v377
  %v439 = vunpack.c.h.b16 %v377
  %v440 = vunpack.c.l.b16 %v378
  %v441 = vunpack.c.h.b16 %v378
  %v442 = vunpack.c.l.b16 %v379
  %v443 = vunpack.c.h.b16 %v379
  %v444 = vunpack.c.l.b16 %v380
  %v445 = vunpack.c.h.b16 %v380
  %v446 = vunpack.c.l.b16 %v381
  %v447 = vunpack.c.h.b16 %v381
  %v448 = vunpack.c.l.b16 %v382
  %v449 = vunpack.c.h.b16 %v382
  %v450 = vunpack.c.l.b16 %v383
  %v451 = vunpack.c.h.b16 %v383
  %v452 = vunpack.c.l.b16 %v384
  %v453 = vunpack.c.h.b16 %v384
  %v454 = vunpack.c.l.b16 %v385
  %v455 = vunpack.c.h.b16 %v385
  %v456 = vpack.c.b16 %v428, %v424
  %v457 = vpack.c.b16 %v429, %v425
  %v458 = vpack.c.b16 %v430, %v426
  %v459 = vpack.c.b16 %v431, %v427
  %v460 = vpack.c.b16 %v436, %v432
  %v461 = vpack.c.b16 %v437, %v433
  %v462 = vpack.c.b16 %v438, %v434
  %v463 = vpack.c.b16 %v439, %v435
  %v464 = vpack.c.b16 %v444, %v440
  %v465 = vpack.c.b16 %v445, %v441
  %v466 = vpack.c.b16 %v446, %v442
  %v467 = vpack.c.b16 %v447, %v443
  %v468 = vpack.c.b16 %v452, %v448
  %v469 = vpack.c.b16 %v453, %v449
  %v470 = vpack.c.b16 %v454, %v450
  %v471 = vpack.c.b16 %v455, %v451
  %488 = vmatprep.subr.bf16.mxu0 0
  %489 = vmatpush1.bf16.msra.mxu0 0
  %490 = vmatprep.subr.bf16.mxu0 0
  %491 = vmatpush1.bf16.msra.mxu0 0
  %492 = vmatprep.subr.bf16.mxu0 0
  %493 = vmatpush1.bf16.msra.mxu0 0
  %494 = vmatprep.subr.bf16.mxu0 0
  %495 = vmatpush1.bf16.msra.mxu0 0
  %496 = vmatprep.subr.bf16.mxu0 %v469
  %497 = vmatpush1.bf16.msra.mxu0 %v468
  %498 = vmatprep.subr.bf16.mxu0 %v465
  %499 = vmatpush1.bf16.msra.mxu0 %v464
  %500 = vmatprep.subr.bf16.mxu0 %v461
  %501 = vmatpush1.bf16.msra.mxu0 %v460
  %502 = vmatprep.subr.bf16.mxu0 %v457
  %503 = vmatpush1.bf16.msra.mxu0 %v456
  %504 = vmatprep.subr.bf16.mxu0 0
  %505 = vmatpush2.bf16.msra.mxu0 0
  %506 = vmatprep.subr.bf16.mxu0 0
  %507 = vmatpush2.bf16.msra.mxu0 0
  %508 = vmatprep.subr.bf16.mxu0 0
  %509 = vmatpush2.bf16.msra.mxu0 0
  %510 = vmatprep.subr.bf16.mxu0 0
  %511 = vmatpush2.bf16.msra.mxu0 0
  %512 = vmatprep.subr.bf16.mxu0 0
  %513 = vmatpush2.bf16.msra.mxu0 0
  %514 = vmatprep.subr.bf16.mxu0 0
  %515 = vmatpush2.bf16.msra.mxu0 0
  %516 = vmatprep.subr.bf16.mxu0 0
  %517 = vmatpush2.bf16.msra.mxu0 0
  %518 = vmatprep.subr.bf16.mxu0 0
  %519 = vmatpush2.bf16.msra.mxu0 0
  %520 = vmatprep.mubr.bf16.mxu0 0
  %521 = vmatmul.mubr.bf16.gmra.mxu0 %v181
  %v522 = vpop.f32.mrf.mxu0
  %v523 = vadd.f32 %v391, %v522
  %v524 = vpop.f32.mrf.mxu0
  %v525 = vadd.f32 %v395, %v524
  %v526 = vpop.f32.mrf.mxu0
  %v527 = vadd.f32 %v391, %v526
  %v528 = vpop.f32.mrf.mxu0
  %v529 = vadd.f32 %v395, %v528
  %530 = vmatprep.mubr.bf16.mxu0 0
  %531 = vmatmul.mubr.bf16.gmra.mxu0 %v184
  %v532 = vpop.f32.mrf.mxu0
  %v533 = vadd.f32 %v391, %v532
  %v534 = vpop.f32.mrf.mxu0
  %v535 = vadd.f32 %v395, %v534
  %v536 = vpop.f32.mrf.mxu0
  %v537 = vadd.f32 %v391, %v536
  %v538 = vpop.f32.mrf.mxu0
  %v539 = vadd.f32 %v395, %v538
  %540 = vmatprep.mubr.bf16.mxu0 0
  %541 = vmatmul.mubr.bf16.gmra.mxu0 %v187
  %v542 = vpop.f32.mrf.mxu0
  %v543 = vadd.f32 %v391, %v542
  %v544 = vpop.f32.mrf.mxu0
  %v545 = vadd.f32 %v395, %v544
  %v546 = vpop.f32.mrf.mxu0
  %v547 = vadd.f32 %v391, %v546
  %v548 = vpop.f32.mrf.mxu0
  %v549 = vadd.f32 %v395, %v548
  %550 = vmatprep.mubr.bf16.mxu0 0
  %551 = vmatmul.mubr.bf16.gmra.mxu0 %v190
  %v552 = vpop.f32.mrf.mxu0
  %v553 = vadd.f32 %v391, %v552
  %v554 = vpop.f32.mrf.mxu0
  %v555 = vadd.f32 %v395, %v554
  %v556 = vpop.f32.mrf.mxu0
  %v557 = vadd.f32 %v391, %v556
  %v558 = vpop.f32.mrf.mxu0
  %v559 = vadd.f32 %v395, %v558
  %560 = vdwg.mxu0
  %561 = vmatprep.subr.bf16.mxu0 0
  %562 = vmatpush1.bf16.msra.mxu0 0
  %563 = vmatprep.subr.bf16.mxu0 0
  %564 = vmatpush1.bf16.msra.mxu0 0
  %565 = vmatprep.subr.bf16.mxu0 0
  %566 = vmatpush1.bf16.msra.mxu0 0
  %567 = vmatprep.subr.bf16.mxu0 0
  %568 = vmatpush1.bf16.msra.mxu0 0
  %569 = vmatprep.subr.bf16.mxu0 %v471
  %570 = vmatpush1.bf16.msra.mxu0 %v470
  %571 = vmatprep.subr.bf16.mxu0 %v467
  %572 = vmatpush1.bf16.msra.mxu0 %v466
  %573 = vmatprep.subr.bf16.mxu0 %v463
  %574 = vmatpush1.bf16.msra.mxu0 %v462
  %575 = vmatprep.subr.bf16.mxu0 %v459
  %576 = vmatpush1.bf16.msra.mxu0 %v458
  %577 = vmatprep.subr.bf16.mxu0 0
  %578 = vmatpush2.bf16.msra.mxu0 0
  %579 = vmatprep.subr.bf16.mxu0 0
  %580 = vmatpush2.bf16.msra.mxu0 0
  %581 = vmatprep.subr.bf16.mxu0 0
  %582 = vmatpush2.bf16.msra.mxu0 0
  %583 = vmatprep.subr.bf16.mxu0 0
  %584 = vmatpush2.bf16.msra.mxu0 0
  %585 = vmatprep.subr.bf16.mxu0 0
  %586 = vmatpush2.bf16.msra.mxu0 0
  %587 = vmatprep.subr.bf16.mxu0 0
  %588 = vmatpush2.bf16.msra.mxu0 0
  %589 = vmatprep.subr.bf16.mxu0 0
  %590 = vmatpush2.bf16.msra.mxu0 0
  %591 = vmatprep.subr.bf16.mxu0 0
  %592 = vmatpush2.bf16.msra.mxu0 0
  %593 = vmatprep.mubr.bf16.mxu0 0
  %594 = vmatmul.mubr.bf16.gmra.mxu0 %v181
  %v595 = vpop.f32.mrf.mxu0
  %v596 = vadd.f32 %v399, %v595
  %v597 = vpop.f32.mrf.mxu0
  %v598 = vadd.f32 %v403, %v597
  %v599 = vpop.f32.mrf.mxu0
  %v600 = vadd.f32 %v399, %v599
  %v601 = vpop.f32.mrf.mxu0
  %v602 = vadd.f32 %v403, %v601
  %603 = vmatprep.mubr.bf16.mxu0 0
  %604 = vmatmul.mubr.bf16.gmra.mxu0 %v184
  %v605 = vpop.f32.mrf.mxu0
  %v606 = vadd.f32 %v399, %v605
  %v607 = vpop.f32.mrf.mxu0
  %v608 = vadd.f32 %v403, %v607
  %v609 = vpop.f32.mrf.mxu0
  %v610 = vadd.f32 %v399, %v609
  %v611 = vpop.f32.mrf.mxu0
  %v612 = vadd.f32 %v403, %v611
  %613 = vmatprep.mubr.bf16.mxu0 0
  %614 = vmatmul.mubr.bf16.gmra.mxu0 %v187
  %v615 = vpop.f32.mrf.mxu0
  %v616 = vadd.f32 %v399, %v615
  %v617 = vpop.f32.mrf.mxu0
  %v618 = vadd.f32 %v403, %v617
  %v619 = vpop.f32.mrf.mxu0
  %v620 = vadd.f32 %v399, %v619
  %v621 = vpop.f32.mrf.mxu0
  %v622 = vadd.f32 %v403, %v621
  %623 = vmatprep.mubr.bf16.mxu0 0
  %624 = vmatmul.mubr.bf16.gmra.mxu0 %v190
  %v625 = vpop.f32.mrf.mxu0
  %v626 = vadd.f32 %v399, %v625
  %v627 = vpop.f32.mrf.mxu0
  %v628 = vadd.f32 %v403, %v627
  %v629 = vpop.f32.mrf.mxu0
  %v630 = vadd.f32 %v399, %v629
  %v631 = vpop.f32.mrf.mxu0
  %v632 = vadd.f32 %v403, %v631
  %633 = vdwg.mxu0
  %634 = vst [vmem:[#allocation3] sm:$0xff] %v523
  %635 = vst [vmem:[#allocation3 + $0x8] sm:$0xff] %v525
  %636 = vst [vmem:[#allocation3 + $0x10] sm:$0xff] %v596
  %637 = vst [vmem:[#allocation3 + $0x18] sm:$0xff] %v598
  %638 = vst [vmem:[#allocation3 + $0x20] sm:$0xff] %v527
  %639 = vst [vmem:[#allocation3 + $0x28] sm:$0xff] %v529
  %640 = vst [vmem:[#allocation3 + $0x30] sm:$0xff] %v600
  %641 = vst [vmem:[#allocation3 + $0x38] sm:$0xff] %v602
  %642 = vst [vmem:[#allocation3 + $0x40] sm:$0xff] %v533
  %643 = vst [vmem:[#allocation3 + $0x48] sm:$0xff] %v535
  %644 = vst [vmem:[#allocation3 + $0x50] sm:$0xff] %v606
  %645 = vst [vmem:[#allocation3 + $0x58] sm:$0xff] %v608
  %646 = vst [vmem:[#allocation3 + $0x60] sm:$0xff] %v537
  %647 = vst [vmem:[#allocation3 + $0x68] sm:$0xff] %v539
  %648 = vst [vmem:[#allocation3 + $0x70] sm:$0xff] %v610
  %649 = vst [vmem:[#allocation3 + $0x78] sm:$0xff] %v612
  %650 = vst [vmem:[#allocation3 + $0x80] sm:$0xff] %v543
  %651 = vst [vmem:[#allocation3 + $0x88] sm:$0xff] %v545
  %652 = vst [vmem:[#allocation3 + $0x90] sm:$0xff] %v616
  %653 = vst [vmem:[#allocation3 + $0x98] sm:$0xff] %v618
  %654 = vst [vmem:[#allocation3 + $0xa0] sm:$0xff] %v547
  %655 = vst [vmem:[#allocation3 + $0xa8] sm:$0xff] %v549
  %656 = vst [vmem:[#allocation3 + $0xb0] sm:$0xff] %v620
  %657 = vst [vmem:[#allocation3 + $0xb8] sm:$0xff] %v622
  %658 = vst [vmem:[#allocation3 + $0xc0] sm:$0xff] %v553
  %659 = vst [vmem:[#allocation3 + $0xc8] sm:$0xff] %v555
  %660 = vst [vmem:[#allocation3 + $0xd0] sm:$0xff] %v626
  %661 = vst [vmem:[#allocation3 + $0xd8] sm:$0xff] %v628
  %662 = vst [vmem:[#allocation3 + $0xe0] sm:$0xff] %v557
  %663 = vst [vmem:[#allocation3 + $0xe8] sm:$0xff] %v559
  %664 = vst [vmem:[#allocation3 + $0xf0] sm:$0xff] %v630
  %665 = vst [vmem:[#allocation3 + $0xf8] sm:$0xff] %v632
  %v666 = vld [vmem:[%s5] sm:$0xff]
  %v667 = vld [vmem:[%s5 + $0x8] sm:$0xff]
  %v668 = vld [vmem:[%s5 + $0x10] sm:$0xff]
  %v669 = vld [vmem:[%s5 + $0x18] sm:$0xff]
  %v670 = vld [vmem:[%s5 + $0x20] sm:$0xff]
  %v671 = vld [vmem:[%s5 + $0x28] sm:$0xff]
  %v672 = vld [vmem:[%s5 + $0x30] sm:$0xff]
  %v673 = vld [vmem:[%s5 + $0x38] sm:$0xff]
  %v674 = vld [vmem:[%s5 + $0x40] sm:$0xff]
  %v675 = vld [vmem:[%s5 + $0x48] sm:$0xff]
  %v676 = vld [vmem:[%s5 + $0x50] sm:$0xff]
  %v677 = vld [vmem:[%s5 + $0x58] sm:$0xff]
  %v678 = vld [vmem:[%s5 + $0x60] sm:$0xff]
  %v679 = vld [vmem:[%s5 + $0x68] sm:$0xff]
  %v680 = vld [vmem:[%s5 + $0x70] sm:$0xff]
  %v681 = vld [vmem:[%s5 + $0x78] sm:$0xff]
  %v682 = vld [vmem:[%s5 + $0x80] sm:$0xff]
  %v683 = vld [vmem:[%s5 + $0x88] sm:$0xff]
  %v684 = vld [vmem:[%s5 + $0x90] sm:$0xff]
  %v685 = vld [vmem:[%s5 + $0x98] sm:$0xff]
  %v686 = vld [vmem:[%s5 + $0xa0] sm:$0xff]
  %v687 = vld [vmem:[%s5 + $0xa8] sm:$0xff]
  %v688 = vld [vmem:[%s5 + $0xb0] sm:$0xff]
  %v689 = vld [vmem:[%s5 + $0xb8] sm:$0xff]
  %v690 = vld [vmem:[%s5 + $0xc0] sm:$0xff]
  %v691 = vld [vmem:[%s5 + $0xc8] sm:$0xff]
  %v692 = vld [vmem:[%s5 + $0xd0] sm:$0xff]
  %v693 = vld [vmem:[%s5 + $0xd8] sm:$0xff]
  %v694 = vld [vmem:[%s5 + $0xe0] sm:$0xff]
  %v695 = vld [vmem:[%s5 + $0xe8] sm:$0xff]
  %v696 = vld [vmem:[%s5 + $0xf0] sm:$0xff]
  %v697 = vld [vmem:[%s5 + $0xf8] sm:$0xff]
  %v730 = vunpack.c.l.b16 %v666
  %v731 = vunpack.c.h.b16 %v666
  %v732 = vunpack.c.l.b16 %v667
  %v733 = vunpack.c.h.b16 %v667
  %v734 = vunpack.c.l.b16 %v668
  %v735 = vunpack.c.h.b16 %v668
  %v736 = vunpack.c.l.b16 %v669
  %v737 = vunpack.c.h.b16 %v669
  %v738 = vunpack.c.l.b16 %v670
  %v739 = vunpack.c.h.b16 %v670
  %v740 = vunpack.c.l.b16 %v671
  %v741 = vunpack.c.h.b16 %v671
  %v742 = vunpack.c.l.b16 %v672
  %v743 = vunpack.c.h.b16 %v672
  %v744 = vunpack.c.l.b16 %v673
  %v745 = vunpack.c.h.b16 %v673
  %v746 = vunpack.c.l.b16 %v674
  %v747 = vunpack.c.h.b16 %v674
  %v748 = vunpack.c.l.b16 %v675
  %v749 = vunpack.c.h.b16 %v675
  %v750 = vunpack.c.l.b16 %v676
  %v751 = vunpack.c.h.b16 %v676
  %v752 = vunpack.c.l.b16 %v677
  %v753 = vunpack.c.h.b16 %v677
  %v754 = vunpack.c.l.b16 %v678
  %v755 = vunpack.c.h.b16 %v678
  %v756 = vunpack.c.l.b16 %v679
  %v757 = vunpack.c.h.b16 %v679
  %v758 = vunpack.c.l.b16 %v680
  %v759 = vunpack.c.h.b16 %v680
  %v760 = vunpack.c.l.b16 %v681
  %v761 = vunpack.c.h.b16 %v681
  %v762 = vunpack.c.l.b16 %v682
  %v763 = vunpack.c.h.b16 %v682
  %v764 = vunpack.c.l.b16 %v683
  %v765 = vunpack.c.h.b16 %v683
  %v766 = vunpack.c.l.b16 %v684
  %v767 = vunpack.c.h.b16 %v684
  %v768 = vunpack.c.l.b16 %v685
  %v769 = vunpack.c.h.b16 %v685
  %v770 = vunpack.c.l.b16 %v686
  %v771 = vunpack.c.h.b16 %v686
  %v772 = vunpack.c.l.b16 %v687
  %v773 = vunpack.c.h.b16 %v687
  %v774 = vunpack.c.l.b16 %v688
  %v775 = vunpack.c.h.b16 %v688
  %v776 = vunpack.c.l.b16 %v689
  %v777 = vunpack.c.h.b16 %v689
  %v778 = vunpack.c.l.b16 %v690
  %v779 = vunpack.c.h.b16 %v690
  %v780 = vunpack.c.l.b16 %v691
  %v781 = vunpack.c.h.b16 %v691
  %v782 = vunpack.c.l.b16 %v692
  %v783 = vunpack.c.h.b16 %v692
  %v784 = vunpack.c.l.b16 %v693
  %v785 = vunpack.c.h.b16 %v693
  %v786 = vunpack.c.l.b16 %v694
  %v787 = vunpack.c.h.b16 %v694
  %v788 = vunpack.c.l.b16 %v695
  %v789 = vunpack.c.h.b16 %v695
  %v790 = vunpack.c.l.b16 %v696
  %v791 = vunpack.c.h.b16 %v696
  %v792 = vunpack.c.l.b16 %v697
  %v793 = vunpack.c.h.b16 %v697
  %v794 = vpack.c.b16 %v734, %v730
  %v795 = vpack.c.b16 %v735, %v731
  %v796 = vpack.c.b16 %v736, %v732
  %v797 = vpack.c.b16 %v737, %v733
  %v798 = vpack.c.b16 %v742, %v738
  %v799 = vpack.c.b16 %v743, %v739
  %v800 = vpack.c.b16 %v744, %v740
  %v801 = vpack.c.b16 %v745, %v741
  %v802 = vpack.c.b16 %v750, %v746
  %v803 = vpack.c.b16 %v751, %v747
  %v804 = vpack.c.b16 %v752, %v748
  %v805 = vpack.c.b16 %v753, %v749
  %v806 = vpack.c.b16 %v758, %v754
  %v807 = vpack.c.b16 %v759, %v755
  %v808 = vpack.c.b16 %v760, %v756
  %v809 = vpack.c.b16 %v761, %v757
  %v810 = vpack.c.b16 %v766, %v762
  %v811 = vpack.c.b16 %v767, %v763
  %v812 = vpack.c.b16 %v768, %v764
  %v813 = vpack.c.b16 %v769, %v765
  %v814 = vpack.c.b16 %v774, %v770
  %v815 = vpack.c.b16 %v775, %v771
  %v816 = vpack.c.b16 %v776, %v772
  %v817 = vpack.c.b16 %v777, %v773
  %v818 = vpack.c.b16 %v782, %v778
  %v819 = vpack.c.b16 %v783, %v779
  %v820 = vpack.c.b16 %v784, %v780
  %v821 = vpack.c.b16 %v785, %v781
  %v822 = vpack.c.b16 %v790, %v786
  %v823 = vpack.c.b16 %v791, %v787
  %v824 = vpack.c.b16 %v792, %v788
  %v825 = vpack.c.b16 %v793, %v789
  %858 = vmatprep.subr.bf16.mxu0 %v823
  %859 = vmatpush1.bf16.msra.mxu0 %v822
  %860 = vmatprep.subr.bf16.mxu0 %v819
  %861 = vmatpush1.bf16.msra.mxu0 %v818
  %862 = vmatprep.subr.bf16.mxu0 %v815
  %863 = vmatpush1.bf16.msra.mxu0 %v814
  %864 = vmatprep.subr.bf16.mxu0 %v811
  %865 = vmatpush1.bf16.msra.mxu0 %v810
  %866 = vmatprep.subr.bf16.mxu0 %v807
  %867 = vmatpush1.bf16.msra.mxu0 %v806
  %868 = vmatprep.subr.bf16.mxu0 %v803
  %869 = vmatpush1.bf16.msra.mxu0 %v802
  %870 = vmatprep.subr.bf16.mxu0 %v799
  %871 = vmatpush1.bf16.msra.mxu0 %v798
  %872 = vmatprep.subr.bf16.mxu0 %v795
  %873 = vmatpush1.bf16.msra.mxu0 %v794
  %874 = vmatprep.subr.bf16.mxu0 0
  %875 = vmatpush2.bf16.msra.mxu0 0
  %876 = vmatprep.subr.bf16.mxu0 0
  %877 = vmatpush2.bf16.msra.mxu0 0
  %878 = vmatprep.subr.bf16.mxu0 0
  %879 = vmatpush2.bf16.msra.mxu0 0
  %880 = vmatprep.subr.bf16.mxu0 0
  %881 = vmatpush2.bf16.msra.mxu0 0
  %882 = vmatprep.subr.bf16.mxu0 0
  %883 = vmatpush2.bf16.msra.mxu0 0
  %884 = vmatprep.subr.bf16.mxu0 0
  %885 = vmatpush2.bf16.msra.mxu0 0
  %886 = vmatprep.subr.bf16.mxu0 0
  %887 = vmatpush2.bf16.msra.mxu0 0
  %888 = vmatprep.subr.bf16.mxu0 0
  %889 = vmatpush2.bf16.msra.mxu0 0
  %890 = vmatprep.mubr.bf16.mxu0 0
  %891 = vmatmul.mubr.bf16.gmra.mxu0 0
  %v892 = vpop.f32.mrf.mxu0
  %v893 = vadd.f32 0.0, %v892
  %v894 = vpop.f32.mrf.mxu0
  %v895 = vadd.f32 0.0, %v894
  %v896 = vpop.f32.mrf.mxu0
  %v897 = vpop.f32.mrf.mxu0
  %898 = vdwg.mxu0
  %899 = vmatprep.subr.bf16.mxu0 %v825
  %900 = vmatpush1.bf16.msra.mxu0 %v824
  %901 = vmatprep.subr.bf16.mxu0 %v821
  %902 = vmatpush1.bf16.msra.mxu0 %v820
  %903 = vmatprep.subr.bf16.mxu0 %v817
  %904 = vmatpush1.bf16.msra.mxu0 %v816
  %905 = vmatprep.subr.bf16.mxu0 %v813
  %906 = vmatpush1.bf16.msra.mxu0 %v812
  %907 = vmatprep.subr.bf16.mxu0 %v809
  %908 = vmatpush1.bf16.msra.mxu0 %v808
  %909 = vmatprep.subr.bf16.mxu0 %v805
  %910 = vmatpush1.bf16.msra.mxu0 %v804
  %911 = vmatprep.subr.bf16.mxu0 %v801
  %912 = vmatpush1.bf16.msra.mxu0 %v800
  %913 = vmatprep.subr.bf16.mxu0 %v797
  %914 = vmatpush1.bf16.msra.mxu0 %v796
  %915 = vmatprep.subr.bf16.mxu0 0
  %916 = vmatpush2.bf16.msra.mxu0 0
  %917 = vmatprep.subr.bf16.mxu0 0
  %918 = vmatpush2.bf16.msra.mxu0 0
  %919 = vmatprep.subr.bf16.mxu0 0
  %920 = vmatpush2.bf16.msra.mxu0 0
  %921 = vmatprep.subr.bf16.mxu0 0
  %922 = vmatpush2.bf16.msra.mxu0 0
  %923 = vmatprep.subr.bf16.mxu0 0
  %924 = vmatpush2.bf16.msra.mxu0 0
  %925 = vmatprep.subr.bf16.mxu0 0
  %926 = vmatpush2.bf16.msra.mxu0 0
  %927 = vmatprep.subr.bf16.mxu0 0
  %928 = vmatpush2.bf16.msra.mxu0 0
  %929 = vmatprep.subr.bf16.mxu0 0
  %930 = vmatpush2.bf16.msra.mxu0 0
  %931 = vmatprep.mubr.bf16.mxu0 0
  %932 = vmatmul.mubr.bf16.gmra.mxu0 0
  %v933 = vpop.f32.mrf.mxu0
  %v934 = vadd.f32 0.0, %v933
  %v935 = vpop.f32.mrf.mxu0
  %v936 = vadd.f32 0.0, %v935
  %v937 = vpop.f32.mrf.mxu0
  %v938 = vpop.f32.mrf.mxu0
  %939 = vdwg.mxu0
  %v940 = vld [vmem:[%s6] sm:$0xff]
  %v941 = vld [vmem:[%s6 + $0x8] sm:$0xff]
  %v942 = vld [vmem:[%s6 + $0x10] sm:$0xff]
  %v943 = vld [vmem:[%s6 + $0x18] sm:$0xff]
  %v944 = vld [vmem:[%s6 + $0x20] sm:$0xff]
  %v945 = vld [vmem:[%s6 + $0x28] sm:$0xff]
  %v946 = vld [vmem:[%s6 + $0x30] sm:$0xff]
  %v947 = vld [vmem:[%s6 + $0x38] sm:$0xff]
  %v948 = vld [vmem:[%s6 + $0x40] sm:$0xff]
  %v949 = vld [vmem:[%s6 + $0x48] sm:$0xff]
  %v950 = vld [vmem:[%s6 + $0x50] sm:$0xff]
  %v951 = vld [vmem:[%s6 + $0x58] sm:$0xff]
  %v952 = vld [vmem:[%s6 + $0x60] sm:$0xff]
  %v953 = vld [vmem:[%s6 + $0x68] sm:$0xff]
  %v954 = vld [vmem:[%s6 + $0x70] sm:$0xff]
  %v955 = vld [vmem:[%s6 + $0x78] sm:$0xff]
  %v956 = vld [vmem:[%s6 + $0x80] sm:$0xff]
  %v957 = vld [vmem:[%s6 + $0x88] sm:$0xff]
  %v958 = vld [vmem:[%s6 + $0x90] sm:$0xff]
  %v959 = vld [vmem:[%s6 + $0x98] sm:$0xff]
  %v960 = vld [vmem:[%s6 + $0xa0] sm:$0xff]
  %v961 = vld [vmem:[%s6 + $0xa8] sm:$0xff]
  %v962 = vld [vmem:[%s6 + $0xb0] sm:$0xff]
  %v963 = vld [vmem:[%s6 + $0xb8] sm:$0xff]
  %v964 = vld [vmem:[%s6 + $0xc0] sm:$0xff]
  %v965 = vld [vmem:[%s6 + $0xc8] sm:$0xff]
  %v966 = vld [vmem:[%s6 + $0xd0] sm:$0xff]
  %v967 = vld [vmem:[%s6 + $0xd8] sm:$0xff]
  %v968 = vld [vmem:[%s6 + $0xe0] sm:$0xff]
  %v969 = vld [vmem:[%s6 + $0xe8] sm:$0xff]
  %v970 = vld [vmem:[%s6 + $0xf0] sm:$0xff]
  %v971 = vld [vmem:[%s6 + $0xf8] sm:$0xff]
  %v1004 = vunpack.c.l.b16 %v940
  %v1005 = vunpack.c.h.b16 %v940
  %v1006 = vunpack.c.l.b16 %v941
  %v1007 = vunpack.c.h.b16 %v941
  %v1008 = vunpack.c.l.b16 %v942
  %v1009 = vunpack.c.h.b16 %v942
  %v1010 = vunpack.c.l.b16 %v943
  %v1011 = vunpack.c.h.b16 %v943
  %v1012 = vunpack.c.l.b16 %v944
  %v1013 = vunpack.c.h.b16 %v944
  %v1014 = vunpack.c.l.b16 %v945
  %v1015 = vunpack.c.h.b16 %v945
  %v1016 = vunpack.c.l.b16 %v946
  %v1017 = vunpack.c.h.b16 %v946
  %v1018 = vunpack.c.l.b16 %v947
  %v1019 = vunpack.c.h.b16 %v947
  %v1020 = vunpack.c.l.b16 %v948
  %v1021 = vunpack.c.h.b16 %v948
  %v1022 = vunpack.c.l.b16 %v949
  %v1023 = vunpack.c.h.b16 %v949
  %v1024 = vunpack.c.l.b16 %v950
  %v1025 = vunpack.c.h.b16 %v950
  %v1026 = vunpack.c.l.b16 %v951
  %v1027 = vunpack.c.h.b16 %v951
  %v1028 = vunpack.c.l.b16 %v952
  %v1029 = vunpack.c.h.b16 %v952
  %v1030 = vunpack.c.l.b16 %v953
  %v1031 = vunpack.c.h.b16 %v953
  %v1032 = vunpack.c.l.b16 %v954
  %v1033 = vunpack.c.h.b16 %v954
  %v1034 = vunpack.c.l.b16 %v955
  %v1035 = vunpack.c.h.b16 %v955
  %v1036 = vunpack.c.l.b16 %v956
  %v1037 = vunpack.c.h.b16 %v956
  %v1038 = vunpack.c.l.b16 %v957
  %v1039 = vunpack.c.h.b16 %v957
  %v1040 = vunpack.c.l.b16 %v958
  %v1041 = vunpack.c.h.b16 %v958
  %v1042 = vunpack.c.l.b16 %v959
  %v1043 = vunpack.c.h.b16 %v959
  %v1044 = vunpack.c.l.b16 %v960
  %v1045 = vunpack.c.h.b16 %v960
  %v1046 = vunpack.c.l.b16 %v961
  %v1047 = vunpack.c.h.b16 %v961
  %v1048 = vunpack.c.l.b16 %v962
  %v1049 = vunpack.c.h.b16 %v962
  %v1050 = vunpack.c.l.b16 %v963
  %v1051 = vunpack.c.h.b16 %v963
  %v1052 = vunpack.c.l.b16 %v964
  %v1053 = vunpack.c.h.b16 %v964
  %v1054 = vunpack.c.l.b16 %v965
  %v1055 = vunpack.c.h.b16 %v965
  %v1056 = vunpack.c.l.b16 %v966
  %v1057 = vunpack.c.h.b16 %v966
  %v1058 = vunpack.c.l.b16 %v967
  %v1059 = vunpack.c.h.b16 %v967
  %v1060 = vunpack.c.l.b16 %v968
  %v1061 = vunpack.c.h.b16 %v968
  %v1062 = vunpack.c.l.b16 %v969
  %v1063 = vunpack.c.h.b16 %v969
  %v1064 = vunpack.c.l.b16 %v970
  %v1065 = vunpack.c.h.b16 %v970
  %v1066 = vunpack.c.l.b16 %v971
  %v1067 = vunpack.c.h.b16 %v971
  %v1068 = vpack.c.b16 %v1008, %v1004
  %v1069 = vpack.c.b16 %v1009, %v1005
  %v1070 = vpack.c.b16 %v1010, %v1006
  %v1071 = vpack.c.b16 %v1011, %v1007
  %v1072 = vpack.c.b16 %v1016, %v1012
  %v1073 = vpack.c.b16 %v1017, %v1013
  %v1074 = vpack.c.b16 %v1018, %v1014
  %v1075 = vpack.c.b16 %v1019, %v1015
  %v1076 = vpack.c.b16 %v1024, %v1020
  %v1077 = vpack.c.b16 %v1025, %v1021
  %v1078 = vpack.c.b16 %v1026, %v1022
  %v1079 = vpack.c.b16 %v1027, %v1023
  %v1080 = vpack.c.b16 %v1032, %v1028
  %v1081 = vpack.c.b16 %v1033, %v1029
  %v1082 = vpack.c.b16 %v1034, %v1030
  %v1083 = vpack.c.b16 %v1035, %v1031
  %v1084 = vpack.c.b16 %v1040, %v1036
  %v1085 = vpack.c.b16 %v1041, %v1037
  %v1086 = vpack.c.b16 %v1042, %v1038
  %v1087 = vpack.c.b16 %v1043, %v1039
  %v1088 = vpack.c.b16 %v1048, %v1044
  %v1089 = vpack.c.b16 %v1049, %v1045
  %v1090 = vpack.c.b16 %v1050, %v1046
  %v1091 = vpack.c.b16 %v1051, %v1047
  %v1092 = vpack.c.b16 %v1056, %v1052
  %v1093 = vpack.c.b16 %v1057, %v1053
  %v1094 = vpack.c.b16 %v1058, %v1054
  %v1095 = vpack.c.b16 %v1059, %v1055
  %v1096 = vpack.c.b16 %v1064, %v1060
  %v1097 = vpack.c.b16 %v1065, %v1061
  %v1098 = vpack.c.b16 %v1066, %v1062
  %v1099 = vpack.c.b16 %v1067, %v1063
  %1132 = vmatprep.subr.bf16.mxu0 %v1097
  %1133 = vmatpush1.bf16.msra.mxu0 %v1096
  %1134 = vmatprep.subr.bf16.mxu0 %v1093
  %1135 = vmatpush1.bf16.msra.mxu0 %v1092
  %1136 = vmatprep.subr.bf16.mxu0 %v1089
  %1137 = vmatpush1.bf16.msra.mxu0 %v1088
  %1138 = vmatprep.subr.bf16.mxu0 %v1085
  %1139 = vmatpush1.bf16.msra.mxu0 %v1084
  %1140 = vmatprep.subr.bf16.mxu0 %v1081
  %1141 = vmatpush1.bf16.msra.mxu0 %v1080
  %1142 = vmatprep.subr.bf16.mxu0 %v1077
  %1143 = vmatpush1.bf16.msra.mxu0 %v1076
  %1144 = vmatprep.subr.bf16.mxu0 %v1073
  %1145 = vmatpush1.bf16.msra.mxu0 %v1072
  %1146 = vmatprep.subr.bf16.mxu0 %v1069
  %1147 = vmatpush1.bf16.msra.mxu0 %v1068
  %1148 = vmatprep.subr.bf16.mxu0 0
  %1149 = vmatpush2.bf16.msra.mxu0 0
  %1150 = vmatprep.subr.bf16.mxu0 0
  %1151 = vmatpush2.bf16.msra.mxu0 0
  %1152 = vmatprep.subr.bf16.mxu0 0
  %1153 = vmatpush2.bf16.msra.mxu0 0
  %1154 = vmatprep.subr.bf16.mxu0 0
  %1155 = vmatpush2.bf16.msra.mxu0 0
  %1156 = vmatprep.subr.bf16.mxu0 0
  %1157 = vmatpush2.bf16.msra.mxu0 0
  %1158 = vmatprep.subr.bf16.mxu0 0
  %1159 = vmatpush2.bf16.msra.mxu0 0
  %1160 = vmatprep.subr.bf16.mxu0 0
  %1161 = vmatpush2.bf16.msra.mxu0 0
  %1162 = vmatprep.subr.bf16.mxu0 0
  %1163 = vmatpush2.bf16.msra.mxu0 0
  %1164 = vmatprep.mubr.bf16.mxu0 0
  %1165 = vmatmul.mubr.bf16.gmra.mxu0 0
  %v1166 = vpop.f32.mrf.mxu0
  %v1167 = vadd.f32 0.0, %v1166
  %v1168 = vpop.f32.mrf.mxu0
  %v1169 = vadd.f32 0.0, %v1168
  %v1170 = vpop.f32.mrf.mxu0
  %v1171 = vpop.f32.mrf.mxu0
  %1172 = vdwg.mxu0
  %1173 = vmatprep.subr.bf16.mxu0 %v1099
  %1174 = vmatpush1.bf16.msra.mxu0 %v1098
  %1175 = vmatprep.subr.bf16.mxu0 %v1095
  %1176 = vmatpush1.bf16.msra.mxu0 %v1094
  %1177 = vmatprep.subr.bf16.mxu0 %v1091
  %1178 = vmatpush1.bf16.msra.mxu0 %v1090
  %1179 = vmatprep.subr.bf16.mxu0 %v1087
  %1180 = vmatpush1.bf16.msra.mxu0 %v1086
  %1181 = vmatprep.subr.bf16.mxu0 %v1083
  %1182 = vmatpush1.bf16.msra.mxu0 %v1082
  %1183 = vmatprep.subr.bf16.mxu0 %v1079
  %1184 = vmatpush1.bf16.msra.mxu0 %v1078
  %1185 = vmatprep.subr.bf16.mxu0 %v1075
  %1186 = vmatpush1.bf16.msra.mxu0 %v1074
  %1187 = vmatprep.subr.bf16.mxu0 %v1071
  %1188 = vmatpush1.bf16.msra.mxu0 %v1070
  %1189 = vmatprep.subr.bf16.mxu0 0
  %1190 = vmatpush2.bf16.msra.mxu0 0
  %1191 = vmatprep.subr.bf16.mxu0 0
  %1192 = vmatpush2.bf16.msra.mxu0 0
  %1193 = vmatprep.subr.bf16.mxu0 0
  %1194 = vmatpush2.bf16.msra.mxu0 0
  %1195 = vmatprep.subr.bf16.mxu0 0
  %1196 = vmatpush2.bf16.msra.mxu0 0
  %1197 = vmatprep.subr.bf16.mxu0 0
  %1198 = vmatpush2.bf16.msra.mxu0 0
  %1199 = vmatprep.subr.bf16.mxu0 0
  %1200 = vmatpush2.bf16.msra.mxu0 0
  %1201 = vmatprep.subr.bf16.mxu0 0
  %1202 = vmatpush2.bf16.msra.mxu0 0
  %1203 = vmatprep.subr.bf16.mxu0 0
  %1204 = vmatpush2.bf16.msra.mxu0 0
  %1205 = vmatprep.mubr.bf16.mxu0 0
  %1206 = vmatmul.mubr.bf16.gmra.mxu0 0
  %v1207 = vpop.f32.mrf.mxu0
  %v1208 = vadd.f32 0.0, %v1207
  %v1209 = vpop.f32.mrf.mxu0
  %v1210 = vadd.f32 0.0, %v1209
  %v1211 = vpop.f32.mrf.mxu0
  %v1212 = vpop.f32.mrf.mxu0
  %1213 = vdwg.mxu0
  %v1214 = vld [vmem:[#allocation2] sm:$0xff]
  %v1215 = vld [vmem:[#allocation2 + $0x8] sm:$0xff]
  %v1216 = vld [vmem:[#allocation2 + $0x10] sm:$0xff]
  %v1217 = vld [vmem:[#allocation2 + $0x18] sm:$0xff]
  %v1218 = vadd.f32 %v1214, %v893
  %v1219 = vadd.f32 %v1215, %v895
  %v1220 = vadd.f32 %v1216, %v934
  %v1221 = vadd.f32 %v1217, %v936
  %s1222 = scalar_lea.vmem [#allocation3], 224
  %v1223 = vld [vmem:[%s1222] sm:$0xff]
  %v1224 = vld [vmem:[%s1222 + $0x8] sm:$0xff]
  %v1225 = vld [vmem:[%s1222 + $0x10] sm:$0xff]
  %v1226 = vld [vmem:[%s1222 + $0x18] sm:$0xff]
  %v1227 = vadd.f32 %v1223, %v1167
  %v1228 = vadd.f32 %v1224, %v1169
  %v1229 = vadd.f32 %v1225, %v1208
  %v1230 = vadd.f32 %v1226, %v1210
  %v1231 = vmul.f32 %v1218, 0.5
  %v1232 = vtanh.pop %v1231
  %v1233 = vmul.f32 %v1232, 0.5
  %v1234 = vadd.f32 %v1233, 0.5
  %v1235 = vmul.f32 %v1219, 0.5
  %v1236 = vtanh.pop %v1235
  %v1237 = vmul.f32 %v1236, 0.5
  %v1238 = vadd.f32 %v1237, 0.5
  %v1239 = vtanh.pop %v1220
  %v1240 = vmul.f32 %v1221, 0.5
  %v1241 = vtanh.pop %v1240
  %v1242 = vmul.f32 %v1241, 0.5
  %v1243 = vadd.f32 %v1242, 0.5
  %v1244 = vmul.f32 %v1238, 0.0
  %v1245 = vmul.f32 %v1234, %v1239
  %v1246 = vadd.f32 %v1244, %v1245
  %v1247 = vtanh.pop %v1246
  %v1248 = vmul.f32 %v1243, %v1247
  %v1249 = vmul.f32 %v1227, 0.5
  %v1250 = vtanh.pop %v1249
  %v1251 = vmul.f32 %v1250, 0.5
  %v1252 = vadd.f32 %v1251, 0.5
  %v1253 = vmul.f32 %v1228, 0.5
  %v1254 = vtanh.pop %v1253
  %v1255 = vmul.f32 %v1254, 0.5
  %v1256 = vadd.f32 %v1255, 0.5
  %v1257 = vtanh.pop %v1229
  %v1258 = vmul.f32 %v1230, 0.5
  %v1259 = vtanh.pop %v1258
  %v1260 = vmul.f32 %v1259, 0.5
  %v1261 = vadd.f32 %v1260, 0.5
  %v1262 = vmul.f32 %v1256, 0.0
  %v1263 = vmul.f32 %v1252, %v1257
  %v1264 = vadd.f32 %v1262, %v1263
  %v1265 = vtanh.pop %v1264
  %v1266 = vmul.f32 %v1261, %v1265
  %v1267 = vpack.c.bf16 %v1248, %v1248
  %1268 = vmatprep.subr.bf16.mxu0 %v823
  %1269 = vmatpush1.bf16.msra.mxu0 %v822
  %1270 = vmatprep.subr.bf16.mxu0 %v819
  %1271 = vmatpush1.bf16.msra.mxu0 %v818
  %1272 = vmatprep.subr.bf16.mxu0 %v815
  %1273 = vmatpush1.bf16.msra.mxu0 %v814
  %1274 = vmatprep.subr.bf16.mxu0 %v811
  %1275 = vmatpush1.bf16.msra.mxu0 %v810
  %1276 = vmatprep.subr.bf16.mxu0 %v807
  %1277 = vmatpush1.bf16.msra.mxu0 %v806
  %1278 = vmatprep.subr.bf16.mxu0 %v803
  %1279 = vmatpush1.bf16.msra.mxu0 %v802
  %1280 = vmatprep.subr.bf16.mxu0 %v799
  %1281 = vmatpush1.bf16.msra.mxu0 %v798
  %1282 = vmatprep.subr.bf16.mxu0 %v795
  %1283 = vmatpush1.bf16.msra.mxu0 %v794
  %1284 = vmatprep.subr.bf16.mxu0 0
  %1285 = vmatpush2.bf16.msra.mxu0 0
  %1286 = vmatprep.subr.bf16.mxu0 0
  %1287 = vmatpush2.bf16.msra.mxu0 0
  %1288 = vmatprep.subr.bf16.mxu0 0
  %1289 = vmatpush2.bf16.msra.mxu0 0
  %1290 = vmatprep.subr.bf16.mxu0 0
  %1291 = vmatpush2.bf16.msra.mxu0 0
  %1292 = vmatprep.subr.bf16.mxu0 0
  %1293 = vmatpush2.bf16.msra.mxu0 0
  %1294 = vmatprep.subr.bf16.mxu0 0
  %1295 = vmatpush2.bf16.msra.mxu0 0
  %1296 = vmatprep.subr.bf16.mxu0 0
  %1297 = vmatpush2.bf16.msra.mxu0 0
  %1298 = vmatprep.subr.bf16.mxu0 0
  %1299 = vmatpush2.bf16.msra.mxu0 0
  %1300 = vmatprep.mubr.bf16.mxu0 0
  %1301 = vmatmul.mubr.bf16.gmra.mxu0 %v1267
  %v1302 = vpop.f32.mrf.mxu0
  %v1303 = vadd.f32 0.0, %v1302
  %v1304 = vpop.f32.mrf.mxu0
  %v1305 = vadd.f32 0.0, %v1304
  %v1306 = vpop.f32.mrf.mxu0
  %v1307 = vpop.f32.mrf.mxu0
  %1308 = vdwg.mxu0
  %1309 = vmatprep.subr.bf16.mxu0 %v825
  %1310 = vmatpush1.bf16.msra.mxu0 %v824
  %1311 = vmatprep.subr.bf16.mxu0 %v821
  %1312 = vmatpush1.bf16.msra.mxu0 %v820
  %1313 = vmatprep.subr.bf16.mxu0 %v817
  %1314 = vmatpush1.bf16.msra.mxu0 %v816
  %1315 = vmatprep.subr.bf16.mxu0 %v813
  %1316 = vmatpush1.bf16.msra.mxu0 %v812
  %1317 = vmatprep.subr.bf16.mxu0 %v809
  %1318 = vmatpush1.bf16.msra.mxu0 %v808
  %1319 = vmatprep.subr.bf16.mxu0 %v805
  %1320 = vmatpush1.bf16.msra.mxu0 %v804
  %1321 = vmatprep.subr.bf16.mxu0 %v801
  %1322 = vmatpush1.bf16.msra.mxu0 %v800
  %1323 = vmatprep.subr.bf16.mxu0 %v797
  %1324 = vmatpush1.bf16.msra.mxu0 %v796
  %1325 = vmatprep.subr.bf16.mxu0 0
  %1326 = vmatpush2.bf16.msra.mxu0 0
  %1327 = vmatprep.subr.bf16.mxu0 0
  %1328 = vmatpush2.bf16.msra.mxu0 0
  %1329 = vmatprep.subr.bf16.mxu0 0
  %1330 = vmatpush2.bf16.msra.mxu0 0
  %1331 = vmatprep.subr.bf16.mxu0 0
  %1332 = vmatpush2.bf16.msra.mxu0 0
  %1333 = vmatprep.subr.bf16.mxu0 0
  %1334 = vmatpush2.bf16.msra.mxu0 0
  %1335 = vmatprep.subr.bf16.mxu0 0
  %1336 = vmatpush2.bf16.msra.mxu0 0
  %1337 = vmatprep.subr.bf16.mxu0 0
  %1338 = vmatpush2.bf16.msra.mxu0 0
  %1339 = vmatprep.subr.bf16.mxu0 0
  %1340 = vmatpush2.bf16.msra.mxu0 0
  %1341 = vmatprep.mubr.bf16.mxu0 0
  %1342 = vmatmul.mubr.bf16.gmra.mxu0 %v1267
  %v1343 = vpop.f32.mrf.mxu0
  %v1344 = vadd.f32 0.0, %v1343
  %v1345 = vpop.f32.mrf.mxu0
  %v1346 = vadd.f32 0.0, %v1345
  %v1347 = vpop.f32.mrf.mxu0
  %v1348 = vpop.f32.mrf.mxu0
  %1349 = vdwg.mxu0
  %v1350 = vpack.c.bf16 %v1266, %v1266
  %1351 = vmatprep.subr.bf16.mxu0 %v1097
  %1352 = vmatpush1.bf16.msra.mxu0 %v1096
  %1353 = vmatprep.subr.bf16.mxu0 %v1093
  %1354 = vmatpush1.bf16.msra.mxu0 %v1092
  %1355 = vmatprep.subr.bf16.mxu0 %v1089
  %1356 = vmatpush1.bf16.msra.mxu0 %v1088
  %1357 = vmatprep.subr.bf16.mxu0 %v1085
  %1358 = vmatpush1.bf16.msra.mxu0 %v1084
  %1359 = vmatprep.subr.bf16.mxu0 %v1081
  %1360 = vmatpush1.bf16.msra.mxu0 %v1080
  %1361 = vmatprep.subr.bf16.mxu0 %v1077
  %1362 = vmatpush1.bf16.msra.mxu0 %v1076
  %1363 = vmatprep.subr.bf16.mxu0 %v1073
  %1364 = vmatpush1.bf16.msra.mxu0 %v1072
  %1365 = vmatprep.subr.bf16.mxu0 %v1069
  %1366 = vmatpush1.bf16.msra.mxu0 %v1068
  %1367 = vmatprep.subr.bf16.mxu0 0
  %1368 = vmatpush2.bf16.msra.mxu0 0
  %1369 = vmatprep.subr.bf16.mxu0 0
  %1370 = vmatpush2.bf16.msra.mxu0 0
  %1371 = vmatprep.subr.bf16.mxu0 0
  %1372 = vmatpush2.bf16.msra.mxu0 0
  %1373 = vmatprep.subr.bf16.mxu0 0
  %1374 = vmatpush2.bf16.msra.mxu0 0
  %1375 = vmatprep.subr.bf16.mxu0 0
  %1376 = vmatpush2.bf16.msra.mxu0 0
  %1377 = vmatprep.subr.bf16.mxu0 0
  %1378 = vmatpush2.bf16.msra.mxu0 0
  %1379 = vmatprep.subr.bf16.mxu0 0
  %1380 = vmatpush2.bf16.msra.mxu0 0
  %1381 = vmatprep.subr.bf16.mxu0 0
  %1382 = vmatpush2.bf16.msra.mxu0 0
  %1383 = vmatprep.mubr.bf16.mxu0 0
  %1384 = vmatmul.mubr.bf16.gmra.mxu0 %v1350
  %v1385 = vpop.f32.mrf.mxu0
  %v1386 = vadd.f32 0.0, %v1385
  %v1387 = vpop.f32.mrf.mxu0
  %v1388 = vadd.f32 0.0, %v1387
  %v1389 = vpop.f32.mrf.mxu0
  %v1390 = vpop.f32.mrf.mxu0
  %1391 = vdwg.mxu0
  %1392 = vmatprep.subr.bf16.mxu0 %v1099
  %1393 = vmatpush1.bf16.msra.mxu0 %v1098
  %1394 = vmatprep.subr.bf16.mxu0 %v1095
  %1395 = vmatpush1.bf16.msra.mxu0 %v1094
  %1396 = vmatprep.subr.bf16.mxu0 %v1091
  %1397 = vmatpush1.bf16.msra.mxu0 %v1090
  %1398 = vmatprep.subr.bf16.mxu0 %v1087
  %1399 = vmatpush1.bf16.msra.mxu0 %v1086
  %1400 = vmatprep.subr.bf16.mxu0 %v1083
  %1401 = vmatpush1.bf16.msra.mxu0 %v1082
  %1402 = vmatprep.subr.bf16.mxu0 %v1079
  %1403 = vmatpush1.bf16.msra.mxu0 %v1078
  %1404 = vmatprep.subr.bf16.mxu0 %v1075
  %1405 = vmatpush1.bf16.msra.mxu0 %v1074
  %1406 = vmatprep.subr.bf16.mxu0 %v1071
  %1407 = vmatpush1.bf16.msra.mxu0 %v1070
  %1408 = vmatprep.subr.bf16.mxu0 0
  %1409 = vmatpush2.bf16.msra.mxu0 0
  %1410 = vmatprep.subr.bf16.mxu0 0
  %1411 = vmatpush2.bf16.msra.mxu0 0
  %1412 = vmatprep.subr.bf16.mxu0 0
  %1413 = vmatpush2.bf16.msra.mxu0 0
  %1414 = vmatprep.subr.bf16.mxu0 0
  %1415 = vmatpush2.bf16.msra.mxu0 0
  %1416 = vmatprep.subr.bf16.mxu0 0
  %1417 = vmatpush2.bf16.msra.mxu0 0
  %1418 = vmatprep.subr.bf16.mxu0 0
  %1419 = vmatpush2.bf16.msra.mxu0 0
  %1420 = vmatprep.subr.bf16.mxu0 0
  %1421 = vmatpush2.bf16.msra.mxu0 0
  %1422 = vmatprep.subr.bf16.mxu0 0
  %1423 = vmatpush2.bf16.msra.mxu0 0
  %1424 = vmatprep.mubr.bf16.mxu0 0
  %1425 = vmatmul.mubr.bf16.gmra.mxu0 %v1350
  %v1426 = vpop.f32.mrf.mxu0
  %v1427 = vadd.f32 0.0, %v1426
  %v1428 = vpop.f32.mrf.mxu0
  %v1429 = vadd.f32 0.0, %v1428
  %v1430 = vpop.f32.mrf.mxu0
  %v1431 = vpop.f32.mrf.mxu0
  %1432 = vdwg.mxu0
  %s1433 = scalar_lea.vmem [#allocation2], 32
  %v1434 = vld [vmem:[%s1433] sm:$0xff]
  %v1435 = vld [vmem:[%s1433 + $0x8] sm:$0xff]
  %v1436 = vld [vmem:[%s1433 + $0x10] sm:$0xff]
  %v1437 = vld [vmem:[%s1433 + $0x18] sm:$0xff]
  %v1438 = vadd.f32 %v1434, %v1303
  %v1439 = vadd.f32 %v1435, %v1305
  %v1440 = vadd.f32 %v1436, %v1344
  %v1441 = vadd.f32 %v1437, %v1346
  %s1442 = scalar_lea.vmem [#allocation3], 192
  %v1443 = vld [vmem:[%s1442] sm:$0xff]
  %v1444 = vld [vmem:[%s1442 + $0x8] sm:$0xff]
  %v1445 = vld [vmem:[%s1442 + $0x10] sm:$0xff]
  %v1446 = vld [vmem:[%s1442 + $0x18] sm:$0xff]
  %v1447 = vadd.f32 %v1443, %v1386
  %v1448 = vadd.f32 %v1444, %v1388
  %v1449 = vadd.f32 %v1445, %v1427
  %v1450 = vadd.f32 %v1446, %v1429
  %v1451 = vmul.f32 %v1438, 0.5
  %v1452 = vtanh.pop %v1451
  %v1453 = vmul.f32 %v1452, 0.5
  %v1454 = vadd.f32 %v1453, 0.5
  %v1455 = vmul.f32 %v1439, 0.5
  %v1456 = vtanh.pop %v1455
  %v1457 = vmul.f32 %v1456, 0.5
  %v1458 = vadd.f32 %v1457, 0.5
  %v1459 = vtanh.pop %v1440
  %v1460 = vmul.f32 %v1441, 0.5
  %v1461 = vtanh.pop %v1460
  %v1462 = vmul.f32 %v1461, 0.5
  %v1463 = vadd.f32 %v1462, 0.5
  %v1464 = vmul.f32 %v1458, %v1246
  %v1465 = vmul.f32 %v1454, %v1459
  %v1466 = vadd.f32 %v1464, %v1465
  %v1467 = vtanh.pop %v1466
  %v1468 = vmul.f32 %v1463, %v1467
  %v1469 = vmul.f32 %v1447, 0.5
  %v1470 = vtanh.pop %v1469
  %v1471 = vmul.f32 %v1470, 0.5
  %v1472 = vadd.f32 %v1471, 0.5
  %v1473 = vmul.f32 %v1448, 0.5
  %v1474 = vtanh.pop %v1473
  %v1475 = vmul.f32 %v1474, 0.5
  %v1476 = vadd.f32 %v1475, 0.5
  %v1477 = vtanh.pop %v1449
  %v1478 = vmul.f32 %v1450, 0.5
  %v1479 = vtanh.pop %v1478
  %v1480 = vmul.f32 %v1479, 0.5
  %v1481 = vadd.f32 %v1480, 0.5
  %v1482 = vmul.f32 %v1476, %v1264
  %v1483 = vmul.f32 %v1472, %v1477
  %v1484 = vadd.f32 %v1482, %v1483
  %v1485 = vtanh.pop %v1484
  %v1486 = vmul.f32 %v1481, %v1485
  %v1487 = vpack.c.bf16 %v1468, %v1468
  %1488 = vmatprep.subr.bf16.mxu0 %v823
  %1489 = vmatpush1.bf16.msra.mxu0 %v822
  %1490 = vmatprep.subr.bf16.mxu0 %v819
  %1491 = vmatpush1.bf16.msra.mxu0 %v818
  %1492 = vmatprep.subr.bf16.mxu0 %v815
  %1493 = vmatpush1.bf16.msra.mxu0 %v814
  %1494 = vmatprep.subr.bf16.mxu0 %v811
  %1495 = vmatpush1.bf16.msra.mxu0 %v810
  %1496 = vmatprep.subr.bf16.mxu0 %v807
  %1497 = vmatpush1.bf16.msra.mxu0 %v806
  %1498 = vmatprep.subr.bf16.mxu0 %v803
  %1499 = vmatpush1.bf16.msra.mxu0 %v802
  %1500 = vmatprep.subr.bf16.mxu0 %v799
  %1501 = vmatpush1.bf16.msra.mxu0 %v798
  %1502 = vmatprep.subr.bf16.mxu0 %v795
  %1503 = vmatpush1.bf16.msra.mxu0 %v794
  %1504 = vmatprep.subr.bf16.mxu0 0
  %1505 = vmatpush2.bf16.msra.mxu0 0
  %1506 = vmatprep.subr.bf16.mxu0 0
  %1507 = vmatpush2.bf16.msra.mxu0 0
  %1508 = vmatprep.subr.bf16.mxu0 0
  %1509 = vmatpush2.bf16.msra.mxu0 0
  %1510 = vmatprep.subr.bf16.mxu0 0
  %1511 = vmatpush2.bf16.msra.mxu0 0
  %1512 = vmatprep.subr.bf16.mxu0 0
  %1513 = vmatpush2.bf16.msra.mxu0 0
  %1514 = vmatprep.subr.bf16.mxu0 0
  %1515 = vmatpush2.bf16.msra.mxu0 0
  %1516 = vmatprep.subr.bf16.mxu0 0
  %1517 = vmatpush2.bf16.msra.mxu0 0
  %1518 = vmatprep.subr.bf16.mxu0 0
  %1519 = vmatpush2.bf16.msra.mxu0 0
  %1520 = vmatprep.mubr.bf16.mxu0 0
  %1521 = vmatmul.mubr.bf16.gmra.mxu0 %v1487
  %v1522 = vpop.f32.mrf.mxu0
  %v1523 = vadd.f32 0.0, %v1522
  %v1524 = vpop.f32.mrf.mxu0
  %v1525 = vadd.f32 0.0, %v1524
  %v1526 = vpop.f32.mrf.mxu0
  %v1527 = vpop.f32.mrf.mxu0
  %1528 = vdwg.mxu0
  %1529 = vmatprep.subr.bf16.mxu0 %v825
  %1530 = vmatpush1.bf16.msra.mxu0 %v824
  %1531 = vmatprep.subr.bf16.mxu0 %v821
  %1532 = vmatpush1.bf16.msra.mxu0 %v820
  %1533 = vmatprep.subr.bf16.mxu0 %v817
  %1534 = vmatpush1.bf16.msra.mxu0 %v816
  %1535 = vmatprep.subr.bf16.mxu0 %v813
  %1536 = vmatpush1.bf16.msra.mxu0 %v812
  %1537 = vmatprep.subr.bf16.mxu0 %v809
  %1538 = vmatpush1.bf16.msra.mxu0 %v808
  %1539 = vmatprep.subr.bf16.mxu0 %v805
  %1540 = vmatpush1.bf16.msra.mxu0 %v804
  %1541 = vmatprep.subr.bf16.mxu0 %v801
  %1542 = vmatpush1.bf16.msra.mxu0 %v800
  %1543 = vmatprep.subr.bf16.mxu0 %v797
  %1544 = vmatpush1.bf16.msra.mxu0 %v796
  %1545 = vmatprep.subr.bf16.mxu0 0
  %1546 = vmatpush2.bf16.msra.mxu0 0
  %1547 = vmatprep.subr.bf16.mxu0 0
  %1548 = vmatpush2.bf16.msra.mxu0 0
  %1549 = vmatprep.subr.bf16.mxu0 0
  %1550 = vmatpush2.bf16.msra.mxu0 0
  %1551 = vmatprep.subr.bf16.mxu0 0
  %1552 = vmatpush2.bf16.msra.mxu0 0
  %1553 = vmatprep.subr.bf16.mxu0 0
  %1554 = vmatpush2.bf16.msra.mxu0 0
  %1555 = vmatprep.subr.bf16.mxu0 0
  %1556 = vmatpush2.bf16.msra.mxu0 0
  %1557 = vmatprep.subr.bf16.mxu0 0
  %1558 = vmatpush2.bf16.msra.mxu0 0
  %1559 = vmatprep.subr.bf16.mxu0 0
  %1560 = vmatpush2.bf16.msra.mxu0 0
  %1561 = vmatprep.mubr.bf16.mxu0 0
  %1562 = vmatmul.mubr.bf16.gmra.mxu0 %v1487
  %v1563 = vpop.f32.mrf.mxu0
  %v1564 = vadd.f32 0.0, %v1563
  %v1565 = vpop.f32.mrf.mxu0
  %v1566 = vadd.f32 0.0, %v1565
  %v1567 = vpop.f32.mrf.mxu0
  %v1568 = vpop.f32.mrf.mxu0
  %1569 = vdwg.mxu0
  %v1570 = vpack.c.bf16 %v1486, %v1486
  %1571 = vmatprep.subr.bf16.mxu0 %v1097
  %1572 = vmatpush1.bf16.msra.mxu0 %v1096
  %1573 = vmatprep.subr.bf16.mxu0 %v1093
  %1574 = vmatpush1.bf16.msra.mxu0 %v1092
  %1575 = vmatprep.subr.bf16.mxu0 %v1089
  %1576 = vmatpush1.bf16.msra.mxu0 %v1088
  %1577 = vmatprep.subr.bf16.mxu0 %v1085
  %1578 = vmatpush1.bf16.msra.mxu0 %v1084
  %1579 = vmatprep.subr.bf16.mxu0 %v1081
  %1580 = vmatpush1.bf16.msra.mxu0 %v1080
  %1581 = vmatprep.subr.bf16.mxu0 %v1077
  %1582 = vmatpush1.bf16.msra.mxu0 %v1076
  %1583 = vmatprep.subr.bf16.mxu0 %v1073
  %1584 = vmatpush1.bf16.msra.mxu0 %v1072
  %1585 = vmatprep.subr.bf16.mxu0 %v1069
  %1586 = vmatpush1.bf16.msra.mxu0 %v1068
  %1587 = vmatprep.subr.bf16.mxu0 0
  %1588 = vmatpush2.bf16.msra.mxu0 0
  %1589 = vmatprep.subr.bf16.mxu0 0
  %1590 = vmatpush2.bf16.msra.mxu0 0
  %1591 = vmatprep.subr.bf16.mxu0 0
  %1592 = vmatpush2.bf16.msra.mxu0 0
  %1593 = vmatprep.subr.bf16.mxu0 0
  %1594 = vmatpush2.bf16.msra.mxu0 0
  %1595 = vmatprep.subr.bf16.mxu0 0
  %1596 = vmatpush2.bf16.msra.mxu0 0
  %1597 = vmatprep.subr.bf16.mxu0 0
  %1598 = vmatpush2.bf16.msra.mxu0 0
  %1599 = vmatprep.subr.bf16.mxu0 0
  %1600 = vmatpush2.bf16.msra.mxu0 0
  %1601 = vmatprep.subr.bf16.mxu0 0
  %1602 = vmatpush2.bf16.msra.mxu0 0
  %1603 = vmatprep.mubr.bf16.mxu0 0
  %1604 = vmatmul.mubr.bf16.gmra.mxu0 %v1570
  %v1605 = vpop.f32.mrf.mxu0
  %v1606 = vadd.f32 0.0, %v1605
  %v1607 = vpop.f32.mrf.mxu0
  %v1608 = vadd.f32 0.0, %v1607
  %v1609 = vpop.f32.mrf.mxu0
  %v1610 = vpop.f32.mrf.mxu0
  %1611 = vdwg.mxu0
  %1612 = vmatprep.subr.bf16.mxu0 %v1099
  %1613 = vmatpush1.bf16.msra.mxu0 %v1098
  %1614 = vmatprep.subr.bf16.mxu0 %v1095
  %1615 = vmatpush1.bf16.msra.mxu0 %v1094
  %1616 = vmatprep.subr.bf16.mxu0 %v1091
  %1617 = vmatpush1.bf16.msra.mxu0 %v1090
  %1618 = vmatprep.subr.bf16.mxu0 %v1087
  %1619 = vmatpush1.bf16.msra.mxu0 %v1086
  %1620 = vmatprep.subr.bf16.mxu0 %v1083
  %1621 = vmatpush1.bf16.msra.mxu0 %v1082
  %1622 = vmatprep.subr.bf16.mxu0 %v1079
  %1623 = vmatpush1.bf16.msra.mxu0 %v1078
  %1624 = vmatprep.subr.bf16.mxu0 %v1075
  %1625 = vmatpush1.bf16.msra.mxu0 %v1074
  %1626 = vmatprep.subr.bf16.mxu0 %v1071
  %1627 = vmatpush1.bf16.msra.mxu0 %v1070
  %1628 = vmatprep.subr.bf16.mxu0 0
  %1629 = vmatpush2.bf16.msra.mxu0 0
  %1630 = vmatprep.subr.bf16.mxu0 0
  %1631 = vmatpush2.bf16.msra.mxu0 0
  %1632 = vmatprep.subr.bf16.mxu0 0
  %1633 = vmatpush2.bf16.msra.mxu0 0
  %1634 = vmatprep.subr.bf16.mxu0 0
  %1635 = vmatpush2.bf16.msra.mxu0 0
  %1636 = vmatprep.subr.bf16.mxu0 0
  %1637 = vmatpush2.bf16.msra.mxu0 0
  %1638 = vmatprep.subr.bf16.mxu0 0
  %1639 = vmatpush2.bf16.msra.mxu0 0
  %1640 = vmatprep.subr.bf16.mxu0 0
  %1641 = vmatpush2.bf16.msra.mxu0 0
  %1642 = vmatprep.subr.bf16.mxu0 0
  %1643 = vmatpush2.bf16.msra.mxu0 0
  %1644 = vmatprep.mubr.bf16.mxu0 0
  %1645 = vmatmul.mubr.bf16.gmra.mxu0 %v1570
  %v1646 = vpop.f32.mrf.mxu0
  %v1647 = vadd.f32 0.0, %v1646
  %v1648 = vpop.f32.mrf.mxu0
  %v1649 = vadd.f32 0.0, %v1648
  %v1650 = vpop.f32.mrf.mxu0
  %v1651 = vpop.f32.mrf.mxu0
  %1652 = vdwg.mxu0
  %s1653 = scalar_lea.vmem [#allocation2], 64
  %v1654 = vld [vmem:[%s1653] sm:$0xff]
  %v1655 = vld [vmem:[%s1653 + $0x8] sm:$0xff]
  %v1656 = vld [vmem:[%s1653 + $0x10] sm:$0xff]
  %v1657 = vld [vmem:[%s1653 + $0x18] sm:$0xff]
  %v1658 = vadd.f32 %v1654, %v1523
  %v1659 = vadd.f32 %v1655, %v1525
  %v1660 = vadd.f32 %v1656, %v1564
  %v1661 = vadd.f32 %v1657, %v1566
  %s1662 = scalar_lea.vmem [#allocation3], 160
  %v1663 = vld [vmem:[%s1662] sm:$0xff]
  %v1664 = vld [vmem:[%s1662 + $0x8] sm:$0xff]
  %v1665 = vld [vmem:[%s1662 + $0x10] sm:$0xff]
  %v1666 = vld [vmem:[%s1662 + $0x18] sm:$0xff]
  %v1667 = vadd.f32 %v1663, %v1606
  %v1668 = vadd.f32 %v1664, %v1608
  %v1669 = vadd.f32 %v1665, %v1647
  %v1670 = vadd.f32 %v1666, %v1649
  %v1671 = vmul.f32 %v1658, 0.5
  %v1672 = vtanh.pop %v1671
  %v1673 = vmul.f32 %v1672, 0.5
  %v1674 = vadd.f32 %v1673, 0.5
  %v1675 = vmul.f32 %v1659, 0.5
  %v1676 = vtanh.pop %v1675
  %v1677 = vmul.f32 %v1676, 0.5
  %v1678 = vadd.f32 %v1677, 0.5
  %v1679 = vtanh.pop %v1660
  %v1680 = vmul.f32 %v1661, 0.5
  %v1681 = vtanh.pop %v1680
  %v1682 = vmul.f32 %v1681, 0.5
  %v1683 = vadd.f32 %v1682, 0.5
  %v1684 = vmul.f32 %v1678, %v1466
  %v1685 = vmul.f32 %v1674, %v1679
  %v1686 = vadd.f32 %v1684, %v1685
  %v1687 = vtanh.pop %v1686
  %v1688 = vmul.f32 %v1683, %v1687
  %v1689 = vmul.f32 %v1667, 0.5
  %v1690 = vtanh.pop %v1689
  %v1691 = vmul.f32 %v1690, 0.5
  %v1692 = vadd.f32 %v1691, 0.5
  %v1693 = vmul.f32 %v1668, 0.5
  %v1694 = vtanh.pop %v1693
  %v1695 = vmul.f32 %v1694, 0.5
  %v1696 = vadd.f32 %v1695, 0.5
  %v1697 = vtanh.pop %v1669
  %v1698 = vmul.f32 %v1670, 0.5
  %v1699 = vtanh.pop %v1698
  %v1700 = vmul.f32 %v1699, 0.5
  %v1701 = vadd.f32 %v1700, 0.5
  %v1702 = vmul.f32 %v1696, %v1484
  %v1703 = vmul.f32 %v1692, %v1697
  %v1704 = vadd.f32 %v1702, %v1703
  %v1705 = vtanh.pop %v1704
  %v1706 = vmul.f32 %v1701, %v1705
  %v1707 = vpack.c.bf16 %v1688, %v1688
  %1708 = vmatprep.subr.bf16.mxu0 %v823
  %1709 = vmatpush1.bf16.msra.mxu0 %v822
  %1710 = vmatprep.subr.bf16.mxu0 %v819
  %1711 = vmatpush1.bf16.msra.mxu0 %v818
  %1712 = vmatprep.subr.bf16.mxu0 %v815
  %1713 = vmatpush1.bf16.msra.mxu0 %v814
  %1714 = vmatprep.subr.bf16.mxu0 %v811
  %1715 = vmatpush1.bf16.msra.mxu0 %v810
  %1716 = vmatprep.subr.bf16.mxu0 %v807
  %1717 = vmatpush1.bf16.msra.mxu0 %v806
  %1718 = vmatprep.subr.bf16.mxu0 %v803
  %1719 = vmatpush1.bf16.msra.mxu0 %v802
  %1720 = vmatprep.subr.bf16.mxu0 %v799
  %1721 = vmatpush1.bf16.msra.mxu0 %v798
  %1722 = vmatprep.subr.bf16.mxu0 %v795
  %1723 = vmatpush1.bf16.msra.mxu0 %v794
  %1724 = vmatprep.subr.bf16.mxu0 0
  %1725 = vmatpush2.bf16.msra.mxu0 0
  %1726 = vmatprep.subr.bf16.mxu0 0
  %1727 = vmatpush2.bf16.msra.mxu0 0
  %1728 = vmatprep.subr.bf16.mxu0 0
  %1729 = vmatpush2.bf16.msra.mxu0 0
  %1730 = vmatprep.subr.bf16.mxu0 0
  %1731 = vmatpush2.bf16.msra.mxu0 0
  %1732 = vmatprep.subr.bf16.mxu0 0
  %1733 = vmatpush2.bf16.msra.mxu0 0
  %1734 = vmatprep.subr.bf16.mxu0 0
  %1735 = vmatpush2.bf16.msra.mxu0 0
  %1736 = vmatprep.subr.bf16.mxu0 0
  %1737 = vmatpush2.bf16.msra.mxu0 0
  %1738 = vmatprep.subr.bf16.mxu0 0
  %1739 = vmatpush2.bf16.msra.mxu0 0
  %1740 = vmatprep.mubr.bf16.mxu0 0
  %1741 = vmatmul.mubr.bf16.gmra.mxu0 %v1707
  %v1742 = vpop.f32.mrf.mxu0
  %v1743 = vadd.f32 0.0, %v1742
  %v1744 = vpop.f32.mrf.mxu0
  %v1745 = vadd.f32 0.0, %v1744
  %v1746 = vpop.f32.mrf.mxu0
  %v1747 = vpop.f32.mrf.mxu0
  %1748 = vdwg.mxu0
  %1749 = vmatprep.subr.bf16.mxu0 %v825
  %1750 = vmatpush1.bf16.msra.mxu0 %v824
  %1751 = vmatprep.subr.bf16.mxu0 %v821
  %1752 = vmatpush1.bf16.msra.mxu0 %v820
  %1753 = vmatprep.subr.bf16.mxu0 %v817
  %1754 = vmatpush1.bf16.msra.mxu0 %v816
  %1755 = vmatprep.subr.bf16.mxu0 %v813
  %1756 = vmatpush1.bf16.msra.mxu0 %v812
  %1757 = vmatprep.subr.bf16.mxu0 %v809
  %1758 = vmatpush1.bf16.msra.mxu0 %v808
  %1759 = vmatprep.subr.bf16.mxu0 %v805
  %1760 = vmatpush1.bf16.msra.mxu0 %v804
  %1761 = vmatprep.subr.bf16.mxu0 %v801
  %1762 = vmatpush1.bf16.msra.mxu0 %v800
  %1763 = vmatprep.subr.bf16.mxu0 %v797
  %1764 = vmatpush1.bf16.msra.mxu0 %v796
  %1765 = vmatprep.subr.bf16.mxu0 0
  %1766 = vmatpush2.bf16.msra.mxu0 0
  %1767 = vmatprep.subr.bf16.mxu0 0
  %1768 = vmatpush2.bf16.msra.mxu0 0
  %1769 = vmatprep.subr.bf16.mxu0 0
  %1770 = vmatpush2.bf16.msra.mxu0 0
  %1771 = vmatprep.subr.bf16.mxu0 0
  %1772 = vmatpush2.bf16.msra.mxu0 0
  %1773 = vmatprep.subr.bf16.mxu0 0
  %1774 = vmatpush2.bf16.msra.mxu0 0
  %1775 = vmatprep.subr.bf16.mxu0 0
  %1776 = vmatpush2.bf16.msra.mxu0 0
  %1777 = vmatprep.subr.bf16.mxu0 0
  %1778 = vmatpush2.bf16.msra.mxu0 0
  %1779 = vmatprep.subr.bf16.mxu0 0
  %1780 = vmatpush2.bf16.msra.mxu0 0
  %1781 = vmatprep.mubr.bf16.mxu0 0
  %1782 = vmatmul.mubr.bf16.gmra.mxu0 %v1707
  %v1783 = vpop.f32.mrf.mxu0
  %v1784 = vadd.f32 0.0, %v1783
  %v1785 = vpop.f32.mrf.mxu0
  %v1786 = vadd.f32 0.0, %v1785
  %v1787 = vpop.f32.mrf.mxu0
  %v1788 = vpop.f32.mrf.mxu0
  %1789 = vdwg.mxu0
  %v1790 = vpack.c.bf16 %v1706, %v1706
  %1791 = vmatprep.subr.bf16.mxu0 %v1097
  %1792 = vmatpush1.bf16.msra.mxu0 %v1096
  %1793 = vmatprep.subr.bf16.mxu0 %v1093
  %1794 = vmatpush1.bf16.msra.mxu0 %v1092
  %1795 = vmatprep.subr.bf16.mxu0 %v1089
  %1796 = vmatpush1.bf16.msra.mxu0 %v1088
  %1797 = vmatprep.subr.bf16.mxu0 %v1085
  %1798 = vmatpush1.bf16.msra.mxu0 %v1084
  %1799 = vmatprep.subr.bf16.mxu0 %v1081
  %1800 = vmatpush1.bf16.msra.mxu0 %v1080
  %1801 = vmatprep.subr.bf16.mxu0 %v1077
  %1802 = vmatpush1.bf16.msra.mxu0 %v1076
  %1803 = vmatprep.subr.bf16.mxu0 %v1073
  %1804 = vmatpush1.bf16.msra.mxu0 %v1072
  %1805 = vmatprep.subr.bf16.mxu0 %v1069
  %1806 = vmatpush1.bf16.msra.mxu0 %v1068
  %1807 = vmatprep.subr.bf16.mxu0 0
  %1808 = vmatpush2.bf16.msra.mxu0 0
  %1809 = vmatprep.subr.bf16.mxu0 0
  %1810 = vmatpush2.bf16.msra.mxu0 0
  %1811 = vmatprep.subr.bf16.mxu0 0
  %1812 = vmatpush2.bf16.msra.mxu0 0
  %1813 = vmatprep.subr.bf16.mxu0 0
  %1814 = vmatpush2.bf16.msra.mxu0 0
  %1815 = vmatprep.subr.bf16.mxu0 0
  %1816 = vmatpush2.bf16.msra.mxu0 0
  %1817 = vmatprep.subr.bf16.mxu0 0
  %1818 = vmatpush2.bf16.msra.mxu0 0
  %1819 = vmatprep.subr.bf16.mxu0 0
  %1820 = vmatpush2.bf16.msra.mxu0 0
  %1821 = vmatprep.subr.bf16.mxu0 0
  %1822 = vmatpush2.bf16.msra.mxu0 0
  %1823 = vmatprep.mubr.bf16.mxu0 0
  %1824 = vmatmul.mubr.bf16.gmra.mxu0 %v1790
  %v1825 = vpop.f32.mrf.mxu0
  %v1826 = vadd.f32 0.0, %v1825
  %v1827 = vpop.f32.mrf.mxu0
  %v1828 = vadd.f32 0.0, %v1827
  %v1829 = vpop.f32.mrf.mxu0
  %v1830 = vpop.f32.mrf.mxu0
  %1831 = vdwg.mxu0
  %1832 = vmatprep.subr.bf16.mxu0 %v1099
  %1833 = vmatpush1.bf16.msra.mxu0 %v1098
  %1834 = vmatprep.subr.bf16.mxu0 %v1095
  %1835 = vmatpush1.bf16.msra.mxu0 %v1094
  %1836 = vmatprep.subr.bf16.mxu0 %v1091
  %1837 = vmatpush1.bf16.msra.mxu0 %v1090
  %1838 = vmatprep.subr.bf16.mxu0 %v1087
  %1839 = vmatpush1.bf16.msra.mxu0 %v1086
  %1840 = vmatprep.subr.bf16.mxu0 %v1083
  %1841 = vmatpush1.bf16.msra.mxu0 %v1082
  %1842 = vmatprep.subr.bf16.mxu0 %v1079
  %1843 = vmatpush1.bf16.msra.mxu0 %v1078
  %1844 = vmatprep.subr.bf16.mxu0 %v1075
  %1845 = vmatpush1.bf16.msra.mxu0 %v1074
  %1846 = vmatprep.subr.bf16.mxu0 %v1071
  %1847 = vmatpush1.bf16.msra.mxu0 %v1070
  %1848 = vmatprep.subr.bf16.mxu0 0
  %1849 = vmatpush2.bf16.msra.mxu0 0
  %1850 = vmatprep.subr.bf16.mxu0 0
  %1851 = vmatpush2.bf16.msra.mxu0 0
  %1852 = vmatprep.subr.bf16.mxu0 0
  %1853 = vmatpush2.bf16.msra.mxu0 0
  %1854 = vmatprep.subr.bf16.mxu0 0
  %1855 = vmatpush2.bf16.msra.mxu0 0
  %1856 = vmatprep.subr.bf16.mxu0 0
  %1857 = vmatpush2.bf16.msra.mxu0 0
  %1858 = vmatprep.subr.bf16.mxu0 0
  %1859 = vmatpush2.bf16.msra.mxu0 0
  %1860 = vmatprep.subr.bf16.mxu0 0
  %1861 = vmatpush2.bf16.msra.mxu0 0
  %1862 = vmatprep.subr.bf16.mxu0 0
  %1863 = vmatpush2.bf16.msra.mxu0 0
  %1864 = vmatprep.mubr.bf16.mxu0 0
  %1865 = vmatmul.mubr.bf16.gmra.mxu0 %v1790
  %v1866 = vpop.f32.mrf.mxu0
  %v1867 = vadd.f32 0.0, %v1866
  %v1868 = vpop.f32.mrf.mxu0
  %v1869 = vadd.f32 0.0, %v1868
  %v1870 = vpop.f32.mrf.mxu0
  %v1871 = vpop.f32.mrf.mxu0
  %1872 = vdwg.mxu0
  %s1873 = scalar_lea.vmem [#allocation2], 96
  %v1874 = vld [vmem:[%s1873] sm:$0xff]
  %v1875 = vld [vmem:[%s1873 + $0x8] sm:$0xff]
  %v1876 = vld [vmem:[%s1873 + $0x10] sm:$0xff]
  %v1877 = vld [vmem:[%s1873 + $0x18] sm:$0xff]
  %v1878 = vadd.f32 %v1874, %v1743
  %v1879 = vadd.f32 %v1875, %v1745
  %v1880 = vadd.f32 %v1876, %v1784
  %v1881 = vadd.f32 %v1877, %v1786
  %s1882 = scalar_lea.vmem [#allocation3], 128
  %v1883 = vld [vmem:[%s1882] sm:$0xff]
  %v1884 = vld [vmem:[%s1882 + $0x8] sm:$0xff]
  %v1885 = vld [vmem:[%s1882 + $0x10] sm:$0xff]
  %v1886 = vld [vmem:[%s1882 + $0x18] sm:$0xff]
  %v1887 = vadd.f32 %v1883, %v1826
  %v1888 = vadd.f32 %v1884, %v1828
  %v1889 = vadd.f32 %v1885, %v1867
  %v1890 = vadd.f32 %v1886, %v1869
  %v1891 = vmul.f32 %v1878, 0.5
  %v1892 = vtanh.pop %v1891
  %v1893 = vmul.f32 %v1892, 0.5
  %v1894 = vadd.f32 %v1893, 0.5
  %v1895 = vmul.f32 %v1879, 0.5
  %v1896 = vtanh.pop %v1895
  %v1897 = vmul.f32 %v1896, 0.5
  %v1898 = vadd.f32 %v1897, 0.5
  %v1899 = vtanh.pop %v1880
  %v1900 = vmul.f32 %v1881, 0.5
  %v1901 = vtanh.pop %v1900
  %v1902 = vmul.f32 %v1901, 0.5
  %v1903 = vadd.f32 %v1902, 0.5
  %v1904 = vmul.f32 %v1898, %v1686
  %v1905 = vmul.f32 %v1894, %v1899
  %v1906 = vadd.f32 %v1904, %v1905
  %v1907 = vtanh.pop %v1906
  %v1908 = vmul.f32 %v1903, %v1907
  %v1909 = vmul.f32 %v1887, 0.5
  %v1910 = vtanh.pop %v1909
  %v1911 = vmul.f32 %v1910, 0.5
  %v1912 = vadd.f32 %v1911, 0.5
  %v1913 = vmul.f32 %v1888, 0.5
  %v1914 = vtanh.pop %v1913
  %v1915 = vmul.f32 %v1914, 0.5
  %v1916 = vadd.f32 %v1915, 0.5
  %v1917 = vtanh.pop %v1889
  %v1918 = vmul.f32 %v1890, 0.5
  %v1919 = vtanh.pop %v1918
  %v1920 = vmul.f32 %v1919, 0.5
  %v1921 = vadd.f32 %v1920, 0.5
  %v1922 = vmul.f32 %v1916, %v1704
  %v1923 = vmul.f32 %v1912, %v1917
  %v1924 = vadd.f32 %v1922, %v1923
  %v1925 = vtanh.pop %v1924
  %v1926 = vmul.f32 %v1921, %v1925
  %v1927 = vpack.c.bf16 %v1908, %v1908
  %1928 = vmatprep.subr.bf16.mxu0 %v823
  %1929 = vmatpush1.bf16.msra.mxu0 %v822
  %1930 = vmatprep.subr.bf16.mxu0 %v819
  %1931 = vmatpush1.bf16.msra.mxu0 %v818
  %1932 = vmatprep.subr.bf16.mxu0 %v815
  %1933 = vmatpush1.bf16.msra.mxu0 %v814
  %1934 = vmatprep.subr.bf16.mxu0 %v811
  %1935 = vmatpush1.bf16.msra.mxu0 %v810
  %1936 = vmatprep.subr.bf16.mxu0 %v807
  %1937 = vmatpush1.bf16.msra.mxu0 %v806
  %1938 = vmatprep.subr.bf16.mxu0 %v803
  %1939 = vmatpush1.bf16.msra.mxu0 %v802
  %1940 = vmatprep.subr.bf16.mxu0 %v799
  %1941 = vmatpush1.bf16.msra.mxu0 %v798
  %1942 = vmatprep.subr.bf16.mxu0 %v795
  %1943 = vmatpush1.bf16.msra.mxu0 %v794
  %1944 = vmatprep.subr.bf16.mxu0 0
  %1945 = vmatpush2.bf16.msra.mxu0 0
  %1946 = vmatprep.subr.bf16.mxu0 0
  %1947 = vmatpush2.bf16.msra.mxu0 0
  %1948 = vmatprep.subr.bf16.mxu0 0
  %1949 = vmatpush2.bf16.msra.mxu0 0
  %1950 = vmatprep.subr.bf16.mxu0 0
  %1951 = vmatpush2.bf16.msra.mxu0 0
  %1952 = vmatprep.subr.bf16.mxu0 0
  %1953 = vmatpush2.bf16.msra.mxu0 0
  %1954 = vmatprep.subr.bf16.mxu0 0
  %1955 = vmatpush2.bf16.msra.mxu0 0
  %1956 = vmatprep.subr.bf16.mxu0 0
  %1957 = vmatpush2.bf16.msra.mxu0 0
  %1958 = vmatprep.subr.bf16.mxu0 0
  %1959 = vmatpush2.bf16.msra.mxu0 0
  %1960 = vmatprep.mubr.bf16.mxu0 0
  %1961 = vmatmul.mubr.bf16.gmra.mxu0 %v1927
  %v1962 = vpop.f32.mrf.mxu0
  %v1963 = vadd.f32 0.0, %v1962
  %v1964 = vpop.f32.mrf.mxu0
  %v1965 = vadd.f32 0.0, %v1964
  %v1966 = vpop.f32.mrf.mxu0
  %v1967 = vpop.f32.mrf.mxu0
  %1968 = vdwg.mxu0
  %1969 = vmatprep.subr.bf16.mxu0 %v825
  %1970 = vmatpush1.bf16.msra.mxu0 %v824
  %1971 = vmatprep.subr.bf16.mxu0 %v821
  %1972 = vmatpush1.bf16.msra.mxu0 %v820
  %1973 = vmatprep.subr.bf16.mxu0 %v817
  %1974 = vmatpush1.bf16.msra.mxu0 %v816
  %1975 = vmatprep.subr.bf16.mxu0 %v813
  %1976 = vmatpush1.bf16.msra.mxu0 %v812
  %1977 = vmatprep.subr.bf16.mxu0 %v809
  %1978 = vmatpush1.bf16.msra.mxu0 %v808
  %1979 = vmatprep.subr.bf16.mxu0 %v805
  %1980 = vmatpush1.bf16.msra.mxu0 %v804
  %1981 = vmatprep.subr.bf16.mxu0 %v801
  %1982 = vmatpush1.bf16.msra.mxu0 %v800
  %1983 = vmatprep.subr.bf16.mxu0 %v797
  %1984 = vmatpush1.bf16.msra.mxu0 %v796
  %1985 = vmatprep.subr.bf16.mxu0 0
  %1986 = vmatpush2.bf16.msra.mxu0 0
  %1987 = vmatprep.subr.bf16.mxu0 0
  %1988 = vmatpush2.bf16.msra.mxu0 0
  %1989 = vmatprep.subr.bf16.mxu0 0
  %1990 = vmatpush2.bf16.msra.mxu0 0
  %1991 = vmatprep.subr.bf16.mxu0 0
  %1992 = vmatpush2.bf16.msra.mxu0 0
  %1993 = vmatprep.subr.bf16.mxu0 0
  %1994 = vmatpush2.bf16.msra.mxu0 0
  %1995 = vmatprep.subr.bf16.mxu0 0
  %1996 = vmatpush2.bf16.msra.mxu0 0
  %1997 = vmatprep.subr.bf16.mxu0 0
  %1998 = vmatpush2.bf16.msra.mxu0 0
  %1999 = vmatprep.subr.bf16.mxu0 0
  %2000 = vmatpush2.bf16.msra.mxu0 0
  %2001 = vmatprep.mubr.bf16.mxu0 0
  %2002 = vmatmul.mubr.bf16.gmra.mxu0 %v1927
  %v2003 = vpop.f32.mrf.mxu0
  %v2004 = vadd.f32 0.0, %v2003
  %v2005 = vpop.f32.mrf.mxu0
  %v2006 = vadd.f32 0.0, %v2005
  %v2007 = vpop.f32.mrf.mxu0
  %v2008 = vpop.f32.mrf.mxu0
  %2009 = vdwg.mxu0
  %v2010 = vpack.c.bf16 %v1926, %v1926
  %2011 = vmatprep.subr.bf16.mxu0 %v1097
  %2012 = vmatpush1.bf16.msra.mxu0 %v1096
  %2013 = vmatprep.subr.bf16.mxu0 %v1093
  %2014 = vmatpush1.bf16.msra.mxu0 %v1092
  %2015 = vmatprep.subr.bf16.mxu0 %v1089
  %2016 = vmatpush1.bf16.msra.mxu0 %v1088
  %2017 = vmatprep.subr.bf16.mxu0 %v1085
  %2018 = vmatpush1.bf16.msra.mxu0 %v1084
  %2019 = vmatprep.subr.bf16.mxu0 %v1081
  %2020 = vmatpush1.bf16.msra.mxu0 %v1080
  %2021 = vmatprep.subr.bf16.mxu0 %v1077
  %2022 = vmatpush1.bf16.msra.mxu0 %v1076
  %2023 = vmatprep.subr.bf16.mxu0 %v1073
  %2024 = vmatpush1.bf16.msra.mxu0 %v1072
  %2025 = vmatprep.subr.bf16.mxu0 %v1069
  %2026 = vmatpush1.bf16.msra.mxu0 %v1068
  %2027 = vmatprep.subr.bf16.mxu0 0
  %2028 = vmatpush2.bf16.msra.mxu0 0
  %2029 = vmatprep.subr.bf16.mxu0 0
  %2030 = vmatpush2.bf16.msra.mxu0 0
  %2031 = vmatprep.subr.bf16.mxu0 0
  %2032 = vmatpush2.bf16.msra.mxu0 0
  %2033 = vmatprep.subr.bf16.mxu0 0
  %2034 = vmatpush2.bf16.msra.mxu0 0
  %2035 = vmatprep.subr.bf16.mxu0 0
  %2036 = vmatpush2.bf16.msra.mxu0 0
  %2037 = vmatprep.subr.bf16.mxu0 0
  %2038 = vmatpush2.bf16.msra.mxu0 0
  %2039 = vmatprep.subr.bf16.mxu0 0
  %2040 = vmatpush2.bf16.msra.mxu0 0
  %2041 = vmatprep.subr.bf16.mxu0 0
  %2042 = vmatpush2.bf16.msra.mxu0 0
  %2043 = vmatprep.mubr.bf16.mxu0 0
  %2044 = vmatmul.mubr.bf16.gmra.mxu0 %v2010
  %v2045 = vpop.f32.mrf.mxu0
  %v2046 = vadd.f32 0.0, %v2045
  %v2047 = vpop.f32.mrf.mxu0
  %v2048 = vadd.f32 0.0, %v2047
  %v2049 = vpop.f32.mrf.mxu0
  %v2050 = vpop.f32.mrf.mxu0
  %2051 = vdwg.mxu0
  %2052 = vmatprep.subr.bf16.mxu0 %v1099
  %2053 = vmatpush1.bf16.msra.mxu0 %v1098
  %2054 = vmatprep.subr.bf16.mxu0 %v1095
  %2055 = vmatpush1.bf16.msra.mxu0 %v1094
  %2056 = vmatprep.subr.bf16.mxu0 %v1091
  %2057 = vmatpush1.bf16.msra.mxu0 %v1090
  %2058 = vmatprep.subr.bf16.mxu0 %v1087
  %2059 = vmatpush1.bf16.msra.mxu0 %v1086
  %2060 = vmatprep.subr.bf16.mxu0 %v1083
  %2061 = vmatpush1.bf16.msra.mxu0 %v1082
  %2062 = vmatprep.subr.bf16.mxu0 %v1079
  %2063 = vmatpush1.bf16.msra.mxu0 %v1078
  %2064 = vmatprep.subr.bf16.mxu0 %v1075
  %2065 = vmatpush1.bf16.msra.mxu0 %v1074
  %2066 = vmatprep.subr.bf16.mxu0 %v1071
  %2067 = vmatpush1.bf16.msra.mxu0 %v1070
  %2068 = vmatprep.subr.bf16.mxu0 0
  %2069 = vmatpush2.bf16.msra.mxu0 0
  %2070 = vmatprep.subr.bf16.mxu0 0
  %2071 = vmatpush2.bf16.msra.mxu0 0
  %2072 = vmatprep.subr.bf16.mxu0 0
  %2073 = vmatpush2.bf16.msra.mxu0 0
  %2074 = vmatprep.subr.bf16.mxu0 0
  %2075 = vmatpush2.bf16.msra.mxu0 0
  %2076 = vmatprep.subr.bf16.mxu0 0
  %2077 = vmatpush2.bf16.msra.mxu0 0
  %2078 = vmatprep.subr.bf16.mxu0 0
  %2079 = vmatpush2.bf16.msra.mxu0 0
  %2080 = vmatprep.subr.bf16.mxu0 0
  %2081 = vmatpush2.bf16.msra.mxu0 0
  %2082 = vmatprep.subr.bf16.mxu0 0
  %2083 = vmatpush2.bf16.msra.mxu0 0
  %2084 = vmatprep.mubr.bf16.mxu0 0
  %2085 = vmatmul.mubr.bf16.gmra.mxu0 %v2010
  %v2086 = vpop.f32.mrf.mxu0
  %v2087 = vadd.f32 0.0, %v2086
  %v2088 = vpop.f32.mrf.mxu0
  %v2089 = vadd.f32 0.0, %v2088
  %v2090 = vpop.f32.mrf.mxu0
  %v2091 = vpop.f32.mrf.mxu0
  %2092 = vdwg.mxu0
  %s2093 = scalar_lea.vmem [#allocation2], 128
  %v2094 = vld [vmem:[%s2093] sm:$0xff]
  %v2095 = vld [vmem:[%s2093 + $0x8] sm:$0xff]
  %v2096 = vld [vmem:[%s2093 + $0x10] sm:$0xff]
  %v2097 = vld [vmem:[%s2093 + $0x18] sm:$0xff]
  %v2098 = vadd.f32 %v2094, %v1963
  %v2099 = vadd.f32 %v2095, %v1965
  %v2100 = vadd.f32 %v2096, %v2004
  %v2101 = vadd.f32 %v2097, %v2006
  %s2102 = scalar_lea.vmem [#allocation3], 96
  %v2103 = vld [vmem:[%s2102] sm:$0xff]
  %v2104 = vld [vmem:[%s2102 + $0x8] sm:$0xff]
  %v2105 = vld [vmem:[%s2102 + $0x10] sm:$0xff]
  %v2106 = vld [vmem:[%s2102 + $0x18] sm:$0xff]
  %v2107 = vadd.f32 %v2103, %v2046
  %v2108 = vadd.f32 %v2104, %v2048
  %v2109 = vadd.f32 %v2105, %v2087
  %v2110 = vadd.f32 %v2106, %v2089
  %v2111 = vmul.f32 %v2098, 0.5
  %v2112 = vtanh.pop %v2111
  %v2113 = vmul.f32 %v2112, 0.5
  %v2114 = vadd.f32 %v2113, 0.5
  %v2115 = vmul.f32 %v2099, 0.5
  %v2116 = vtanh.pop %v2115
  %v2117 = vmul.f32 %v2116, 0.5
  %v2118 = vadd.f32 %v2117, 0.5
  %v2119 = vtanh.pop %v2100
  %v2120 = vmul.f32 %v2101, 0.5
  %v2121 = vtanh.pop %v2120
  %v2122 = vmul.f32 %v2121, 0.5
  %v2123 = vadd.f32 %v2122, 0.5
  %v2124 = vmul.f32 %v2118, %v1906
  %v2125 = vmul.f32 %v2114, %v2119
  %v2126 = vadd.f32 %v2124, %v2125
  %v2127 = vtanh.pop %v2126
  %v2128 = vmul.f32 %v2123, %v2127
  %v2129 = vmul.f32 %v2107, 0.5
  %v2130 = vtanh.pop %v2129
  %v2131 = vmul.f32 %v2130, 0.5
  %v2132 = vadd.f32 %v2131, 0.5
  %v2133 = vmul.f32 %v2108, 0.5
  %v2134 = vtanh.pop %v2133
  %v2135 = vmul.f32 %v2134, 0.5
  %v2136 = vadd.f32 %v2135, 0.5
  %v2137 = vtanh.pop %v2109
  %v2138 = vmul.f32 %v2110, 0.5
  %v2139 = vtanh.pop %v2138
  %v2140 = vmul.f32 %v2139, 0.5
  %v2141 = vadd.f32 %v2140, 0.5
  %v2142 = vmul.f32 %v2136, %v1924
  %v2143 = vmul.f32 %v2132, %v2137
  %v2144 = vadd.f32 %v2142, %v2143
  %v2145 = vtanh.pop %v2144
  %v2146 = vmul.f32 %v2141, %v2145
  %v2147 = vpack.c.bf16 %v2128, %v2128
  %2148 = vmatprep.subr.bf16.mxu0 %v823
  %2149 = vmatpush1.bf16.msra.mxu0 %v822
  %2150 = vmatprep.subr.bf16.mxu0 %v819
  %2151 = vmatpush1.bf16.msra.mxu0 %v818
  %2152 = vmatprep.subr.bf16.mxu0 %v815
  %2153 = vmatpush1.bf16.msra.mxu0 %v814
  %2154 = vmatprep.subr.bf16.mxu0 %v811
  %2155 = vmatpush1.bf16.msra.mxu0 %v810
  %2156 = vmatprep.subr.bf16.mxu0 %v807
  %2157 = vmatpush1.bf16.msra.mxu0 %v806
  %2158 = vmatprep.subr.bf16.mxu0 %v803
  %2159 = vmatpush1.bf16.msra.mxu0 %v802
  %2160 = vmatprep.subr.bf16.mxu0 %v799
  %2161 = vmatpush1.bf16.msra.mxu0 %v798
  %2162 = vmatprep.subr.bf16.mxu0 %v795
  %2163 = vmatpush1.bf16.msra.mxu0 %v794
  %2164 = vmatprep.subr.bf16.mxu0 0
  %2165 = vmatpush2.bf16.msra.mxu0 0
  %2166 = vmatprep.subr.bf16.mxu0 0
  %2167 = vmatpush2.bf16.msra.mxu0 0
  %2168 = vmatprep.subr.bf16.mxu0 0
  %2169 = vmatpush2.bf16.msra.mxu0 0
  %2170 = vmatprep.subr.bf16.mxu0 0
  %2171 = vmatpush2.bf16.msra.mxu0 0
  %2172 = vmatprep.subr.bf16.mxu0 0
  %2173 = vmatpush2.bf16.msra.mxu0 0
  %2174 = vmatprep.subr.bf16.mxu0 0
  %2175 = vmatpush2.bf16.msra.mxu0 0
  %2176 = vmatprep.subr.bf16.mxu0 0
  %2177 = vmatpush2.bf16.msra.mxu0 0
  %2178 = vmatprep.subr.bf16.mxu0 0
  %2179 = vmatpush2.bf16.msra.mxu0 0
  %2180 = vmatprep.mubr.bf16.mxu0 0
  %2181 = vmatmul.mubr.bf16.gmra.mxu0 %v2147
  %v2182 = vpop.f32.mrf.mxu0
  %v2183 = vadd.f32 0.0, %v2182
  %v2184 = vpop.f32.mrf.mxu0
  %v2185 = vadd.f32 0.0, %v2184
  %v2186 = vpop.f32.mrf.mxu0
  %v2187 = vpop.f32.mrf.mxu0
  %2188 = vdwg.mxu0
  %2189 = vmatprep.subr.bf16.mxu0 %v825
  %2190 = vmatpush1.bf16.msra.mxu0 %v824
  %2191 = vmatprep.subr.bf16.mxu0 %v821
  %2192 = vmatpush1.bf16.msra.mxu0 %v820
  %2193 = vmatprep.subr.bf16.mxu0 %v817
  %2194 = vmatpush1.bf16.msra.mxu0 %v816
  %2195 = vmatprep.subr.bf16.mxu0 %v813
  %2196 = vmatpush1.bf16.msra.mxu0 %v812
  %2197 = vmatprep.subr.bf16.mxu0 %v809
  %2198 = vmatpush1.bf16.msra.mxu0 %v808
  %2199 = vmatprep.subr.bf16.mxu0 %v805
  %2200 = vmatpush1.bf16.msra.mxu0 %v804
  %2201 = vmatprep.subr.bf16.mxu0 %v801
  %2202 = vmatpush1.bf16.msra.mxu0 %v800
  %2203 = vmatprep.subr.bf16.mxu0 %v797
  %2204 = vmatpush1.bf16.msra.mxu0 %v796
  %2205 = vmatprep.subr.bf16.mxu0 0
  %2206 = vmatpush2.bf16.msra.mxu0 0
  %2207 = vmatprep.subr.bf16.mxu0 0
  %2208 = vmatpush2.bf16.msra.mxu0 0
  %2209 = vmatprep.subr.bf16.mxu0 0
  %2210 = vmatpush2.bf16.msra.mxu0 0
  %2211 = vmatprep.subr.bf16.mxu0 0
  %2212 = vmatpush2.bf16.msra.mxu0 0
  %2213 = vmatprep.subr.bf16.mxu0 0
  %2214 = vmatpush2.bf16.msra.mxu0 0
  %2215 = vmatprep.subr.bf16.mxu0 0
  %2216 = vmatpush2.bf16.msra.mxu0 0
  %2217 = vmatprep.subr.bf16.mxu0 0
  %2218 = vmatpush2.bf16.msra.mxu0 0
  %2219 = vmatprep.subr.bf16.mxu0 0
  %2220 = vmatpush2.bf16.msra.mxu0 0
  %2221 = vmatprep.mubr.bf16.mxu0 0
  %2222 = vmatmul.mubr.bf16.gmra.mxu0 %v2147
  %v2223 = vpop.f32.mrf.mxu0
  %v2224 = vadd.f32 0.0, %v2223
  %v2225 = vpop.f32.mrf.mxu0
  %v2226 = vadd.f32 0.0, %v2225
  %v2227 = vpop.f32.mrf.mxu0
  %v2228 = vpop.f32.mrf.mxu0
  %2229 = vdwg.mxu0
  %v2230 = vpack.c.bf16 %v2146, %v2146
  %2231 = vmatprep.subr.bf16.mxu0 %v1097
  %2232 = vmatpush1.bf16.msra.mxu0 %v1096
  %2233 = vmatprep.subr.bf16.mxu0 %v1093
  %2234 = vmatpush1.bf16.msra.mxu0 %v1092
  %2235 = vmatprep.subr.bf16.mxu0 %v1089
  %2236 = vmatpush1.bf16.msra.mxu0 %v1088
  %2237 = vmatprep.subr.bf16.mxu0 %v1085
  %2238 = vmatpush1.bf16.msra.mxu0 %v1084
  %2239 = vmatprep.subr.bf16.mxu0 %v1081
  %2240 = vmatpush1.bf16.msra.mxu0 %v1080
  %2241 = vmatprep.subr.bf16.mxu0 %v1077
  %2242 = vmatpush1.bf16.msra.mxu0 %v1076
  %2243 = vmatprep.subr.bf16.mxu0 %v1073
  %2244 = vmatpush1.bf16.msra.mxu0 %v1072
  %2245 = vmatprep.subr.bf16.mxu0 %v1069
  %2246 = vmatpush1.bf16.msra.mxu0 %v1068
  %2247 = vmatprep.subr.bf16.mxu0 0
  %2248 = vmatpush2.bf16.msra.mxu0 0
  %2249 = vmatprep.subr.bf16.mxu0 0
  %2250 = vmatpush2.bf16.msra.mxu0 0
  %2251 = vmatprep.subr.bf16.mxu0 0
  %2252 = vmatpush2.bf16.msra.mxu0 0
  %2253 = vmatprep.subr.bf16.mxu0 0
  %2254 = vmatpush2.bf16.msra.mxu0 0
  %2255 = vmatprep.subr.bf16.mxu0 0
  %2256 = vmatpush2.bf16.msra.mxu0 0
  %2257 = vmatprep.subr.bf16.mxu0 0
  %2258 = vmatpush2.bf16.msra.mxu0 0
  %2259 = vmatprep.subr.bf16.mxu0 0
  %2260 = vmatpush2.bf16.msra.mxu0 0
  %2261 = vmatprep.subr.bf16.mxu0 0
  %2262 = vmatpush2.bf16.msra.mxu0 0
  %2263 = vmatprep.mubr.bf16.mxu0 0
  %2264 = vmatmul.mubr.bf16.gmra.mxu0 %v2230
  %v2265 = vpop.f32.mrf.mxu0
  %v2266 = vadd.f32 0.0, %v2265
  %v2267 = vpop.f32.mrf.mxu0
  %v2268 = vadd.f32 0.0, %v2267
  %v2269 = vpop.f32.mrf.mxu0
  %v2270 = vpop.f32.mrf.mxu0
  %2271 = vdwg.mxu0
  %2272 = vmatprep.subr.bf16.mxu0 %v1099
  %2273 = vmatpush1.bf16.msra.mxu0 %v1098
  %2274 = vmatprep.subr.bf16.mxu0 %v1095
  %2275 = vmatpush1.bf16.msra.mxu0 %v1094
  %2276 = vmatprep.subr.bf16.mxu0 %v1091
  %2277 = vmatpush1.bf16.msra.mxu0 %v1090
  %2278 = vmatprep.subr.bf16.mxu0 %v1087
  %2279 = vmatpush1.bf16.msra.mxu0 %v1086
  %2280 = vmatprep.subr.bf16.mxu0 %v1083
  %2281 = vmatpush1.bf16.msra.mxu0 %v1082
  %2282 = vmatprep.subr.bf16.mxu0 %v1079
  %2283 = vmatpush1.bf16.msra.mxu0 %v1078
  %2284 = vmatprep.subr.bf16.mxu0 %v1075
  %2285 = vmatpush1.bf16.msra.mxu0 %v1074
  %2286 = vmatprep.subr.bf16.mxu0 %v1071
  %2287 = vmatpush1.bf16.msra.mxu0 %v1070
  %2288 = vmatprep.subr.bf16.mxu0 0
  %2289 = vmatpush2.bf16.msra.mxu0 0
  %2290 = vmatprep.subr.bf16.mxu0 0
  %2291 = vmatpush2.bf16.msra.mxu0 0
  %2292 = vmatprep.subr.bf16.mxu0 0
  %2293 = vmatpush2.bf16.msra.mxu0 0
  %2294 = vmatprep.subr.bf16.mxu0 0
  %2295 = vmatpush2.bf16.msra.mxu0 0
  %2296 = vmatprep.subr.bf16.mxu0 0
  %2297 = vmatpush2.bf16.msra.mxu0 0
  %2298 = vmatprep.subr.bf16.mxu0 0
  %2299 = vmatpush2.bf16.msra.mxu0 0
  %2300 = vmatprep.subr.bf16.mxu0 0
  %2301 = vmatpush2.bf16.msra.mxu0 0
  %2302 = vmatprep.subr.bf16.mxu0 0
  %2303 = vmatpush2.bf16.msra.mxu0 0
  %2304 = vmatprep.mubr.bf16.mxu0 0
  %2305 = vmatmul.mubr.bf16.gmra.mxu0 %v2230
  %v2306 = vpop.f32.mrf.mxu0
  %v2307 = vadd.f32 0.0, %v2306
  %v2308 = vpop.f32.mrf.mxu0
  %v2309 = vadd.f32 0.0, %v2308
  %v2310 = vpop.f32.mrf.mxu0
  %v2311 = vpop.f32.mrf.mxu0
  %2312 = vdwg.mxu0
  %s2313 = scalar_lea.vmem [#allocation2], 160
  %v2314 = vld [vmem:[%s2313] sm:$0xff]
  %v2315 = vld [vmem:[%s2313 + $0x8] sm:$0xff]
  %v2316 = vld [vmem:[%s2313 + $0x10] sm:$0xff]
  %v2317 = vld [vmem:[%s2313 + $0x18] sm:$0xff]
  %v2318 = vadd.f32 %v2314, %v2183
  %v2319 = vadd.f32 %v2315, %v2185
  %v2320 = vadd.f32 %v2316, %v2224
  %v2321 = vadd.f32 %v2317, %v2226
  %s2322 = scalar_lea.vmem [#allocation3], 64
  %v2323 = vld [vmem:[%s2322] sm:$0xff]
  %v2324 = vld [vmem:[%s2322 + $0x8] sm:$0xff]
  %v2325 = vld [vmem:[%s2322 + $0x10] sm:$0xff]
  %v2326 = vld [vmem:[%s2322 + $0x18] sm:$0xff]
  %v2327 = vadd.f32 %v2323, %v2266
  %v2328 = vadd.f32 %v2324, %v2268
  %v2329 = vadd.f32 %v2325, %v2307
  %v2330 = vadd.f32 %v2326, %v2309
  %v2331 = vmul.f32 %v2318, 0.5
  %v2332 = vtanh.pop %v2331
  %v2333 = vmul.f32 %v2332, 0.5
  %v2334 = vadd.f32 %v2333, 0.5
  %v2335 = vmul.f32 %v2319, 0.5
  %v2336 = vtanh.pop %v2335
  %v2337 = vmul.f32 %v2336, 0.5
  %v2338 = vadd.f32 %v2337, 0.5
  %v2339 = vtanh.pop %v2320
  %v2340 = vmul.f32 %v2321, 0.5
  %v2341 = vtanh.pop %v2340
  %v2342 = vmul.f32 %v2341, 0.5
  %v2343 = vadd.f32 %v2342, 0.5
  %v2344 = vmul.f32 %v2338, %v2126
  %v2345 = vmul.f32 %v2334, %v2339
  %v2346 = vadd.f32 %v2344, %v2345
  %v2347 = vtanh.pop %v2346
  %v2348 = vmul.f32 %v2343, %v2347
  %v2349 = vmul.f32 %v2327, 0.5
  %v2350 = vtanh.pop %v2349
  %v2351 = vmul.f32 %v2350, 0.5
  %v2352 = vadd.f32 %v2351, 0.5
  %v2353 = vmul.f32 %v2328, 0.5
  %v2354 = vtanh.pop %v2353
  %v2355 = vmul.f32 %v2354, 0.5
  %v2356 = vadd.f32 %v2355, 0.5
  %v2357 = vtanh.pop %v2329
  %v2358 = vmul.f32 %v2330, 0.5
  %v2359 = vtanh.pop %v2358
  %v2360 = vmul.f32 %v2359, 0.5
  %v2361 = vadd.f32 %v2360, 0.5
  %v2362 = vmul.f32 %v2356, %v2144
  %v2363 = vmul.f32 %v2352, %v2357
  %v2364 = vadd.f32 %v2362, %v2363
  %v2365 = vtanh.pop %v2364
  %v2366 = vmul.f32 %v2361, %v2365
  %v2367 = vpack.c.bf16 %v2348, %v2348
  %2368 = vmatprep.subr.bf16.mxu0 %v823
  %2369 = vmatpush1.bf16.msra.mxu0 %v822
  %2370 = vmatprep.subr.bf16.mxu0 %v819
  %2371 = vmatpush1.bf16.msra.mxu0 %v818
  %2372 = vmatprep.subr.bf16.mxu0 %v815
  %2373 = vmatpush1.bf16.msra.mxu0 %v814
  %2374 = vmatprep.subr.bf16.mxu0 %v811
  %2375 = vmatpush1.bf16.msra.mxu0 %v810
  %2376 = vmatprep.subr.bf16.mxu0 %v807
  %2377 = vmatpush1.bf16.msra.mxu0 %v806
  %2378 = vmatprep.subr.bf16.mxu0 %v803
  %2379 = vmatpush1.bf16.msra.mxu0 %v802
  %2380 = vmatprep.subr.bf16.mxu0 %v799
  %2381 = vmatpush1.bf16.msra.mxu0 %v798
  %2382 = vmatprep.subr.bf16.mxu0 %v795
  %2383 = vmatpush1.bf16.msra.mxu0 %v794
  %2384 = vmatprep.subr.bf16.mxu0 0
  %2385 = vmatpush2.bf16.msra.mxu0 0
  %2386 = vmatprep.subr.bf16.mxu0 0
  %2387 = vmatpush2.bf16.msra.mxu0 0
  %2388 = vmatprep.subr.bf16.mxu0 0
  %2389 = vmatpush2.bf16.msra.mxu0 0
  %2390 = vmatprep.subr.bf16.mxu0 0
  %2391 = vmatpush2.bf16.msra.mxu0 0
  %2392 = vmatprep.subr.bf16.mxu0 0
  %2393 = vmatpush2.bf16.msra.mxu0 0
  %2394 = vmatprep.subr.bf16.mxu0 0
  %2395 = vmatpush2.bf16.msra.mxu0 0
  %2396 = vmatprep.subr.bf16.mxu0 0
  %2397 = vmatpush2.bf16.msra.mxu0 0
  %2398 = vmatprep.subr.bf16.mxu0 0
  %2399 = vmatpush2.bf16.msra.mxu0 0
  %2400 = vmatprep.mubr.bf16.mxu0 0
  %2401 = vmatmul.mubr.bf16.gmra.mxu0 %v2367
  %v2402 = vpop.f32.mrf.mxu0
  %v2403 = vadd.f32 0.0, %v2402
  %v2404 = vpop.f32.mrf.mxu0
  %v2405 = vadd.f32 0.0, %v2404
  %v2406 = vpop.f32.mrf.mxu0
  %v2407 = vpop.f32.mrf.mxu0
  %2408 = vdwg.mxu0
  %2409 = vmatprep.subr.bf16.mxu0 %v825
  %2410 = vmatpush1.bf16.msra.mxu0 %v824
  %2411 = vmatprep.subr.bf16.mxu0 %v821
  %2412 = vmatpush1.bf16.msra.mxu0 %v820
  %2413 = vmatprep.subr.bf16.mxu0 %v817
  %2414 = vmatpush1.bf16.msra.mxu0 %v816
  %2415 = vmatprep.subr.bf16.mxu0 %v813
  %2416 = vmatpush1.bf16.msra.mxu0 %v812
  %2417 = vmatprep.subr.bf16.mxu0 %v809
  %2418 = vmatpush1.bf16.msra.mxu0 %v808
  %2419 = vmatprep.subr.bf16.mxu0 %v805
  %2420 = vmatpush1.bf16.msra.mxu0 %v804
  %2421 = vmatprep.subr.bf16.mxu0 %v801
  %2422 = vmatpush1.bf16.msra.mxu0 %v800
  %2423 = vmatprep.subr.bf16.mxu0 %v797
  %2424 = vmatpush1.bf16.msra.mxu0 %v796
  %2425 = vmatprep.subr.bf16.mxu0 0
  %2426 = vmatpush2.bf16.msra.mxu0 0
  %2427 = vmatprep.subr.bf16.mxu0 0
  %2428 = vmatpush2.bf16.msra.mxu0 0
  %2429 = vmatprep.subr.bf16.mxu0 0
  %2430 = vmatpush2.bf16.msra.mxu0 0
  %2431 = vmatprep.subr.bf16.mxu0 0
  %2432 = vmatpush2.bf16.msra.mxu0 0
  %2433 = vmatprep.subr.bf16.mxu0 0
  %2434 = vmatpush2.bf16.msra.mxu0 0
  %2435 = vmatprep.subr.bf16.mxu0 0
  %2436 = vmatpush2.bf16.msra.mxu0 0
  %2437 = vmatprep.subr.bf16.mxu0 0
  %2438 = vmatpush2.bf16.msra.mxu0 0
  %2439 = vmatprep.subr.bf16.mxu0 0
  %2440 = vmatpush2.bf16.msra.mxu0 0
  %2441 = vmatprep.mubr.bf16.mxu0 0
  %2442 = vmatmul.mubr.bf16.gmra.mxu0 %v2367
  %v2443 = vpop.f32.mrf.mxu0
  %v2444 = vadd.f32 0.0, %v2443
  %v2445 = vpop.f32.mrf.mxu0
  %v2446 = vadd.f32 0.0, %v2445
  %v2447 = vpop.f32.mrf.mxu0
  %v2448 = vpop.f32.mrf.mxu0
  %2449 = vdwg.mxu0
  %v2450 = vpack.c.bf16 %v2366, %v2366
  %2451 = vmatprep.subr.bf16.mxu0 %v1097
  %2452 = vmatpush1.bf16.msra.mxu0 %v1096
  %2453 = vmatprep.subr.bf16.mxu0 %v1093
  %2454 = vmatpush1.bf16.msra.mxu0 %v1092
  %2455 = vmatprep.subr.bf16.mxu0 %v1089
  %2456 = vmatpush1.bf16.msra.mxu0 %v1088
  %2457 = vmatprep.subr.bf16.mxu0 %v1085
  %2458 = vmatpush1.bf16.msra.mxu0 %v1084
  %2459 = vmatprep.subr.bf16.mxu0 %v1081
  %2460 = vmatpush1.bf16.msra.mxu0 %v1080
  %2461 = vmatprep.subr.bf16.mxu0 %v1077
  %2462 = vmatpush1.bf16.msra.mxu0 %v1076
  %2463 = vmatprep.subr.bf16.mxu0 %v1073
  %2464 = vmatpush1.bf16.msra.mxu0 %v1072
  %2465 = vmatprep.subr.bf16.mxu0 %v1069
  %2466 = vmatpush1.bf16.msra.mxu0 %v1068
  %2467 = vmatprep.subr.bf16.mxu0 0
  %2468 = vmatpush2.bf16.msra.mxu0 0
  %2469 = vmatprep.subr.bf16.mxu0 0
  %2470 = vmatpush2.bf16.msra.mxu0 0
  %2471 = vmatprep.subr.bf16.mxu0 0
  %2472 = vmatpush2.bf16.msra.mxu0 0
  %2473 = vmatprep.subr.bf16.mxu0 0
  %2474 = vmatpush2.bf16.msra.mxu0 0
  %2475 = vmatprep.subr.bf16.mxu0 0
  %2476 = vmatpush2.bf16.msra.mxu0 0
  %2477 = vmatprep.subr.bf16.mxu0 0
  %2478 = vmatpush2.bf16.msra.mxu0 0
  %2479 = vmatprep.subr.bf16.mxu0 0
  %2480 = vmatpush2.bf16.msra.mxu0 0
  %2481 = vmatprep.subr.bf16.mxu0 0
  %2482 = vmatpush2.bf16.msra.mxu0 0
  %2483 = vmatprep.mubr.bf16.mxu0 0
  %2484 = vmatmul.mubr.bf16.gmra.mxu0 %v2450
  %v2485 = vpop.f32.mrf.mxu0
  %v2486 = vadd.f32 0.0, %v2485
  %v2487 = vpop.f32.mrf.mxu0
  %v2488 = vadd.f32 0.0, %v2487
  %v2489 = vpop.f32.mrf.mxu0
  %v2490 = vpop.f32.mrf.mxu0
  %2491 = vdwg.mxu0
  %2492 = vmatprep.subr.bf16.mxu0 %v1099
  %2493 = vmatpush1.bf16.msra.mxu0 %v1098
  %2494 = vmatprep.subr.bf16.mxu0 %v1095
  %2495 = vmatpush1.bf16.msra.mxu0 %v1094
  %2496 = vmatprep.subr.bf16.mxu0 %v1091
  %2497 = vmatpush1.bf16.msra.mxu0 %v1090
  %2498 = vmatprep.subr.bf16.mxu0 %v1087
  %2499 = vmatpush1.bf16.msra.mxu0 %v1086
  %2500 = vmatprep.subr.bf16.mxu0 %v1083
  %2501 = vmatpush1.bf16.msra.mxu0 %v1082
  %2502 = vmatprep.subr.bf16.mxu0 %v1079
  %2503 = vmatpush1.bf16.msra.mxu0 %v1078
  %2504 = vmatprep.subr.bf16.mxu0 %v1075
  %2505 = vmatpush1.bf16.msra.mxu0 %v1074
  %2506 = vmatprep.subr.bf16.mxu0 %v1071
  %2507 = vmatpush1.bf16.msra.mxu0 %v1070
  %2508 = vmatprep.subr.bf16.mxu0 0
  %2509 = vmatpush2.bf16.msra.mxu0 0
  %2510 = vmatprep.subr.bf16.mxu0 0
  %2511 = vmatpush2.bf16.msra.mxu0 0
  %2512 = vmatprep.subr.bf16.mxu0 0
  %2513 = vmatpush2.bf16.msra.mxu0 0
  %2514 = vmatprep.subr.bf16.mxu0 0
  %2515 = vmatpush2.bf16.msra.mxu0 0
  %2516 = vmatprep.subr.bf16.mxu0 0
  %2517 = vmatpush2.bf16.msra.mxu0 0
  %2518 = vmatprep.subr.bf16.mxu0 0
  %2519 = vmatpush2.bf16.msra.mxu0 0
  %2520 = vmatprep.subr.bf16.mxu0 0
  %2521 = vmatpush2.bf16.msra.mxu0 0
  %2522 = vmatprep.subr.bf16.mxu0 0
  %2523 = vmatpush2.bf16.msra.mxu0 0
  %2524 = vmatprep.mubr.bf16.mxu0 0
  %2525 = vmatmul.mubr.bf16.gmra.mxu0 %v2450
  %v2526 = vpop.f32.mrf.mxu0
  %v2527 = vadd.f32 0.0, %v2526
  %v2528 = vpop.f32.mrf.mxu0
  %v2529 = vadd.f32 0.0, %v2528
  %v2530 = vpop.f32.mrf.mxu0
  %v2531 = vpop.f32.mrf.mxu0
  %2532 = vdwg.mxu0
  %s2533 = scalar_lea.vmem [#allocation2], 192
  %v2534 = vld [vmem:[%s2533] sm:$0xff]
  %v2535 = vld [vmem:[%s2533 + $0x8] sm:$0xff]
  %v2536 = vld [vmem:[%s2533 + $0x10] sm:$0xff]
  %v2537 = vld [vmem:[%s2533 + $0x18] sm:$0xff]
  %v2538 = vadd.f32 %v2534, %v2403
  %v2539 = vadd.f32 %v2535, %v2405
  %v2540 = vadd.f32 %v2536, %v2444
  %v2541 = vadd.f32 %v2537, %v2446
  %s2542 = scalar_lea.vmem [#allocation3], 32
  %v2543 = vld [vmem:[%s2542] sm:$0xff]
  %v2544 = vld [vmem:[%s2542 + $0x8] sm:$0xff]
  %v2545 = vld [vmem:[%s2542 + $0x10] sm:$0xff]
  %v2546 = vld [vmem:[%s2542 + $0x18] sm:$0xff]
  %v2547 = vadd.f32 %v2543, %v2486
  %v2548 = vadd.f32 %v2544, %v2488
  %v2549 = vadd.f32 %v2545, %v2527
  %v2550 = vadd.f32 %v2546, %v2529
  %v2551 = vmul.f32 %v2538, 0.5
  %v2552 = vtanh.pop %v2551
  %v2553 = vmul.f32 %v2552, 0.5
  %v2554 = vadd.f32 %v2553, 0.5
  %v2555 = vmul.f32 %v2539, 0.5
  %v2556 = vtanh.pop %v2555
  %v2557 = vmul.f32 %v2556, 0.5
  %v2558 = vadd.f32 %v2557, 0.5
  %v2559 = vtanh.pop %v2540
  %v2560 = vmul.f32 %v2541, 0.5
  %v2561 = vtanh.pop %v2560
  %v2562 = vmul.f32 %v2561, 0.5
  %v2563 = vadd.f32 %v2562, 0.5
  %v2564 = vmul.f32 %v2558, %v2346
  %v2565 = vmul.f32 %v2554, %v2559
  %v2566 = vadd.f32 %v2564, %v2565
  %v2567 = vtanh.pop %v2566
  %v2568 = vmul.f32 %v2563, %v2567
  %v2569 = vmul.f32 %v2547, 0.5
  %v2570 = vtanh.pop %v2569
  %v2571 = vmul.f32 %v2570, 0.5
  %v2572 = vadd.f32 %v2571, 0.5
  %v2573 = vmul.f32 %v2548, 0.5
  %v2574 = vtanh.pop %v2573
  %v2575 = vmul.f32 %v2574, 0.5
  %v2576 = vadd.f32 %v2575, 0.5
  %v2577 = vtanh.pop %v2549
  %v2578 = vmul.f32 %v2550, 0.5
  %v2579 = vtanh.pop %v2578
  %v2580 = vmul.f32 %v2579, 0.5
  %v2581 = vadd.f32 %v2580, 0.5
  %v2582 = vmul.f32 %v2576, %v2364
  %v2583 = vmul.f32 %v2572, %v2577
  %v2584 = vadd.f32 %v2582, %v2583
  %v2585 = vtanh.pop %v2584
  %v2586 = vmul.f32 %v2581, %v2585
  %v2587 = vpack.c.bf16 %v2568, %v2568
  %2588 = vmatprep.subr.bf16.mxu0 %v823
  %2589 = vmatpush1.bf16.msra.mxu0 %v822
  %2590 = vmatprep.subr.bf16.mxu0 %v819
  %2591 = vmatpush1.bf16.msra.mxu0 %v818
  %2592 = vmatprep.subr.bf16.mxu0 %v815
  %2593 = vmatpush1.bf16.msra.mxu0 %v814
  %2594 = vmatprep.subr.bf16.mxu0 %v811
  %2595 = vmatpush1.bf16.msra.mxu0 %v810
  %2596 = vmatprep.subr.bf16.mxu0 %v807
  %2597 = vmatpush1.bf16.msra.mxu0 %v806
  %2598 = vmatprep.subr.bf16.mxu0 %v803
  %2599 = vmatpush1.bf16.msra.mxu0 %v802
  %2600 = vmatprep.subr.bf16.mxu0 %v799
  %2601 = vmatpush1.bf16.msra.mxu0 %v798
  %2602 = vmatprep.subr.bf16.mxu0 %v795
  %2603 = vmatpush1.bf16.msra.mxu0 %v794
  %2604 = vmatprep.subr.bf16.mxu0 0
  %2605 = vmatpush2.bf16.msra.mxu0 0
  %2606 = vmatprep.subr.bf16.mxu0 0
  %2607 = vmatpush2.bf16.msra.mxu0 0
  %2608 = vmatprep.subr.bf16.mxu0 0
  %2609 = vmatpush2.bf16.msra.mxu0 0
  %2610 = vmatprep.subr.bf16.mxu0 0
  %2611 = vmatpush2.bf16.msra.mxu0 0
  %2612 = vmatprep.subr.bf16.mxu0 0
  %2613 = vmatpush2.bf16.msra.mxu0 0
  %2614 = vmatprep.subr.bf16.mxu0 0
  %2615 = vmatpush2.bf16.msra.mxu0 0
  %2616 = vmatprep.subr.bf16.mxu0 0
  %2617 = vmatpush2.bf16.msra.mxu0 0
  %2618 = vmatprep.subr.bf16.mxu0 0
  %2619 = vmatpush2.bf16.msra.mxu0 0
  %2620 = vmatprep.mubr.bf16.mxu0 0
  %2621 = vmatmul.mubr.bf16.gmra.mxu0 %v2587
  %v2622 = vpop.f32.mrf.mxu0
  %v2623 = vadd.f32 0.0, %v2622
  %v2624 = vpop.f32.mrf.mxu0
  %v2625 = vadd.f32 0.0, %v2624
  %v2626 = vpop.f32.mrf.mxu0
  %v2627 = vpop.f32.mrf.mxu0
  %2628 = vdwg.mxu0
  %2629 = vmatprep.subr.bf16.mxu0 %v825
  %2630 = vmatpush1.bf16.msra.mxu0 %v824
  %2631 = vmatprep.subr.bf16.mxu0 %v821
  %2632 = vmatpush1.bf16.msra.mxu0 %v820
  %2633 = vmatprep.subr.bf16.mxu0 %v817
  %2634 = vmatpush1.bf16.msra.mxu0 %v816
  %2635 = vmatprep.subr.bf16.mxu0 %v813
  %2636 = vmatpush1.bf16.msra.mxu0 %v812
  %2637 = vmatprep.subr.bf16.mxu0 %v809
  %2638 = vmatpush1.bf16.msra.mxu0 %v808
  %2639 = vmatprep.subr.bf16.mxu0 %v805
  %2640 = vmatpush1.bf16.msra.mxu0 %v804
  %2641 = vmatprep.subr.bf16.mxu0 %v801
  %2642 = vmatpush1.bf16.msra.mxu0 %v800
  %2643 = vmatprep.subr.bf16.mxu0 %v797
  %2644 = vmatpush1.bf16.msra.mxu0 %v796
  %2645 = vmatprep.subr.bf16.mxu0 0
  %2646 = vmatpush2.bf16.msra.mxu0 0
  %2647 = vmatprep.subr.bf16.mxu0 0
  %2648 = vmatpush2.bf16.msra.mxu0 0
  %2649 = vmatprep.subr.bf16.mxu0 0
  %2650 = vmatpush2.bf16.msra.mxu0 0
  %2651 = vmatprep.subr.bf16.mxu0 0
  %2652 = vmatpush2.bf16.msra.mxu0 0
  %2653 = vmatprep.subr.bf16.mxu0 0
  %2654 = vmatpush2.bf16.msra.mxu0 0
  %2655 = vmatprep.subr.bf16.mxu0 0
  %2656 = vmatpush2.bf16.msra.mxu0 0
  %2657 = vmatprep.subr.bf16.mxu0 0
  %2658 = vmatpush2.bf16.msra.mxu0 0
  %2659 = vmatprep.subr.bf16.mxu0 0
  %2660 = vmatpush2.bf16.msra.mxu0 0
  %2661 = vmatprep.mubr.bf16.mxu0 0
  %2662 = vmatmul.mubr.bf16.gmra.mxu0 %v2587
  %v2663 = vpop.f32.mrf.mxu0
  %v2664 = vadd.f32 0.0, %v2663
  %v2665 = vpop.f32.mrf.mxu0
  %v2666 = vadd.f32 0.0, %v2665
  %v2667 = vpop.f32.mrf.mxu0
  %v2668 = vpop.f32.mrf.mxu0
  %2669 = vdwg.mxu0
  %v2670 = vpack.c.bf16 %v2586, %v2586
  %2671 = vmatprep.subr.bf16.mxu0 %v1097
  %2672 = vmatpush1.bf16.msra.mxu0 %v1096
  %2673 = vmatprep.subr.bf16.mxu0 %v1093
  %2674 = vmatpush1.bf16.msra.mxu0 %v1092
  %2675 = vmatprep.subr.bf16.mxu0 %v1089
  %2676 = vmatpush1.bf16.msra.mxu0 %v1088
  %2677 = vmatprep.subr.bf16.mxu0 %v1085
  %2678 = vmatpush1.bf16.msra.mxu0 %v1084
  %2679 = vmatprep.subr.bf16.mxu0 %v1081
  %2680 = vmatpush1.bf16.msra.mxu0 %v1080
  %2681 = vmatprep.subr.bf16.mxu0 %v1077
  %2682 = vmatpush1.bf16.msra.mxu0 %v1076
  %2683 = vmatprep.subr.bf16.mxu0 %v1073
  %2684 = vmatpush1.bf16.msra.mxu0 %v1072
  %2685 = vmatprep.subr.bf16.mxu0 %v1069
  %2686 = vmatpush1.bf16.msra.mxu0 %v1068
  %2687 = vmatprep.subr.bf16.mxu0 0
  %2688 = vmatpush2.bf16.msra.mxu0 0
  %2689 = vmatprep.subr.bf16.mxu0 0
  %2690 = vmatpush2.bf16.msra.mxu0 0
  %2691 = vmatprep.subr.bf16.mxu0 0
  %2692 = vmatpush2.bf16.msra.mxu0 0
  %2693 = vmatprep.subr.bf16.mxu0 0
  %2694 = vmatpush2.bf16.msra.mxu0 0
  %2695 = vmatprep.subr.bf16.mxu0 0
  %2696 = vmatpush2.bf16.msra.mxu0 0
  %2697 = vmatprep.subr.bf16.mxu0 0
  %2698 = vmatpush2.bf16.msra.mxu0 0
  %2699 = vmatprep.subr.bf16.mxu0 0
  %2700 = vmatpush2.bf16.msra.mxu0 0
  %2701 = vmatprep.subr.bf16.mxu0 0
  %2702 = vmatpush2.bf16.msra.mxu0 0
  %2703 = vmatprep.mubr.bf16.mxu0 0
  %2704 = vmatmul.mubr.bf16.gmra.mxu0 %v2670
  %v2705 = vpop.f32.mrf.mxu0
  %v2706 = vadd.f32 0.0, %v2705
  %v2707 = vpop.f32.mrf.mxu0
  %v2708 = vadd.f32 0.0, %v2707
  %v2709 = vpop.f32.mrf.mxu0
  %v2710 = vpop.f32.mrf.mxu0
  %2711 = vdwg.mxu0
  %2712 = vmatprep.subr.bf16.mxu0 %v1099
  %2713 = vmatpush1.bf16.msra.mxu0 %v1098
  %2714 = vmatprep.subr.bf16.mxu0 %v1095
  %2715 = vmatpush1.bf16.msra.mxu0 %v1094
  %2716 = vmatprep.subr.bf16.mxu0 %v1091
  %2717 = vmatpush1.bf16.msra.mxu0 %v1090
  %2718 = vmatprep.subr.bf16.mxu0 %v1087
  %2719 = vmatpush1.bf16.msra.mxu0 %v1086
  %2720 = vmatprep.subr.bf16.mxu0 %v1083
  %2721 = vmatpush1.bf16.msra.mxu0 %v1082
  %2722 = vmatprep.subr.bf16.mxu0 %v1079
  %2723 = vmatpush1.bf16.msra.mxu0 %v1078
  %2724 = vmatprep.subr.bf16.mxu0 %v1075
  %2725 = vmatpush1.bf16.msra.mxu0 %v1074
  %2726 = vmatprep.subr.bf16.mxu0 %v1071
  %2727 = vmatpush1.bf16.msra.mxu0 %v1070
  %2728 = vmatprep.subr.bf16.mxu0 0
  %2729 = vmatpush2.bf16.msra.mxu0 0
  %2730 = vmatprep.subr.bf16.mxu0 0
  %2731 = vmatpush2.bf16.msra.mxu0 0
  %2732 = vmatprep.subr.bf16.mxu0 0
  %2733 = vmatpush2.bf16.msra.mxu0 0
  %2734 = vmatprep.subr.bf16.mxu0 0
  %2735 = vmatpush2.bf16.msra.mxu0 0
  %2736 = vmatprep.subr.bf16.mxu0 0
  %2737 = vmatpush2.bf16.msra.mxu0 0
  %2738 = vmatprep.subr.bf16.mxu0 0
  %2739 = vmatpush2.bf16.msra.mxu0 0
  %2740 = vmatprep.subr.bf16.mxu0 0
  %2741 = vmatpush2.bf16.msra.mxu0 0
  %2742 = vmatprep.subr.bf16.mxu0 0
  %2743 = vmatpush2.bf16.msra.mxu0 0
  %2744 = vmatprep.mubr.bf16.mxu0 0
  %2745 = vmatmul.mubr.bf16.gmra.mxu0 %v2670
  %v2746 = vpop.f32.mrf.mxu0
  %v2747 = vadd.f32 0.0, %v2746
  %v2748 = vpop.f32.mrf.mxu0
  %v2749 = vadd.f32 0.0, %v2748
  %v2750 = vpop.f32.mrf.mxu0
  %v2751 = vpop.f32.mrf.mxu0
  %2752 = vdwg.mxu0
  %s2753 = scalar_lea.vmem [#allocation2], 224
  %v2754 = vld [vmem:[%s2753] sm:$0xff]
  %v2755 = vld [vmem:[%s2753 + $0x8] sm:$0xff]
  %v2756 = vld [vmem:[%s2753 + $0x10] sm:$0xff]
  %v2757 = vld [vmem:[%s2753 + $0x18] sm:$0xff]
  %v2758 = vadd.f32 %v2754, %v2623
  %v2759 = vadd.f32 %v2755, %v2625
  %v2760 = vadd.f32 %v2756, %v2664
  %v2761 = vadd.f32 %v2757, %v2666
  %v2762 = vld [vmem:[#allocation3] sm:$0xff]
  %v2763 = vld [vmem:[#allocation3 + $0x8] sm:$0xff]
  %v2764 = vld [vmem:[#allocation3 + $0x10] sm:$0xff]
  %v2765 = vld [vmem:[#allocation3 + $0x18] sm:$0xff]
  %v2766 = vadd.f32 %v2762, %v2706
  %v2767 = vadd.f32 %v2763, %v2708
  %v2768 = vadd.f32 %v2764, %v2747
  %v2769 = vadd.f32 %v2765, %v2749
  %v2770 = vmul.f32 %v2758, 0.5
  %v2771 = vtanh.pop %v2770
  %v2772 = vmul.f32 %v2771, 0.5
  %v2773 = vadd.f32 %v2772, 0.5
  %v2774 = vmul.f32 %v2759, 0.5
  %v2775 = vtanh.pop %v2774
  %v2776 = vmul.f32 %v2775, 0.5
  %v2777 = vadd.f32 %v2776, 0.5
  %v2778 = vtanh.pop %v2760
  %v2779 = vmul.f32 %v2761, 0.5
  %v2780 = vtanh.pop %v2779
  %v2781 = vmul.f32 %v2780, 0.5
  %v2782 = vadd.f32 %v2781, 0.5
  %v2783 = vmul.f32 %v2777, %v2566
  %v2784 = vmul.f32 %v2773, %v2778
  %v2785 = vadd.f32 %v2783, %v2784
  %v2786 = vtanh.pop %v2785
  %v2787 = vmul.f32 %v2782, %v2786
  %v2788 = vmul.f32 %v2766, 0.5
  %v2789 = vtanh.pop %v2788
  %v2790 = vmul.f32 %v2789, 0.5
  %v2791 = vadd.f32 %v2790, 0.5
  %v2792 = vmul.f32 %v2767, 0.5
  %v2793 = vtanh.pop %v2792
  %v2794 = vmul.f32 %v2793, 0.5
  %v2795 = vadd.f32 %v2794, 0.5
  %v2796 = vtanh.pop %v2768
  %v2797 = vmul.f32 %v2769, 0.5
  %v2798 = vtanh.pop %v2797
  %v2799 = vmul.f32 %v2798, 0.5
  %v2800 = vadd.f32 %v2799, 0.5
  %v2801 = vmul.f32 %v2795, %v2584
  %v2802 = vmul.f32 %v2791, %v2796
  %v2803 = vadd.f32 %v2801, %v2802
  %v2804 = vtanh.pop %v2803
  %v2805 = vmul.f32 %v2800, %v2804
  %v2806 = vpack.c.bf16 %v2787, %v2787
  %v2807 = vpack.c.bf16 %v2805, %v2805
  %v2808 = vld [vmem:[%s7] sm:$0xf]
  %v2809 = vld [vmem:[%s7 + $0x4] sm:$0xf]
  %v2810 = vld [vmem:[%s7 + $0x8] sm:$0xf]
  %v2811 = vld [vmem:[%s7 + $0xc] sm:$0xf]
  %v2812 = vld [vmem:[%s7 + $0x10] sm:$0xf]
  %v2813 = vld [vmem:[%s7 + $0x14] sm:$0xf]
  %v2814 = vld [vmem:[%s7 + $0x18] sm:$0xf]
  %v2815 = vld [vmem:[%s7 + $0x1c] sm:$0xf]
  %v2816 = vld [vmem:[%s7 + $0x20] sm:$0xf]
  %v2817 = vld [vmem:[%s7 + $0x24] sm:$0xf]
  %v2818 = vld [vmem:[%s7 + $0x28] sm:$0xf]
  %v2819 = vld [vmem:[%s7 + $0x2c] sm:$0xf]
  %v2820 = vld [vmem:[%s7 + $0x30] sm:$0xf]
  %v2821 = vld [vmem:[%s7 + $0x34] sm:$0xf]
  %v2822 = vld [vmem:[%s7 + $0x38] sm:$0xf]
  %v2823 = vld [vmem:[%s7 + $0x3c] sm:$0xf]
  %v2824 = vld [vmem:[%s7 + $0x40] sm:$0xf]
  %v2825 = vld [vmem:[%s7 + $0x44] sm:$0xf]
  %v2826 = vld [vmem:[%s7 + $0x48] sm:$0xf]
  %v2827 = vld [vmem:[%s7 + $0x4c] sm:$0xf]
  %v2828 = vld [vmem:[%s7 + $0x50] sm:$0xf]
  %v2829 = vld [vmem:[%s7 + $0x54] sm:$0xf]
  %v2830 = vld [vmem:[%s7 + $0x58] sm:$0xf]
  %v2831 = vld [vmem:[%s7 + $0x5c] sm:$0xf]
  %v2832 = vld [vmem:[%s7 + $0x60] sm:$0xf]
  %v2833 = vld [vmem:[%s7 + $0x64] sm:$0xf]
  %v2834 = vld [vmem:[%s7 + $0x68] sm:$0xf]
  %v2835 = vld [vmem:[%s7 + $0x6c] sm:$0xf]
  %v2836 = vld [vmem:[%s7 + $0x70] sm:$0xf]
  %v2837 = vld [vmem:[%s7 + $0x74] sm:$0xf]
  %v2838 = vld [vmem:[%s7 + $0x78] sm:$0xf]
  %v2839 = vld [vmem:[%s7 + $0x7c] sm:$0xf]
  %v2840 = vld [vmem:[%s8] sm:$0x1]
  %v2842 = vlaneseq
  %v2843 = vshrl.u32 %v2842, 7
  %v2844 = vsub.s32 0, %v2843
  %v2845 = vrot.slane %v2840, %v2844
  %v2879 = vunpack.c.l.b16 %v2808
  %v2880 = vunpack.c.l.b16 %v2809
  %v2881 = vunpack.c.l.b16 %v2810
  %v2882 = vunpack.c.l.b16 %v2811
  %v2883 = vunpack.c.l.b16 %v2812
  %v2884 = vunpack.c.l.b16 %v2813
  %v2885 = vunpack.c.l.b16 %v2814
  %v2886 = vunpack.c.l.b16 %v2815
  %v2887 = vunpack.c.l.b16 %v2816
  %v2888 = vunpack.c.l.b16 %v2817
  %v2889 = vunpack.c.l.b16 %v2818
  %v2890 = vunpack.c.l.b16 %v2819
  %v2891 = vunpack.c.l.b16 %v2820
  %v2892 = vunpack.c.l.b16 %v2821
  %v2893 = vunpack.c.l.b16 %v2822
  %v2894 = vunpack.c.l.b16 %v2823
  %v2895 = vunpack.c.l.b16 %v2824
  %v2896 = vunpack.c.l.b16 %v2825
  %v2897 = vunpack.c.l.b16 %v2826
  %v2898 = vunpack.c.l.b16 %v2827
  %v2899 = vunpack.c.l.b16 %v2828
  %v2900 = vunpack.c.l.b16 %v2829
  %v2901 = vunpack.c.l.b16 %v2830
  %v2902 = vunpack.c.l.b16 %v2831
  %v2903 = vunpack.c.l.b16 %v2832
  %v2904 = vunpack.c.l.b16 %v2833
  %v2905 = vunpack.c.l.b16 %v2834
  %v2906 = vunpack.c.l.b16 %v2835
  %v2907 = vunpack.c.l.b16 %v2836
  %v2908 = vunpack.c.l.b16 %v2837
  %v2909 = vunpack.c.l.b16 %v2838
  %v2910 = vunpack.c.l.b16 %v2839
  %v2911 = vpack.c.b16 %v2880, %v2879
  %v2912 = vpack.c.b16 %v2882, %v2881
  %v2913 = vpack.c.b16 %v2884, %v2883
  %v2914 = vpack.c.b16 %v2886, %v2885
  %v2915 = vpack.c.b16 %v2888, %v2887
  %v2916 = vpack.c.b16 %v2890, %v2889
  %v2917 = vpack.c.b16 %v2892, %v2891
  %v2918 = vpack.c.b16 %v2894, %v2893
  %v2919 = vpack.c.b16 %v2896, %v2895
  %v2920 = vpack.c.b16 %v2898, %v2897
  %v2921 = vpack.c.b16 %v2900, %v2899
  %v2922 = vpack.c.b16 %v2902, %v2901
  %v2923 = vpack.c.b16 %v2904, %v2903
  %v2924 = vpack.c.b16 %v2906, %v2905
  %v2925 = vpack.c.b16 %v2908, %v2907
  %v2926 = vpack.c.b16 %v2910, %v2909
  %2943 = vmatprep.subr.bf16.mxu0 0
  %2944 = vmatpush1.bf16.msra.mxu0 %v2918
  %2945 = vmatprep.subr.bf16.mxu0 0
  %2946 = vmatpush1.bf16.msra.mxu0 %v2917
  %2947 = vmatprep.subr.bf16.mxu0 0
  %2948 = vmatpush1.bf16.msra.mxu0 %v2916
  %2949 = vmatprep.subr.bf16.mxu0 0
  %2950 = vmatpush1.bf16.msra.mxu0 %v2915
  %2951 = vmatprep.subr.bf16.mxu0 0
  %2952 = vmatpush1.bf16.msra.mxu0 %v2914
  %2953 = vmatprep.subr.bf16.mxu0 0
  %2954 = vmatpush1.bf16.msra.mxu0 %v2913
  %2955 = vmatprep.subr.bf16.mxu0 0
  %2956 = vmatpush1.bf16.msra.mxu0 %v2912
  %2957 = vmatprep.subr.bf16.mxu0 0
  %2958 = vmatpush1.bf16.msra.mxu0 %v2911
  %2959 = vmatprep.subr.bf16.mxu0 0
  %2960 = vmatpush2.bf16.msra.mxu0 %v2926
  %2961 = vmatprep.subr.bf16.mxu0 0
  %2962 = vmatpush2.bf16.msra.mxu0 %v2925
  %2963 = vmatprep.subr.bf16.mxu0 0
  %2964 = vmatpush2.bf16.msra.mxu0 %v2924
  %2965 = vmatprep.subr.bf16.mxu0 0
  %2966 = vmatpush2.bf16.msra.mxu0 %v2923
  %2967 = vmatprep.subr.bf16.mxu0 0
  %2968 = vmatpush2.bf16.msra.mxu0 %v2922
  %2969 = vmatprep.subr.bf16.mxu0 0
  %2970 = vmatpush2.bf16.msra.mxu0 %v2921
  %2971 = vmatprep.subr.bf16.mxu0 0
  %2972 = vmatpush2.bf16.msra.mxu0 %v2920
  %2973 = vmatprep.subr.bf16.mxu0 0
  %2974 = vmatpush2.bf16.msra.mxu0 %v2919
  %2975 = vmatprep.mubr.bf16.mxu0 %v2807
  %2976 = vmatmul.mubr.bf16.gmra.mxu0 %v2806
  %v2977 = vpop.f32.mrf.mxu0
  %v2978 = vadd.f32 %v2845, %v2977
  %v2979 = vpop.f32.mrf.mxu0
  %v2980 = vpop.f32.mrf.mxu0
  %v2981 = vpop.f32.mrf.mxu0
  %2982 = vdwg.mxu0
  %2983 = vmax.xlane.f32.xlu0 %v2978
  %v2984 = vpop.xlane.xlu0 %2983
  %v2985 = vsub.f32 %v2978, %v2984
  %v2986 = vmul.f32 %v2985, 1.442695
  %v2987 = vpow.pop %v2986
  %2988 = vadd.xlane.f32.xlu0 %v2987
  %v2989 = vpop.xlane.xlu0 %2988
  %v2990 = vrcp.pop %v2989
  %v2991 = vmul.f32 %v2987, %v2990
  %2992 = vst [vmem:[%s9] sm:$0xff] %v2991
  // Predicated region
  $region38: #{textrnn_forward.1} parent=0 // pred_check
    _
  $region39: #{textrnn_forward.1} parent=0 // pred_check_branch
    %2994 = sbr.rel (0) target = $region41
  $region40: #{textrnn_forward.1} parent=0 // pred_region
    _
  $region41: #{textrnn_forward.1} parent=0 // pred_fallthru
    _
  // Predicated region
  $region42: #{textrnn_forward.1} parent=0 // pred_check
    _
  $region43: #{textrnn_forward.1} parent=0 // pred_check_branch
    %2996 = sbr.rel (0) target = $region45
  $region44: #{textrnn_forward.1} parent=0 // pred_region
    _
  $region45: #{textrnn_forward.1} parent=0 // pred_fallthru
    _

</llo_original>
